<compile_context>
chip_gen: v5e
topology: v5e:2x2
jax: 0.10.0
libtpu: 0.0.40
codegen_flags: <defaults>
</compile_context>

<pallas_src>
import jax
import jax.numpy as jnp
from jax.experimental import pallas as pl
from jax.experimental.pallas import tpu as pltpu

LEAK = 0.1

# (in_dim, out_dim) per layer, matching the PyTorch module
LAYER_DIMS = [(None, 32), (32, 32), (32, 128), (128, 32), (32, 8), (8, 4), (4, 1)]
N_LAYERS = len(LAYER_DIMS)


def _leaky_relu(x):
    # max(x, 0.1*x) == LeakyReLU(0.1); 2 VALU ops instead of 3.
    return jnp.maximum(x, LEAK * x)


def _mlp_kernel(x_ref,
                w1, b1, w2, b2, w3, b3, w4, b4, w5, b5, w6, b6, w7, b7,
                o_ref):
    # x_ref: (tm, F) bf16; weights stored as (in_dim, out_dim) bf16 so y = x @ W + b.
    ws = (w1, w2, w3, w4, w5, w6, w7)
    bs = (b1, b2, b3, b4, b5, b6, b7)
    h = x_ref[...]
    for i in range(N_LAYERS):
        # bf16 MXU inputs, f32 accumulation; bias add + activation in f32.
        h = jnp.dot(h.astype(jnp.bfloat16), ws[i][...],
                    preferred_element_type=jnp.float32) + bs[i][...]
        if i < N_LAYERS - 1:  # no activation after the last Linear
            h = _leaky_relu(h)
    o_ref[...] = h.astype(o_ref.dtype)


def _round_up(a, b):
    return (a + b - 1) // b * b


def regression_net_2d(x, params, *, tm=1024):
    """x: (N, F) float32; params: list of 7 (W[in,out], b[1,out]) float32 pairs."""
    N, F = x.shape

    # Clamp tile to the (8-aligned) batch, then keep >=4 grid steps (>=2 per
    # TensorCore on v7x megacore) when the batch is large enough to allow it.
    tm = min(tm, _round_up(N, 8))
    while tm >= 512 and _round_up(N, tm) // tm < 4:
        tm //= 2

    n_pad = _round_up(N, tm) - N
    if n_pad:
        x = jnp.pad(x, ((0, n_pad), (0, 0)))
    n_rows = N + n_pad

    x_bf16 = x.astype(jnp.bfloat16)

    flat_params = []
    in_specs = [pl.BlockSpec((tm, F), lambda i: (i, 0))]
    for (w, b) in params:
        flat_params += [w.astype(jnp.bfloat16), b.astype(jnp.float32)]
        # Full-extent blocks with constant index_map: fetched once, never re-DMA'd.
        in_specs.append(pl.BlockSpec(w.shape, lambda i: (0, 0)))
        in_specs.append(pl.BlockSpec(b.shape, lambda i: (0, 0)))

    out = pl.pallas_call(
        _mlp_kernel,
        out_shape=jax.ShapeDtypeStruct((n_rows, 1), jnp.float32),
        grid_spec=pltpu.PrefetchScalarGridSpec(
            num_scalar_prefetch=0,
            grid=(n_rows // tm,),
            in_specs=in_specs,
            out_specs=pl.BlockSpec((tm, 1), lambda i: (i, 0)),
        ),
        compiler_params=pltpu.CompilerParams(
            dimension_semantics=("parallel",),
            vmem_limit_bytes=32 * 1024 * 1024),
    )(x_bf16, *flat_params)

    return out[:N] if n_pad else out


def init_params(key, n_fourier_features):
    """Deterministic init mimicking PyTorch's default Linear init
    (uniform(-1/sqrt(fan_in), 1/sqrt(fan_in)) for both W and b)."""
    params = []
    in_dim = n_fourier_features
    for (_, out_dim) in LAYER_DIMS:
        key, kw, kb = jax.random.split(key, 3)
        bound = 1.0 / jnp.sqrt(jnp.float32(in_dim))
        # stored as (in_dim, out_dim) == W.T of the PyTorch (out, in) weight
        w = jax.random.uniform(kw, (in_dim, out_dim), jnp.float32, -bound, bound)
        b = jax.random.uniform(kb, (1, out_dim), jnp.float32, -bound, bound)
        params.append((w, b))
        in_dim = out_dim
    return params


def reference_forward_f32(x, params):
    """Pure-f32 reference, identical math to the PyTorch module."""
    h = x
    for i, (w, b) in enumerate(params):
        h = h @ w + b
        if i < N_LAYERS - 1:
            h = jnp.maximum(h, LEAK * h)
    return h


def reference_forward_bf16_matmul(x, params):
    """Precision-matched reference: bf16 matmul inputs, f32 accumulation."""
    h = x
    for i, (w, b) in enumerate(params):
        h = jnp.dot(h.astype(jnp.bfloat16), w.astype(jnp.bfloat16),
                    preferred_element_type=jnp.float32) + b
        if i < N_LAYERS - 1:
            h = jnp.maximum(h, LEAK * h)
    return h


if __name__ == "__main__":
    key = jax.random.PRNGKey(0)
    n_fourier_features = 16
    N = 2048  # small batch; tm auto-shrinks to 512 -> 4 grid steps

    key, kx, kp = jax.random.split(key, 3)
    x = jax.random.normal(kx, (N, n_fourier_features), jnp.float32)
    params = init_params(kp, n_fourier_features)

    out = jax.block_until_ready(regression_net_2d(x, params, tm=1024))
    assert out.shape == (N, 1), out.shape

    # Tight check against a precision-matched reference (same bf16-input math).
    ref_matched = reference_forward_bf16_matmul(x, params)
    assert jnp.allclose(out, ref_matched, atol=1e-3, rtol=1e-3), float(
        jnp.max(jnp.abs(out - ref_matched)))

    # Loose semantic check against the pure-f32 module (bf16 rounding only).
    ref_f32 = reference_forward_f32(x, params)
    assert jnp.allclose(out, ref_f32, atol=1e-1, rtol=1e-1), float(
        jnp.max(jnp.abs(out - ref_f32)))

    print("KERNEL_OK")
</pallas_src>

<mosaic_0001>
module attributes {stable_mosaic.version = 11 : i64} {
  func.func @_mlp_kernel(%arg0: i32, %arg1: memref<512x16xbf16, #tpu.memory_space<vmem>>, %arg2: memref<16x32xbf16, #tpu.memory_space<vmem>>, %arg3: memref<1x32xf32, #tpu.memory_space<vmem>>, %arg4: memref<32x32xbf16, #tpu.memory_space<vmem>>, %arg5: memref<1x32xf32, #tpu.memory_space<vmem>>, %arg6: memref<32x128xbf16, #tpu.memory_space<vmem>>, %arg7: memref<1x128xf32, #tpu.memory_space<vmem>>, %arg8: memref<128x32xbf16, #tpu.memory_space<vmem>>, %arg9: memref<1x32xf32, #tpu.memory_space<vmem>>, %arg10: memref<32x8xbf16, #tpu.memory_space<vmem>>, %arg11: memref<1x8xf32, #tpu.memory_space<vmem>>, %arg12: memref<8x4xbf16, #tpu.memory_space<vmem>>, %arg13: memref<1x4xf32, #tpu.memory_space<vmem>>, %arg14: memref<4x1xbf16, #tpu.memory_space<vmem>>, %arg15: memref<1x1xf32, #tpu.memory_space<vmem>>, %arg16: memref<512x1xf32, #tpu.memory_space<vmem>>) attributes {dimension_semantics = [#tpu.dimension_semantics<parallel>], iteration_bounds = array<i64: 4>, scalar_prefetch = 0 : i64, scratch_operands = 0 : i64, tpu.core_type = #tpu.core_type<tc>, window_params = [{transform_indices = @transform_0, window_bounds = array<i64: 512, 16>}, {pipeline_mode = #tpu.pipeline_mode<synchronous>, transform_indices = @transform_1, window_bounds = array<i64: 16, 32>}, {pipeline_mode = #tpu.pipeline_mode<synchronous>, transform_indices = @transform_2, window_bounds = array<i64: 1, 32>}, {pipeline_mode = #tpu.pipeline_mode<synchronous>, transform_indices = @transform_3, window_bounds = array<i64: 32, 32>}, {pipeline_mode = #tpu.pipeline_mode<synchronous>, transform_indices = @transform_4, window_bounds = array<i64: 1, 32>}, {pipeline_mode = #tpu.pipeline_mode<synchronous>, transform_indices = @transform_5, window_bounds = array<i64: 32, 128>}, {pipeline_mode = #tpu.pipeline_mode<synchronous>, transform_indices = @transform_6, window_bounds = array<i64: 1, 128>}, {pipeline_mode = #tpu.pipeline_mode<synchronous>, transform_indices = @transform_7, window_bounds = array<i64: 128, 32>}, {pipeline_mode = #tpu.pipeline_mode<synchronous>, transform_indices = @transform_8, window_bounds = array<i64: 1, 32>}, {pipeline_mode = #tpu.pipeline_mode<synchronous>, transform_indices = @transform_9, window_bounds = array<i64: 32, 8>}, {pipeline_mode = #tpu.pipeline_mode<synchronous>, transform_indices = @transform_10, window_bounds = array<i64: 1, 8>}, {pipeline_mode = #tpu.pipeline_mode<synchronous>, transform_indices = @transform_11, window_bounds = array<i64: 8, 4>}, {pipeline_mode = #tpu.pipeline_mode<synchronous>, transform_indices = @transform_12, window_bounds = array<i64: 1, 4>}, {pipeline_mode = #tpu.pipeline_mode<synchronous>, transform_indices = @transform_13, window_bounds = array<i64: 4, 1>}, {pipeline_mode = #tpu.pipeline_mode<synchronous>, transform_indices = @transform_14, window_bounds = array<i64: 1, 1>}, {transform_indices = @transform_15, window_bounds = array<i64: 512, 1>}]} {
    %c0 = arith.constant 0 : index
    %c0_0 = arith.constant 0 : index
    %0 = vector.load %arg1[%c0, %c0_0] : memref<512x16xbf16, #tpu.memory_space<vmem>>, vector<512x16xbf16>
    %c0_1 = arith.constant 0 : index
    %c0_2 = arith.constant 0 : index
    %1 = vector.load %arg2[%c0_1, %c0_2] : memref<16x32xbf16, #tpu.memory_space<vmem>>, vector<16x32xbf16>
    %cst = arith.constant dense<0.000000e+00> : vector<512x32xf32>
    %2 = tpu.matmul %0, %1, %cst {dimension_numbers = #tpu.dot_dimension_numbers<[1], [0], [0], [1], [0, 0, 1, 1], [], []>} : vector<512x16xbf16>, vector<16x32xbf16>, vector<512x32xf32> -> vector<512x32xf32>
    %c0_3 = arith.constant 0 : index
    %c0_4 = arith.constant 0 : index
    %3 = vector.load %arg3[%c0_3, %c0_4] : memref<1x32xf32, #tpu.memory_space<vmem>>, vector<1x32xf32>
    %4 = vector.broadcast %3 : vector<1x32xf32> to vector<512x32xf32>
    %5 = arith.addf %2, %4 : vector<512x32xf32>
    %cst_5 = arith.constant 1.000000e-01 : f32
    %6 = vector.broadcast %cst_5 : f32 to vector<512x32xf32>
    %7 = arith.mulf %6, %5 : vector<512x32xf32>
    %8 = arith.maximumf %5, %7 : vector<512x32xf32>
    %9 = arith.truncf %8 : vector<512x32xf32> to vector<512x32xbf16>
    %c0_6 = arith.constant 0 : index
    %c0_7 = arith.constant 0 : index
    %10 = vector.load %arg4[%c0_6, %c0_7] : memref<32x32xbf16, #tpu.memory_space<vmem>>, vector<32x32xbf16>
    %cst_8 = arith.constant dense<0.000000e+00> : vector<512x32xf32>
    %11 = tpu.matmul %9, %10, %cst_8 {dimension_numbers = #tpu.dot_dimension_numbers<[1], [0], [0], [1], [0, 0, 1, 1], [], []>} : vector<512x32xbf16>, vector<32x32xbf16>, vector<512x32xf32> -> vector<512x32xf32>
    %c0_9 = arith.constant 0 : index
    %c0_10 = arith.constant 0 : index
    %12 = vector.load %arg5[%c0_9, %c0_10] : memref<1x32xf32, #tpu.memory_space<vmem>>, vector<1x32xf32>
    %13 = vector.broadcast %12 : vector<1x32xf32> to vector<512x32xf32>
    %14 = arith.addf %11, %13 : vector<512x32xf32>
    %cst_11 = arith.constant 1.000000e-01 : f32
    %15 = vector.broadcast %cst_11 : f32 to vector<512x32xf32>
    %16 = arith.mulf %15, %14 : vector<512x32xf32>
    %17 = arith.maximumf %14, %16 : vector<512x32xf32>
    %18 = arith.truncf %17 : vector<512x32xf32> to vector<512x32xbf16>
    %c0_12 = arith.constant 0 : index
    %c0_13 = arith.constant 0 : index
    %19 = vector.load %arg6[%c0_12, %c0_13] : memref<32x128xbf16, #tpu.memory_space<vmem>>, vector<32x128xbf16>
    %cst_14 = arith.constant dense<0.000000e+00> : vector<512x128xf32>
    %20 = tpu.matmul %18, %19, %cst_14 {dimension_numbers = #tpu.dot_dimension_numbers<[1], [0], [0], [1], [0, 0, 1, 1], [], []>} : vector<512x32xbf16>, vector<32x128xbf16>, vector<512x128xf32> -> vector<512x128xf32>
    %c0_15 = arith.constant 0 : index
    %c0_16 = arith.constant 0 : index
    %21 = vector.load %arg7[%c0_15, %c0_16] : memref<1x128xf32, #tpu.memory_space<vmem>>, vector<1x128xf32>
    %22 = vector.broadcast %21 : vector<1x128xf32> to vector<512x128xf32>
    %23 = arith.addf %20, %22 : vector<512x128xf32>
    %cst_17 = arith.constant 1.000000e-01 : f32
    %24 = vector.broadcast %cst_17 : f32 to vector<512x128xf32>
    %25 = arith.mulf %24, %23 : vector<512x128xf32>
    %26 = arith.maximumf %23, %25 : vector<512x128xf32>
    %27 = arith.truncf %26 : vector<512x128xf32> to vector<512x128xbf16>
    %c0_18 = arith.constant 0 : index
    %c0_19 = arith.constant 0 : index
    %28 = vector.load %arg8[%c0_18, %c0_19] : memref<128x32xbf16, #tpu.memory_space<vmem>>, vector<128x32xbf16>
    %cst_20 = arith.constant dense<0.000000e+00> : vector<512x32xf32>
    %29 = tpu.matmul %27, %28, %cst_20 {dimension_numbers = #tpu.dot_dimension_numbers<[1], [0], [0], [1], [0, 0, 1, 1], [], []>} : vector<512x128xbf16>, vector<128x32xbf16>, vector<512x32xf32> -> vector<512x32xf32>
    %c0_21 = arith.constant 0 : index
    %c0_22 = arith.constant 0 : index
    %30 = vector.load %arg9[%c0_21, %c0_22] : memref<1x32xf32, #tpu.memory_space<vmem>>, vector<1x32xf32>
    %31 = vector.broadcast %30 : vector<1x32xf32> to vector<512x32xf32>
    %32 = arith.addf %29, %31 : vector<512x32xf32>
    %cst_23 = arith.constant 1.000000e-01 : f32
    %33 = vector.broadcast %cst_23 : f32 to vector<512x32xf32>
    %34 = arith.mulf %33, %32 : vector<512x32xf32>
    %35 = arith.maximumf %32, %34 : vector<512x32xf32>
    %36 = arith.truncf %35 : vector<512x32xf32> to vector<512x32xbf16>
    %c0_24 = arith.constant 0 : index
    %c0_25 = arith.constant 0 : index
    %37 = vector.load %arg10[%c0_24, %c0_25] : memref<32x8xbf16, #tpu.memory_space<vmem>>, vector<32x8xbf16>
    %cst_26 = arith.constant dense<0.000000e+00> : vector<512x8xf32>
    %38 = tpu.matmul %36, %37, %cst_26 {dimension_numbers = #tpu.dot_dimension_numbers<[1], [0], [0], [1], [0, 0, 1, 1], [], []>} : vector<512x32xbf16>, vector<32x8xbf16>, vector<512x8xf32> -> vector<512x8xf32>
    %c0_27 = arith.constant 0 : index
    %c0_28 = arith.constant 0 : index
    %39 = vector.load %arg11[%c0_27, %c0_28] : memref<1x8xf32, #tpu.memory_space<vmem>>, vector<1x8xf32>
    %40 = vector.broadcast %39 : vector<1x8xf32> to vector<512x8xf32>
    %41 = arith.addf %38, %40 : vector<512x8xf32>
    %cst_29 = arith.constant 1.000000e-01 : f32
    %42 = vector.broadcast %cst_29 : f32 to vector<512x8xf32>
    %43 = arith.mulf %42, %41 : vector<512x8xf32>
    %44 = arith.maximumf %41, %43 : vector<512x8xf32>
    %45 = arith.truncf %44 : vector<512x8xf32> to vector<512x8xbf16>
    %c0_30 = arith.constant 0 : index
    %c0_31 = arith.constant 0 : index
    %46 = vector.load %arg12[%c0_30, %c0_31] : memref<8x4xbf16, #tpu.memory_space<vmem>>, vector<8x4xbf16>
    %cst_32 = arith.constant dense<0.000000e+00> : vector<512x4xf32>
    %47 = tpu.matmul %45, %46, %cst_32 {dimension_numbers = #tpu.dot_dimension_numbers<[1], [0], [0], [1], [0, 0, 1, 1], [], []>} : vector<512x8xbf16>, vector<8x4xbf16>, vector<512x4xf32> -> vector<512x4xf32>
    %c0_33 = arith.constant 0 : index
    %c0_34 = arith.constant 0 : index
    %48 = vector.load %arg13[%c0_33, %c0_34] : memref<1x4xf32, #tpu.memory_space<vmem>>, vector<1x4xf32>
    %49 = vector.broadcast %48 : vector<1x4xf32> to vector<512x4xf32>
    %50 = arith.addf %47, %49 : vector<512x4xf32>
    %cst_35 = arith.constant 1.000000e-01 : f32
    %51 = vector.broadcast %cst_35 : f32 to vector<512x4xf32>
    %52 = arith.mulf %51, %50 : vector<512x4xf32>
    %53 = arith.maximumf %50, %52 : vector<512x4xf32>
    %54 = arith.truncf %53 : vector<512x4xf32> to vector<512x4xbf16>
    %c0_36 = arith.constant 0 : index
    %c0_37 = arith.constant 0 : index
    %55 = vector.load %arg14[%c0_36, %c0_37] : memref<4x1xbf16, #tpu.memory_space<vmem>>, vector<4x1xbf16>
    %cst_38 = arith.constant dense<0.000000e+00> : vector<512x1xf32>
    %56 = tpu.matmul %54, %55, %cst_38 {dimension_numbers = #tpu.dot_dimension_numbers<[1], [0], [0], [1], [0, 0, 1, 1], [], []>} : vector<512x4xbf16>, vector<4x1xbf16>, vector<512x1xf32> -> vector<512x1xf32>
    %c0_39 = arith.constant 0 : index
    %c0_40 = arith.constant 0 : index
    %57 = vector.load %arg15[%c0_39, %c0_40] : memref<1x1xf32, #tpu.memory_space<vmem>>, vector<1x1xf32>
    %58 = vector.broadcast %57 : vector<1x1xf32> to vector<512x1xf32>
    %59 = arith.addf %56, %58 : vector<512x1xf32>
    %c0_41 = arith.constant 0 : index
    %c0_42 = arith.constant 0 : index
    %60 = vector.load %arg16[%c0_41, %c0_42] : memref<512x1xf32, #tpu.memory_space<vmem>>, vector<512x1xf32>
    tpu.vector_store %arg16[%c0_41, %c0_42], %59 {strides = array<i32>} : memref<512x1xf32, #tpu.memory_space<vmem>>, vector<512x1xf32>,
    return
  }
  func.func @transform_0(%arg0: i32) -> (i32, i32) {
    %c0_i32 = arith.constant 0 : i32
    %c0_i32_0 = arith.constant 0 : i32
    return %arg0, %c0_i32 : i32, i32
  }
  func.func @transform_1(%arg0: i32) -> (i32, i32) {
    %c0_i32 = arith.constant 0 : i32
    %c0_i32_0 = arith.constant 0 : i32
    %c0_i32_1 = arith.constant 0 : i32
    return %c0_i32, %c0_i32_0 : i32, i32
  }
  func.func @transform_2(%arg0: i32) -> (i32, i32) {
    %c0_i32 = arith.constant 0 : i32
    %c0_i32_0 = arith.constant 0 : i32
    %c0_i32_1 = arith.constant 0 : i32
    return %c0_i32, %c0_i32_0 : i32, i32
  }
  func.func @transform_3(%arg0: i32) -> (i32, i32) {
    %c0_i32 = arith.constant 0 : i32
    %c0_i32_0 = arith.constant 0 : i32
    %c0_i32_1 = arith.constant 0 : i32
    return %c0_i32, %c0_i32_0 : i32, i32
  }
  func.func @transform_4(%arg0: i32) -> (i32, i32) {
    %c0_i32 = arith.constant 0 : i32
    %c0_i32_0 = arith.constant 0 : i32
    %c0_i32_1 = arith.constant 0 : i32
    return %c0_i32, %c0_i32_0 : i32, i32
  }
  func.func @transform_5(%arg0: i32) -> (i32, i32) {
    %c0_i32 = arith.constant 0 : i32
    %c0_i32_0 = arith.constant 0 : i32
    %c0_i32_1 = arith.constant 0 : i32
    return %c0_i32, %c0_i32_0 : i32, i32
  }
  func.func @transform_6(%arg0: i32) -> (i32, i32) {
    %c0_i32 = arith.constant 0 : i32
    %c0_i32_0 = arith.constant 0 : i32
    %c0_i32_1 = arith.constant 0 : i32
    return %c0_i32, %c0_i32_0 : i32, i32
  }
  func.func @transform_7(%arg0: i32) -> (i32, i32) {
    %c0_i32 = arith.constant 0 : i32
    %c0_i32_0 = arith.constant 0 : i32
    %c0_i32_1 = arith.constant 0 : i32
    return %c0_i32, %c0_i32_0 : i32, i32
  }
  func.func @transform_8(%arg0: i32) -> (i32, i32) {
    %c0_i32 = arith.constant 0 : i32
    %c0_i32_0 = arith.constant 0 : i32
    %c0_i32_1 = arith.constant 0 : i32
    return %c0_i32, %c0_i32_0 : i32, i32
  }
  func.func @transform_9(%arg0: i32) -> (i32, i32) {
    %c0_i32 = arith.constant 0 : i32
    %c0_i32_0 = arith.constant 0 : i32
    %c0_i32_1 = arith.constant 0 : i32
    return %c0_i32, %c0_i32_0 : i32, i32
  }
  func.func @transform_10(%arg0: i32) -> (i32, i32) {
    %c0_i32 = arith.constant 0 : i32
    %c0_i32_0 = arith.constant 0 : i32
    %c0_i32_1 = arith.constant 0 : i32
    return %c0_i32, %c0_i32_0 : i32, i32
  }
  func.func @transform_11(%arg0: i32) -> (i32, i32) {
    %c0_i32 = arith.constant 0 : i32
    %c0_i32_0 = arith.constant 0 : i32
    %c0_i32_1 = arith.constant 0 : i32
    return %c0_i32, %c0_i32_0 : i32, i32
  }
  func.func @transform_12(%arg0: i32) -> (i32, i32) {
    %c0_i32 = arith.constant 0 : i32
    %c0_i32_0 = arith.constant 0 : i32
    %c0_i32_1 = arith.constant 0 : i32
    return %c0_i32, %c0_i32_0 : i32, i32
  }
  func.func @transform_13(%arg0: i32) -> (i32, i32) {
    %c0_i32 = arith.constant 0 : i32
    %c0_i32_0 = arith.constant 0 : i32
    %c0_i32_1 = arith.constant 0 : i32
    return %c0_i32, %c0_i32_0 : i32, i32
  }
  func.func @transform_14(%arg0: i32) -> (i32, i32) {
    %c0_i32 = arith.constant 0 : i32
    %c0_i32_0 = arith.constant 0 : i32
    %c0_i32_1 = arith.constant 0 : i32
    return %c0_i32, %c0_i32_0 : i32, i32
  }
  func.func @transform_15(%arg0: i32) -> (i32, i32) {
    %c0_i32 = arith.constant 0 : i32
    %c0_i32_0 = arith.constant 0 : i32
    return %arg0, %c0_i32 : i32, i32
  }
}

</mosaic_0001>

<llo_original>
// kernel: tpu_custom_call.1
$region0: #{tpu_custom_call.1}
  #allocation0 [shape = 'u32[]', space=smem, size = 0x4, offset = 0x4, fixed_abs, tag = 'smem constant byte address 0x4 - core index']
  #allocation1 [shape = 'u32[72,128]{1,0:T(1,128)}', space=vmem, size = 0x9000, scoped, tag = 'internal scratch']
  #allocation2 [shape = 'f32[1,1]{1,0:T(1,128)S(1)}', space=vmem, size = 0x200, scoped, tag = 'scoped memory for tpu_custom_call.1']
  %s0 = inlined_call_operand.vmem [shape: bf16[2048,16], index: 0, kind: input, shape index: {}]
  %s1 = inlined_call_operand.vmem [shape: bf16[16,32], index: 1, kind: input, shape index: {}]
  %s2 = inlined_call_operand.vmem [shape: f32[1,32], index: 2, kind: input, shape index: {}]
  %s3 = inlined_call_operand.vmem [shape: bf16[32,32], index: 3, kind: input, shape index: {}]
  %s4 = inlined_call_operand.vmem [shape: f32[1,32], index: 4, kind: input, shape index: {}]
  %s5 = inlined_call_operand.vmem [shape: bf16[32,128], index: 5, kind: input, shape index: {}]
  %s6 = inlined_call_operand.vmem [shape: f32[1,128], index: 6, kind: input, shape index: {}]
  %s7 = inlined_call_operand.vmem [shape: bf16[128,32], index: 7, kind: input, shape index: {}]
  %s8 = inlined_call_operand.vmem [shape: f32[1,32], index: 8, kind: input, shape index: {}]
  %s9 = inlined_call_operand.vmem [shape: bf16[32,8], index: 9, kind: input, shape index: {}]
  %s10 = inlined_call_operand.vmem [shape: f32[1,8], index: 10, kind: input, shape index: {}]
  %s11 = inlined_call_operand.vmem [shape: bf16[8,4], index: 11, kind: input, shape index: {}]
  %s12 = inlined_call_operand.vmem [shape: f32[1,4], index: 12, kind: input, shape index: {}]
  %s13 = inlined_call_operand.vmem [shape: bf16[4,1], index: 13, kind: input, shape index: {}]
  %s14 = inlined_call_operand.<no memory space> [shape: f32[1,1], index: 14, kind: input, shape index: {}]
  %s15 = inlined_call_operand.vmem [shape: f32[2048,1], index: 15, kind: output, shape index: {}]
  %s16 = sld [smem:[#allocation0]]
  $region93: #{tpu_custom_call.1} parent=0
    _
  %s18 = ssub.s32 1, %s16
  %s19 = scalar_select 0, %s18, %s16
  %v20 = vstv %s14
  %21 = vst [vmem:[#allocation2] sm:$0x1] %v20
  loop: start=0, step=1, limit=6
  $region2: #{tpu_custom_call.1} parent=0 // loop_pre_header
    _
  $region3: #{tpu_custom_call.1} parent=0 // loop_header
    %s23 = sphi 0, %s27
    %p24 = scmp.ge.s32.totalorder %s23, 6
    %s33 = sphi 0, %s35
    %s36 = sphi 0, %s33
    %s37 = sphi 0, %s36
    %s53 = sphi 0, %s37
    %s57 = sphi 0, %s57
    %s59 = sphi 0, %s57
    %s60 = sphi 0, %s59
    %s74 = sphi 0, %s60
    %s78 = sphi 0, %s78
    %s80 = sphi 0, %s78
    %s81 = sphi 0, %s80
    %s95 = sphi 0, %s81
    %s99 = sphi 0, %s99
    %s101 = sphi 0, %s99
    %s102 = sphi 0, %s101
    %s116 = sphi 0, %s102
    %s120 = sphi 0, %s120
    %s122 = sphi 0, %s120
    %s123 = sphi 0, %s122
    %s137 = sphi 0, %s123
    %s141 = sphi 0, %s141
    %s143 = sphi 0, %s141
    %s144 = sphi 0, %s143
    %s158 = sphi 0, %s144
    %s162 = sphi 0, %s162
    %s164 = sphi 0, %s162
    %s165 = sphi 0, %s164
    %s179 = sphi 0, %s165
    %s183 = sphi 0, %s183
    %s185 = sphi 0, %s183
    %s186 = sphi 0, %s185
    %s200 = sphi 0, %s186
    %s204 = sphi 0, %s204
    %s206 = sphi 0, %s204
    %s207 = sphi 0, %s206
    %s221 = sphi 0, %s207
    %s225 = sphi 0, %s225
    %s227 = sphi 0, %s225
    %s228 = sphi 0, %s227
    %s242 = sphi 0, %s228
    %s246 = sphi 0, %s246
    %s248 = sphi 0, %s246
    %s249 = sphi 0, %s248
    %s263 = sphi 0, %s249
    %s267 = sphi 0, %s267
    %s269 = sphi 0, %s267
    %s270 = sphi 0, %s269
    %s284 = sphi 0, %s270
    %s288 = sphi 0, %s288
    %s290 = sphi 0, %s288
    %s291 = sphi 0, %s290
    %s305 = sphi 0, %s291
    %s309 = sphi 0, %s309
    %s311 = sphi 0, %s309
    %s312 = sphi 0, %s311
    %s326 = sphi 0, %s312
    %s330 = sphi 0, %s330
    %s332 = sphi 0, %s330
    %s333 = sphi 0, %s332
    %s347 = sphi 0, %s333
    %s353 = sphi 0, %s355
    %s356 = sphi 0, %s353
    %s357 = sphi 0, %s356
    %s373 = sphi 0, %s357
  $region4: #{tpu_custom_call.1} parent=0 // loop_header_branch
    %26 = sbr.rel (%p24) target = $region8
  $region5: #{tpu_custom_call.1} parent=0 // loop_body
    %s28 = ssub.s32 %s23, 1
    %s29 = ssub.s32 %s23, 2
    %s30 = sadd.s32 %s23, 1
    %s31 = ssub.s32 %s23, %s30
    %p32 = scmp.eq.s32.totalorder %s31, 0
    %s34 = sadd.s32 %s33, 1
    %s35 = scalar_select %p32, %s33, %s34
    %p38 = pneg %p32
    %p39 = scmp.eq.s32.totalorder %s23, 3
    %p40 = por %p38, %p39
    %p41 = scmp.ne.s32.totalorder %s33, %s36
    %p42 = scmp.eq.s32.totalorder %s23, 0
    %p43 = por %p41, %p42
    %p44 = scmp.ne.s32.totalorder %s33, %s36
    %p45 = scmp.eq.s32.totalorder %s28, 3
    %p46 = por %p44, %p45
    %p47 = scmp.ne.s32.totalorder %s36, %s37
    %p48 = scmp.eq.s32.totalorder %s28, 0
    %p49 = por %p47, %p48
    %p50 = scmp.ne.s32.totalorder %s36, %s37
    %p51 = scmp.eq.s32.totalorder %s29, 3
    %p52 = por %p50, %p51
    %p54 = scmp.ne.s32.totalorder %s37, %s53
    %p55 = scmp.eq.s32.totalorder %s29, 0
    %p56 = por %p54, %p55
    %s58 = sadd.s32 %s57, 1
    %p61 = scmp.eq.s32.totalorder %s23, 3
    %p62 = scmp.ne.s32.totalorder %s57, %s59
    %p63 = scmp.eq.s32.totalorder %s23, 0
    %p64 = por %p62, %p63
    %p65 = scmp.ne.s32.totalorder %s57, %s59
    %p66 = scmp.eq.s32.totalorder %s28, 3
    %p67 = por %p65, %p66
    %p68 = scmp.ne.s32.totalorder %s59, %s60
    %p69 = scmp.eq.s32.totalorder %s28, 0
    %p70 = por %p68, %p69
    %p71 = scmp.ne.s32.totalorder %s59, %s60
    %p72 = scmp.eq.s32.totalorder %s29, 3
    %p73 = por %p71, %p72
    %p75 = scmp.ne.s32.totalorder %s60, %s74
    %p76 = scmp.eq.s32.totalorder %s29, 0
    %p77 = por %p75, %p76
    %s79 = sadd.s32 %s78, 1
    %p82 = scmp.eq.s32.totalorder %s23, 3
    %p83 = scmp.ne.s32.totalorder %s78, %s80
    %p84 = scmp.eq.s32.totalorder %s23, 0
    %p85 = por %p83, %p84
    %p86 = scmp.ne.s32.totalorder %s78, %s80
    %p87 = scmp.eq.s32.totalorder %s28, 3
    %p88 = por %p86, %p87
    %p89 = scmp.ne.s32.totalorder %s80, %s81
    %p90 = scmp.eq.s32.totalorder %s28, 0
    %p91 = por %p89, %p90
    %p92 = scmp.ne.s32.totalorder %s80, %s81
    %p93 = scmp.eq.s32.totalorder %s29, 3
    %p94 = por %p92, %p93
    %p96 = scmp.ne.s32.totalorder %s81, %s95
    %p97 = scmp.eq.s32.totalorder %s29, 0
    %p98 = por %p96, %p97
    %s100 = sadd.s32 %s99, 1
    %p103 = scmp.eq.s32.totalorder %s23, 3
    %p104 = scmp.ne.s32.totalorder %s99, %s101
    %p105 = scmp.eq.s32.totalorder %s23, 0
    %p106 = por %p104, %p105
    %p107 = scmp.ne.s32.totalorder %s99, %s101
    %p108 = scmp.eq.s32.totalorder %s28, 3
    %p109 = por %p107, %p108
    %p110 = scmp.ne.s32.totalorder %s101, %s102
    %p111 = scmp.eq.s32.totalorder %s28, 0
    %p112 = por %p110, %p111
    %p113 = scmp.ne.s32.totalorder %s101, %s102
    %p114 = scmp.eq.s32.totalorder %s29, 3
    %p115 = por %p113, %p114
    %p117 = scmp.ne.s32.totalorder %s102, %s116
    %p118 = scmp.eq.s32.totalorder %s29, 0
    %p119 = por %p117, %p118
    %s121 = sadd.s32 %s120, 1
    %p124 = scmp.eq.s32.totalorder %s23, 3
    %p125 = scmp.ne.s32.totalorder %s120, %s122
    %p126 = scmp.eq.s32.totalorder %s23, 0
    %p127 = por %p125, %p126
    %p128 = scmp.ne.s32.totalorder %s120, %s122
    %p129 = scmp.eq.s32.totalorder %s28, 3
    %p130 = por %p128, %p129
    %p131 = scmp.ne.s32.totalorder %s122, %s123
    %p132 = scmp.eq.s32.totalorder %s28, 0
    %p133 = por %p131, %p132
    %p134 = scmp.ne.s32.totalorder %s122, %s123
    %p135 = scmp.eq.s32.totalorder %s29, 3
    %p136 = por %p134, %p135
    %p138 = scmp.ne.s32.totalorder %s123, %s137
    %p139 = scmp.eq.s32.totalorder %s29, 0
    %p140 = por %p138, %p139
    %s142 = sadd.s32 %s141, 1
    %p145 = scmp.eq.s32.totalorder %s23, 3
    %p146 = scmp.ne.s32.totalorder %s141, %s143
    %p147 = scmp.eq.s32.totalorder %s23, 0
    %p148 = por %p146, %p147
    %p149 = scmp.ne.s32.totalorder %s141, %s143
    %p150 = scmp.eq.s32.totalorder %s28, 3
    %p151 = por %p149, %p150
    %p152 = scmp.ne.s32.totalorder %s143, %s144
    %p153 = scmp.eq.s32.totalorder %s28, 0
    %p154 = por %p152, %p153
    %p155 = scmp.ne.s32.totalorder %s143, %s144
    %p156 = scmp.eq.s32.totalorder %s29, 3
    %p157 = por %p155, %p156
    %p159 = scmp.ne.s32.totalorder %s144, %s158
    %p160 = scmp.eq.s32.totalorder %s29, 0
    %p161 = por %p159, %p160
    %s163 = sadd.s32 %s162, 1
    %p166 = scmp.eq.s32.totalorder %s23, 3
    %p167 = scmp.ne.s32.totalorder %s162, %s164
    %p168 = scmp.eq.s32.totalorder %s23, 0
    %p169 = por %p167, %p168
    %p170 = scmp.ne.s32.totalorder %s162, %s164
    %p171 = scmp.eq.s32.totalorder %s28, 3
    %p172 = por %p170, %p171
    %p173 = scmp.ne.s32.totalorder %s164, %s165
    %p174 = scmp.eq.s32.totalorder %s28, 0
    %p175 = por %p173, %p174
    %p176 = scmp.ne.s32.totalorder %s164, %s165
    %p177 = scmp.eq.s32.totalorder %s29, 3
    %p178 = por %p176, %p177
    %p180 = scmp.ne.s32.totalorder %s165, %s179
    %p181 = scmp.eq.s32.totalorder %s29, 0
    %p182 = por %p180, %p181
    %s184 = sadd.s32 %s183, 1
    %p187 = scmp.eq.s32.totalorder %s23, 3
    %p188 = scmp.ne.s32.totalorder %s183, %s185
    %p189 = scmp.eq.s32.totalorder %s23, 0
    %p190 = por %p188, %p189
    %p191 = scmp.ne.s32.totalorder %s183, %s185
    %p192 = scmp.eq.s32.totalorder %s28, 3
    %p193 = por %p191, %p192
    %p194 = scmp.ne.s32.totalorder %s185, %s186
    %p195 = scmp.eq.s32.totalorder %s28, 0
    %p196 = por %p194, %p195
    %p197 = scmp.ne.s32.totalorder %s185, %s186
    %p198 = scmp.eq.s32.totalorder %s29, 3
    %p199 = por %p197, %p198
    %p201 = scmp.ne.s32.totalorder %s186, %s200
    %p202 = scmp.eq.s32.totalorder %s29, 0
    %p203 = por %p201, %p202
    %s205 = sadd.s32 %s204, 1
    %p208 = scmp.eq.s32.totalorder %s23, 3
    %p209 = scmp.ne.s32.totalorder %s204, %s206
    %p210 = scmp.eq.s32.totalorder %s23, 0
    %p211 = por %p209, %p210
    %p212 = scmp.ne.s32.totalorder %s204, %s206
    %p213 = scmp.eq.s32.totalorder %s28, 3
    %p214 = por %p212, %p213
    %p215 = scmp.ne.s32.totalorder %s206, %s207
    %p216 = scmp.eq.s32.totalorder %s28, 0
    %p217 = por %p215, %p216
    %p218 = scmp.ne.s32.totalorder %s206, %s207
    %p219 = scmp.eq.s32.totalorder %s29, 3
    %p220 = por %p218, %p219
    %p222 = scmp.ne.s32.totalorder %s207, %s221
    %p223 = scmp.eq.s32.totalorder %s29, 0
    %p224 = por %p222, %p223
    %s226 = sadd.s32 %s225, 1
    %p229 = scmp.eq.s32.totalorder %s23, 3
    %p230 = scmp.ne.s32.totalorder %s225, %s227
    %p231 = scmp.eq.s32.totalorder %s23, 0
    %p232 = por %p230, %p231
    %p233 = scmp.ne.s32.totalorder %s225, %s227
    %p234 = scmp.eq.s32.totalorder %s28, 3
    %p235 = por %p233, %p234
    %p236 = scmp.ne.s32.totalorder %s227, %s228
    %p237 = scmp.eq.s32.totalorder %s28, 0
    %p238 = por %p236, %p237
    %p239 = scmp.ne.s32.totalorder %s227, %s228
    %p240 = scmp.eq.s32.totalorder %s29, 3
    %p241 = por %p239, %p240
    %p243 = scmp.ne.s32.totalorder %s228, %s242
    %p244 = scmp.eq.s32.totalorder %s29, 0
    %p245 = por %p243, %p244
    %s247 = sadd.s32 %s246, 1
    %p250 = scmp.eq.s32.totalorder %s23, 3
    %p251 = scmp.ne.s32.totalorder %s246, %s248
    %p252 = scmp.eq.s32.totalorder %s23, 0
    %p253 = por %p251, %p252
    %p254 = scmp.ne.s32.totalorder %s246, %s248
    %p255 = scmp.eq.s32.totalorder %s28, 3
    %p256 = por %p254, %p255
    %p257 = scmp.ne.s32.totalorder %s248, %s249
    %p258 = scmp.eq.s32.totalorder %s28, 0
    %p259 = por %p257, %p258
    %p260 = scmp.ne.s32.totalorder %s248, %s249
    %p261 = scmp.eq.s32.totalorder %s29, 3
    %p262 = por %p260, %p261
    %p264 = scmp.ne.s32.totalorder %s249, %s263
    %p265 = scmp.eq.s32.totalorder %s29, 0
    %p266 = por %p264, %p265
    %s268 = sadd.s32 %s267, 1
    %p271 = scmp.eq.s32.totalorder %s23, 3
    %p272 = scmp.ne.s32.totalorder %s267, %s269
    %p273 = scmp.eq.s32.totalorder %s23, 0
    %p274 = por %p272, %p273
    %p275 = scmp.ne.s32.totalorder %s267, %s269
    %p276 = scmp.eq.s32.totalorder %s28, 3
    %p277 = por %p275, %p276
    %p278 = scmp.ne.s32.totalorder %s269, %s270
    %p279 = scmp.eq.s32.totalorder %s28, 0
    %p280 = por %p278, %p279
    %p281 = scmp.ne.s32.totalorder %s269, %s270
    %p282 = scmp.eq.s32.totalorder %s29, 3
    %p283 = por %p281, %p282
    %p285 = scmp.ne.s32.totalorder %s270, %s284
    %p286 = scmp.eq.s32.totalorder %s29, 0
    %p287 = por %p285, %p286
    %s289 = sadd.s32 %s288, 1
    %p292 = scmp.eq.s32.totalorder %s23, 3
    %p293 = scmp.ne.s32.totalorder %s288, %s290
    %p294 = scmp.eq.s32.totalorder %s23, 0
    %p295 = por %p293, %p294
    %p296 = scmp.ne.s32.totalorder %s288, %s290
    %p297 = scmp.eq.s32.totalorder %s28, 3
    %p298 = por %p296, %p297
    %p299 = scmp.ne.s32.totalorder %s290, %s291
    %p300 = scmp.eq.s32.totalorder %s28, 0
    %p301 = por %p299, %p300
    %p302 = scmp.ne.s32.totalorder %s290, %s291
    %p303 = scmp.eq.s32.totalorder %s29, 3
    %p304 = por %p302, %p303
    %p306 = scmp.ne.s32.totalorder %s291, %s305
    %p307 = scmp.eq.s32.totalorder %s29, 0
    %p308 = por %p306, %p307
    %s310 = sadd.s32 %s309, 1
    %p313 = scmp.eq.s32.totalorder %s23, 3
    %p314 = scmp.ne.s32.totalorder %s309, %s311
    %p315 = scmp.eq.s32.totalorder %s23, 0
    %p316 = por %p314, %p315
    %p317 = scmp.ne.s32.totalorder %s309, %s311
    %p318 = scmp.eq.s32.totalorder %s28, 3
    %p319 = por %p317, %p318
    %p320 = scmp.ne.s32.totalorder %s311, %s312
    %p321 = scmp.eq.s32.totalorder %s28, 0
    %p322 = por %p320, %p321
    %p323 = scmp.ne.s32.totalorder %s311, %s312
    %p324 = scmp.eq.s32.totalorder %s29, 3
    %p325 = por %p323, %p324
    %p327 = scmp.ne.s32.totalorder %s312, %s326
    %p328 = scmp.eq.s32.totalorder %s29, 0
    %p329 = por %p327, %p328
    %s331 = sadd.s32 %s330, 1
    %p334 = scmp.eq.s32.totalorder %s23, 3
    %p335 = scmp.ne.s32.totalorder %s330, %s332
    %p336 = scmp.eq.s32.totalorder %s23, 0
    %p337 = por %p335, %p336
    %p338 = scmp.ne.s32.totalorder %s330, %s332
    %p339 = scmp.eq.s32.totalorder %s28, 3
    %p340 = por %p338, %p339
    %p341 = scmp.ne.s32.totalorder %s332, %s333
    %p342 = scmp.eq.s32.totalorder %s28, 0
    %p343 = por %p341, %p342
    %p344 = scmp.ne.s32.totalorder %s332, %s333
    %p345 = scmp.eq.s32.totalorder %s29, 3
    %p346 = por %p344, %p345
    %p348 = scmp.ne.s32.totalorder %s333, %s347
    %p349 = scmp.eq.s32.totalorder %s29, 0
    %p350 = por %p348, %p349
    %s351 = ssub.s32 %s23, %s30
    %p352 = scmp.eq.s32.totalorder %s351, 0
    %s354 = sadd.s32 %s353, 1
    %s355 = scalar_select %p352, %s353, %s354
    %p358 = pneg %p352
    %p359 = scmp.eq.s32.totalorder %s23, 3
    %p360 = por %p358, %p359
    %p361 = scmp.ne.s32.totalorder %s353, %s356
    %p362 = scmp.eq.s32.totalorder %s23, 0
    %p363 = por %p361, %p362
    %p364 = scmp.ne.s32.totalorder %s353, %s356
    %p365 = scmp.eq.s32.totalorder %s28, 3
    %p366 = por %p364, %p365
    %p367 = scmp.ne.s32.totalorder %s356, %s357
    %p368 = scmp.eq.s32.totalorder %s28, 0
    %p369 = por %p367, %p368
    %p370 = scmp.ne.s32.totalorder %s356, %s357
    %p371 = scmp.eq.s32.totalorder %s29, 3
    %p372 = por %p370, %p371
    %p374 = scmp.ne.s32.totalorder %s357, %s373
    %p375 = scmp.eq.s32.totalorder %s29, 0
    %p376 = por %p374, %p375
    %p377 = scmp.le.s32.totalorder 1, %s23
    %p378 = scmp.lt.s32.totalorder %s23, 5
    %p379 = pnand %p377, %p378
    %p380 = pneg %p379
    // Predicated region
    $region9: #{tpu_custom_call.1} parent=5 // pred_check
      _
    $region10: #{tpu_custom_call.1} parent=5 // pred_check_branch
      %382 = sbr.rel (%p379) target = $region12
    $region11: #{tpu_custom_call.1} parent=5 // pred_region
      %s383 = ssub.s32 %s23, 1
      // Predicated region
      $region13: #{tpu_custom_call.1} parent=11 // pred_check
        %p384 = pneg %p70
      $region14: #{tpu_custom_call.1} parent=11 // pred_check_branch
        %386 = sbr.rel (%p384) target = $region16
      $region15: #{tpu_custom_call.1} parent=11 // pred_region
        _
      $region16: #{tpu_custom_call.1} parent=11 // pred_fallthru
        _
      // Predicated region
      $region17: #{tpu_custom_call.1} parent=11 // pred_check
        %p387 = pneg %p91
      $region18: #{tpu_custom_call.1} parent=11 // pred_check_branch
        %389 = sbr.rel (%p387) target = $region20
      $region19: #{tpu_custom_call.1} parent=11 // pred_region
        _
      $region20: #{tpu_custom_call.1} parent=11 // pred_fallthru
        _
      // Predicated region
      $region21: #{tpu_custom_call.1} parent=11 // pred_check
        %p390 = pneg %p112
      $region22: #{tpu_custom_call.1} parent=11 // pred_check_branch
        %392 = sbr.rel (%p390) target = $region24
      $region23: #{tpu_custom_call.1} parent=11 // pred_region
        _
      $region24: #{tpu_custom_call.1} parent=11 // pred_fallthru
        _
      // Predicated region
      $region25: #{tpu_custom_call.1} parent=11 // pred_check
        %p393 = pneg %p133
      $region26: #{tpu_custom_call.1} parent=11 // pred_check_branch
        %395 = sbr.rel (%p393) target = $region28
      $region27: #{tpu_custom_call.1} parent=11 // pred_region
        _
      $region28: #{tpu_custom_call.1} parent=11 // pred_fallthru
        _
      // Predicated region
      $region29: #{tpu_custom_call.1} parent=11 // pred_check
        %p396 = pneg %p154
      $region30: #{tpu_custom_call.1} parent=11 // pred_check_branch
        %398 = sbr.rel (%p396) target = $region32
      $region31: #{tpu_custom_call.1} parent=11 // pred_region
        _
      $region32: #{tpu_custom_call.1} parent=11 // pred_fallthru
        _
      // Predicated region
      $region33: #{tpu_custom_call.1} parent=11 // pred_check
        %p399 = pneg %p175
      $region34: #{tpu_custom_call.1} parent=11 // pred_check_branch
        %401 = sbr.rel (%p399) target = $region36
      $region35: #{tpu_custom_call.1} parent=11 // pred_region
        _
      $region36: #{tpu_custom_call.1} parent=11 // pred_fallthru
        _
      // Predicated region
      $region37: #{tpu_custom_call.1} parent=11 // pred_check
        %p402 = pneg %p196
      $region38: #{tpu_custom_call.1} parent=11 // pred_check_branch
        %404 = sbr.rel (%p402) target = $region40
      $region39: #{tpu_custom_call.1} parent=11 // pred_region
        _
      $region40: #{tpu_custom_call.1} parent=11 // pred_fallthru
        _
      // Predicated region
      $region41: #{tpu_custom_call.1} parent=11 // pred_check
        %p405 = pneg %p217
      $region42: #{tpu_custom_call.1} parent=11 // pred_check_branch
        %407 = sbr.rel (%p405) target = $region44
      $region43: #{tpu_custom_call.1} parent=11 // pred_region
        _
      $region44: #{tpu_custom_call.1} parent=11 // pred_fallthru
        _
      // Predicated region
      $region45: #{tpu_custom_call.1} parent=11 // pred_check
        %p408 = pneg %p238
      $region46: #{tpu_custom_call.1} parent=11 // pred_check_branch
        %410 = sbr.rel (%p408) target = $region48
      $region47: #{tpu_custom_call.1} parent=11 // pred_region
        _
      $region48: #{tpu_custom_call.1} parent=11 // pred_fallthru
        _
      // Predicated region
      $region49: #{tpu_custom_call.1} parent=11 // pred_check
        %p411 = pneg %p259
      $region50: #{tpu_custom_call.1} parent=11 // pred_check_branch
        %413 = sbr.rel (%p411) target = $region52
      $region51: #{tpu_custom_call.1} parent=11 // pred_region
        _
      $region52: #{tpu_custom_call.1} parent=11 // pred_fallthru
        _
      // Predicated region
      $region53: #{tpu_custom_call.1} parent=11 // pred_check
        %p414 = pneg %p280
      $region54: #{tpu_custom_call.1} parent=11 // pred_check_branch
        %416 = sbr.rel (%p414) target = $region56
      $region55: #{tpu_custom_call.1} parent=11 // pred_region
        _
      $region56: #{tpu_custom_call.1} parent=11 // pred_fallthru
        _
      // Predicated region
      $region57: #{tpu_custom_call.1} parent=11 // pred_check
        %p417 = pneg %p301
      $region58: #{tpu_custom_call.1} parent=11 // pred_check_branch
        %419 = sbr.rel (%p417) target = $region60
      $region59: #{tpu_custom_call.1} parent=11 // pred_region
        _
      $region60: #{tpu_custom_call.1} parent=11 // pred_fallthru
        _
      // Predicated region
      $region61: #{tpu_custom_call.1} parent=11 // pred_check
        %p420 = pneg %p322
      $region62: #{tpu_custom_call.1} parent=11 // pred_check_branch
        %422 = sbr.rel (%p420) target = $region64
      $region63: #{tpu_custom_call.1} parent=11 // pred_region
        _
      $region64: #{tpu_custom_call.1} parent=11 // pred_fallthru
        _
      // Predicated region
      $region65: #{tpu_custom_call.1} parent=11 // pred_check
        %p423 = pneg %p343
      $region66: #{tpu_custom_call.1} parent=11 // pred_check_branch
        %425 = sbr.rel (%p423) target = $region68
      $region67: #{tpu_custom_call.1} parent=11 // pred_region
        _
      $region68: #{tpu_custom_call.1} parent=11 // pred_fallthru
        _
    $region12: #{tpu_custom_call.1} parent=5 // pred_fallthru
      _
    %p426 = scmp.lt.s32.totalorder %s23, 4
    // Predicated region
    $region69: #{tpu_custom_call.1} parent=5 // pred_check
      %p427 = pneg %p426
    $region70: #{tpu_custom_call.1} parent=5 // pred_check_branch
      %429 = sbr.rel (%p427) target = $region72
    $region71: #{tpu_custom_call.1} parent=5 // pred_region
      // Predicated region
      $region73: #{tpu_custom_call.1} parent=71 // pred_check
        %p430 = pneg %p43
      $region74: #{tpu_custom_call.1} parent=71 // pred_check_branch
        %432 = sbr.rel (%p430) target = $region76
      $region75: #{tpu_custom_call.1} parent=71 // pred_region
        %s433 = smul.u32 64, %s23
        %p434 = scmp.lt.s32.totalorder %s433, 255
        %s435 = scalar_select %p434, %s433, 255
        %s436 = smul.addr %s435, 4
        %s437 = scalar_lea.vmem %s0, %s436
        %s438 = smul.u32 64, %s23
      $region76: #{tpu_custom_call.1} parent=71 // pred_fallthru
        _
    $region72: #{tpu_custom_call.1} parent=5 // pred_fallthru
      _
    %p439 = scmp.le.s32.totalorder 1, %s23
    %p440 = scmp.lt.s32.totalorder %s23, 5
    %p441 = pnand %p439, %p440
    %p442 = pneg %p441
    // Predicated region
    $region77: #{tpu_custom_call.1} parent=5 // pred_check
      _
    $region78: #{tpu_custom_call.1} parent=5 // pred_check_branch
      %444 = sbr.rel (%p441) target = $region80
    $region79: #{tpu_custom_call.1} parent=5 // pred_region
      %s445 = ssub.s32 %s23, 1
      %s446 = smul.u32 64, %s28
      %p447 = scmp.lt.s32.totalorder %s446, 255
      %s448 = scalar_select %p447, %s446, 255
      %s449 = smul.addr %s448, 4
      %s450 = scalar_lea.vmem %s0, %s449
      %p451 = pneg %p49
      %p452 = pneg %p46
      %p453 = pneg %p70
      %p454 = pneg %p67
      %p455 = pneg %p91
      %p456 = pneg %p88
      %p457 = pneg %p112
      %p458 = pneg %p109
      %p459 = pneg %p133
      %p460 = pneg %p130
      %p461 = pneg %p154
      %p462 = pneg %p151
      %p463 = pneg %p175
      %p464 = pneg %p172
      %p465 = pneg %p196
      %p466 = pneg %p193
      %p467 = pneg %p217
      %p468 = pneg %p214
      %p469 = pneg %p238
      %p470 = pneg %p235
      %p471 = pneg %p259
      %p472 = pneg %p256
      %p473 = pneg %p280
      %p474 = pneg %p277
      %p475 = pneg %p301
      %p476 = pneg %p298
      %p477 = pneg %p322
      %p478 = pneg %p319
      %p479 = pneg %p343
      %p480 = pneg %p340
      %p481 = pneg %p369
      %p482 = pneg %p366
      %s483 = smul.u32 64, %s28
      %p484 = scmp.lt.s32.totalorder %s483, 255
      %s485 = scalar_select %p484, %s483, 255
      %s486 = smul.addr %s485, 8
      %s487 = scalar_lea.vmem %s15, %s486
      %s488 = smul.u32 64, %s28
      %p489 = scmp.lt.s32.totalorder %s488, 255
      %s490 = scalar_select %p489, %s488, 255
      %s491 = smul.addr %s490, 4
      %s492 = scalar_lea.vmem %s0, %s491
      %s493 = smul.u32 64, %s28
      %s494 = smul.u32 64, %s28
      %p495 = scmp.lt.s32.totalorder %s494, 255
      %s496 = scalar_select %p495, %s494, 255
      %s497 = smul.addr %s496, 8
      %s498 = scalar_lea.vmem %s15, %s497
      %s499 = smul.u32 64, %s28
      %v501 = vld [vmem:[%s492] sm:$0xf]
      %v502 = vld [vmem:[%s492 + $0x4] sm:$0xf]
      %v503 = vld [vmem:[%s492 + $0x8] sm:$0xf]
      %v504 = vld [vmem:[%s492 + $0xc] sm:$0xf]
      %v505 = vld [vmem:[%s492 + $0x10] sm:$0xf]
      %v506 = vld [vmem:[%s492 + $0x14] sm:$0xf]
      %v507 = vld [vmem:[%s492 + $0x18] sm:$0xf]
      %v508 = vld [vmem:[%s492 + $0x1c] sm:$0xf]
      %v509 = vld [vmem:[%s492 + $0x20] sm:$0xf]
      %v510 = vld [vmem:[%s492 + $0x24] sm:$0xf]
      %v511 = vld [vmem:[%s492 + $0x28] sm:$0xf]
      %v512 = vld [vmem:[%s492 + $0x2c] sm:$0xf]
      %v513 = vld [vmem:[%s492 + $0x30] sm:$0xf]
      %v514 = vld [vmem:[%s492 + $0x34] sm:$0xf]
      %v515 = vld [vmem:[%s492 + $0x38] sm:$0xf]
      %v516 = vld [vmem:[%s492 + $0x3c] sm:$0xf]
      %v517 = vld [vmem:[%s492 + $0x40] sm:$0xf]
      %v518 = vld [vmem:[%s492 + $0x44] sm:$0xf]
      %v519 = vld [vmem:[%s492 + $0x48] sm:$0xf]
      %v520 = vld [vmem:[%s492 + $0x4c] sm:$0xf]
      %v521 = vld [vmem:[%s492 + $0x50] sm:$0xf]
      %v522 = vld [vmem:[%s492 + $0x54] sm:$0xf]
      %v523 = vld [vmem:[%s492 + $0x58] sm:$0xf]
      %v524 = vld [vmem:[%s492 + $0x5c] sm:$0xf]
      %v525 = vld [vmem:[%s492 + $0x60] sm:$0xf]
      %v526 = vld [vmem:[%s492 + $0x64] sm:$0xf]
      %v527 = vld [vmem:[%s492 + $0x68] sm:$0xf]
      %v528 = vld [vmem:[%s492 + $0x6c] sm:$0xf]
      %v529 = vld [vmem:[%s492 + $0x70] sm:$0xf]
      %v530 = vld [vmem:[%s492 + $0x74] sm:$0xf]
      %v531 = vld [vmem:[%s492 + $0x78] sm:$0xf]
      %v532 = vld [vmem:[%s492 + $0x7c] sm:$0xf]
      %v533 = vld [vmem:[%s492 + $0x80] sm:$0xf]
      %v534 = vld [vmem:[%s492 + $0x84] sm:$0xf]
      %v535 = vld [vmem:[%s492 + $0x88] sm:$0xf]
      %v536 = vld [vmem:[%s492 + $0x8c] sm:$0xf]
      %v537 = vld [vmem:[%s492 + $0x90] sm:$0xf]
      %v538 = vld [vmem:[%s492 + $0x94] sm:$0xf]
      %v539 = vld [vmem:[%s492 + $0x98] sm:$0xf]
      %v540 = vld [vmem:[%s492 + $0x9c] sm:$0xf]
      %v541 = vld [vmem:[%s492 + $0xa0] sm:$0xf]
      %v542 = vld [vmem:[%s492 + $0xa4] sm:$0xf]
      %v543 = vld [vmem:[%s492 + $0xa8] sm:$0xf]
      %v544 = vld [vmem:[%s492 + $0xac] sm:$0xf]
      %v545 = vld [vmem:[%s492 + $0xb0] sm:$0xf]
      %v546 = vld [vmem:[%s492 + $0xb4] sm:$0xf]
      %v547 = vld [vmem:[%s492 + $0xb8] sm:$0xf]
      %v548 = vld [vmem:[%s492 + $0xbc] sm:$0xf]
      %v549 = vld [vmem:[%s492 + $0xc0] sm:$0xf]
      %v550 = vld [vmem:[%s492 + $0xc4] sm:$0xf]
      %v551 = vld [vmem:[%s492 + $0xc8] sm:$0xf]
      %v552 = vld [vmem:[%s492 + $0xcc] sm:$0xf]
      %v553 = vld [vmem:[%s492 + $0xd0] sm:$0xf]
      %v554 = vld [vmem:[%s492 + $0xd4] sm:$0xf]
      %v555 = vld [vmem:[%s492 + $0xd8] sm:$0xf]
      %v556 = vld [vmem:[%s492 + $0xdc] sm:$0xf]
      %v557 = vld [vmem:[%s492 + $0xe0] sm:$0xf]
      %v558 = vld [vmem:[%s492 + $0xe4] sm:$0xf]
      %v559 = vld [vmem:[%s492 + $0xe8] sm:$0xf]
      %v560 = vld [vmem:[%s492 + $0xec] sm:$0xf]
      %v561 = vld [vmem:[%s492 + $0xf0] sm:$0xf]
      %v562 = vld [vmem:[%s492 + $0xf4] sm:$0xf]
      %v563 = vld [vmem:[%s492 + $0xf8] sm:$0xf]
      %v564 = vld [vmem:[%s492 + $0xfc] sm:$0xf]
      %v565 = vld [vmem:[%s1] sm:$0xf]
      %v566 = vld [vmem:[%s1 + $0x4] sm:$0xf]
      %v567 = vld [vmem:[%s2] sm:$0x1]
      %v569 = vperm.slane %v567, 0
      %v635 = vunpack.c.l.b16 %v501
      %v636 = vunpack.c.l.b16 %v502
      %v637 = vunpack.c.l.b16 %v503
      %v638 = vunpack.c.l.b16 %v504
      %v639 = vunpack.c.l.b16 %v505
      %v640 = vunpack.c.l.b16 %v506
      %v641 = vunpack.c.l.b16 %v507
      %v642 = vunpack.c.l.b16 %v508
      %v643 = vunpack.c.l.b16 %v509
      %v644 = vunpack.c.l.b16 %v510
      %v645 = vunpack.c.l.b16 %v511
      %v646 = vunpack.c.l.b16 %v512
      %v647 = vunpack.c.l.b16 %v513
      %v648 = vunpack.c.l.b16 %v514
      %v649 = vunpack.c.l.b16 %v515
      %v650 = vunpack.c.l.b16 %v516
      %v651 = vunpack.c.l.b16 %v517
      %v652 = vunpack.c.l.b16 %v518
      %v653 = vunpack.c.l.b16 %v519
      %v654 = vunpack.c.l.b16 %v520
      %v655 = vunpack.c.l.b16 %v521
      %v656 = vunpack.c.l.b16 %v522
      %v657 = vunpack.c.l.b16 %v523
      %v658 = vunpack.c.l.b16 %v524
      %v659 = vunpack.c.l.b16 %v525
      %v660 = vunpack.c.l.b16 %v526
      %v661 = vunpack.c.l.b16 %v527
      %v662 = vunpack.c.l.b16 %v528
      %v663 = vunpack.c.l.b16 %v529
      %v664 = vunpack.c.l.b16 %v530
      %v665 = vunpack.c.l.b16 %v531
      %v666 = vunpack.c.l.b16 %v532
      %v667 = vunpack.c.l.b16 %v533
      %v668 = vunpack.c.l.b16 %v534
      %v669 = vunpack.c.l.b16 %v535
      %v670 = vunpack.c.l.b16 %v536
      %v671 = vunpack.c.l.b16 %v537
      %v672 = vunpack.c.l.b16 %v538
      %v673 = vunpack.c.l.b16 %v539
      %v674 = vunpack.c.l.b16 %v540
      %v675 = vunpack.c.l.b16 %v541
      %v676 = vunpack.c.l.b16 %v542
      %v677 = vunpack.c.l.b16 %v543
      %v678 = vunpack.c.l.b16 %v544
      %v679 = vunpack.c.l.b16 %v545
      %v680 = vunpack.c.l.b16 %v546
      %v681 = vunpack.c.l.b16 %v547
      %v682 = vunpack.c.l.b16 %v548
      %v683 = vunpack.c.l.b16 %v549
      %v684 = vunpack.c.l.b16 %v550
      %v685 = vunpack.c.l.b16 %v551
      %v686 = vunpack.c.l.b16 %v552
      %v687 = vunpack.c.l.b16 %v553
      %v688 = vunpack.c.l.b16 %v554
      %v689 = vunpack.c.l.b16 %v555
      %v690 = vunpack.c.l.b16 %v556
      %v691 = vunpack.c.l.b16 %v557
      %v692 = vunpack.c.l.b16 %v558
      %v693 = vunpack.c.l.b16 %v559
      %v694 = vunpack.c.l.b16 %v560
      %v695 = vunpack.c.l.b16 %v561
      %v696 = vunpack.c.l.b16 %v562
      %v697 = vunpack.c.l.b16 %v563
      %v698 = vunpack.c.l.b16 %v564
      %v699 = vpack.c.b16 %v636, %v635
      %v700 = vpack.c.b16 %v638, %v637
      %v701 = vpack.c.b16 %v640, %v639
      %v702 = vpack.c.b16 %v642, %v641
      %v703 = vpack.c.b16 %v644, %v643
      %v704 = vpack.c.b16 %v646, %v645
      %v705 = vpack.c.b16 %v648, %v647
      %v706 = vpack.c.b16 %v650, %v649
      %v707 = vpack.c.b16 %v652, %v651
      %v708 = vpack.c.b16 %v654, %v653
      %v709 = vpack.c.b16 %v656, %v655
      %v710 = vpack.c.b16 %v658, %v657
      %v711 = vpack.c.b16 %v660, %v659
      %v712 = vpack.c.b16 %v662, %v661
      %v713 = vpack.c.b16 %v664, %v663
      %v714 = vpack.c.b16 %v666, %v665
      %v715 = vpack.c.b16 %v668, %v667
      %v716 = vpack.c.b16 %v670, %v669
      %v717 = vpack.c.b16 %v672, %v671
      %v718 = vpack.c.b16 %v674, %v673
      %v719 = vpack.c.b16 %v676, %v675
      %v720 = vpack.c.b16 %v678, %v677
      %v721 = vpack.c.b16 %v680, %v679
      %v722 = vpack.c.b16 %v682, %v681
      %v723 = vpack.c.b16 %v684, %v683
      %v724 = vpack.c.b16 %v686, %v685
      %v725 = vpack.c.b16 %v688, %v687
      %v726 = vpack.c.b16 %v690, %v689
      %v727 = vpack.c.b16 %v692, %v691
      %v728 = vpack.c.b16 %v694, %v693
      %v729 = vpack.c.b16 %v696, %v695
      %v730 = vpack.c.b16 %v698, %v697
      %v733 = vunpack.c.l.b16 %v565
      %v734 = vunpack.c.l.b16 %v566
      %v735 = vpack.c.b16 %v734, %v733
      %vm737 = vcmask 130048
      %v739 = vsel %vm737, %v699, 0
      %v742 = vsel %vm737, %v700, 0
      %v745 = vsel %vm737, %v701, 0
      %v748 = vsel %vm737, %v702, 0
      %v751 = vsel %vm737, %v703, 0
      %v754 = vsel %vm737, %v704, 0
      %v757 = vsel %vm737, %v705, 0
      %v760 = vsel %vm737, %v706, 0
      %v763 = vsel %vm737, %v707, 0
      %v766 = vsel %vm737, %v708, 0
      %v769 = vsel %vm737, %v709, 0
      %v772 = vsel %vm737, %v710, 0
      %v775 = vsel %vm737, %v711, 0
      %v778 = vsel %vm737, %v712, 0
      %v781 = vsel %vm737, %v713, 0
      %v784 = vsel %vm737, %v714, 0
      %v787 = vsel %vm737, %v715, 0
      %v790 = vsel %vm737, %v716, 0
      %v793 = vsel %vm737, %v717, 0
      %v796 = vsel %vm737, %v718, 0
      %v799 = vsel %vm737, %v719, 0
      %v802 = vsel %vm737, %v720, 0
      %v805 = vsel %vm737, %v721, 0
      %v808 = vsel %vm737, %v722, 0
      %v811 = vsel %vm737, %v723, 0
      %v814 = vsel %vm737, %v724, 0
      %v817 = vsel %vm737, %v725, 0
      %v820 = vsel %vm737, %v726, 0
      %v823 = vsel %vm737, %v727, 0
      %v826 = vsel %vm737, %v728, 0
      %v829 = vsel %vm737, %v729, 0
      %v832 = vsel %vm737, %v730, 0
      %834 = vmatpush.bf16.msra.mxu0 0
      %835 = vmatpush.bf16.msra.mxu0 0
      %836 = vmatpush.bf16.msra.mxu0 0
      %837 = vmatpush.bf16.msra.mxu0 0
      %838 = vmatpush.bf16.msra.mxu0 0
      %839 = vmatpush.bf16.msra.mxu0 0
      %840 = vmatpush.bf16.msra.mxu0 0
      %841 = vmatpush.bf16.msra.mxu0 %v735
      %842 = vmatmul.bf16.gmra.mxu0 %v739
      %v843 = vpop.f32.mrf.mxu0
      %v844 = vadd.f32 %v569, %v843
      %v845 = vpop.f32.mrf.mxu0
      %v846 = vadd.f32 %v569, %v845
      %847 = vmatmul.bf16.gmra.mxu0 %v742
      %v848 = vpop.f32.mrf.mxu0
      %v849 = vadd.f32 %v569, %v848
      %v850 = vpop.f32.mrf.mxu0
      %v851 = vadd.f32 %v569, %v850
      %852 = vmatmul.bf16.gmra.mxu0 %v745
      %v853 = vpop.f32.mrf.mxu0
      %v854 = vadd.f32 %v569, %v853
      %v855 = vpop.f32.mrf.mxu0
      %v856 = vadd.f32 %v569, %v855
      %857 = vmatmul.bf16.gmra.mxu0 %v748
      %v858 = vpop.f32.mrf.mxu0
      %v859 = vadd.f32 %v569, %v858
      %v860 = vpop.f32.mrf.mxu0
      %v861 = vadd.f32 %v569, %v860
      %862 = vmatmul.bf16.gmra.mxu0 %v751
      %v863 = vpop.f32.mrf.mxu0
      %v864 = vadd.f32 %v569, %v863
      %v865 = vpop.f32.mrf.mxu0
      %v866 = vadd.f32 %v569, %v865
      %867 = vmatmul.bf16.gmra.mxu0 %v754
      %v868 = vpop.f32.mrf.mxu0
      %v869 = vadd.f32 %v569, %v868
      %v870 = vpop.f32.mrf.mxu0
      %v871 = vadd.f32 %v569, %v870
      %872 = vmatmul.bf16.gmra.mxu0 %v757
      %v873 = vpop.f32.mrf.mxu0
      %v874 = vadd.f32 %v569, %v873
      %v875 = vpop.f32.mrf.mxu0
      %v876 = vadd.f32 %v569, %v875
      %877 = vmatmul.bf16.gmra.mxu0 %v760
      %v878 = vpop.f32.mrf.mxu0
      %v879 = vadd.f32 %v569, %v878
      %v880 = vpop.f32.mrf.mxu0
      %v881 = vadd.f32 %v569, %v880
      %882 = vmatmul.bf16.gmra.mxu0 %v763
      %v883 = vpop.f32.mrf.mxu0
      %v884 = vadd.f32 %v569, %v883
      %v885 = vpop.f32.mrf.mxu0
      %v886 = vadd.f32 %v569, %v885
      %887 = vmatmul.bf16.gmra.mxu0 %v766
      %v888 = vpop.f32.mrf.mxu0
      %v889 = vadd.f32 %v569, %v888
      %v890 = vpop.f32.mrf.mxu0
      %v891 = vadd.f32 %v569, %v890
      %892 = vmatmul.bf16.gmra.mxu0 %v769
      %v893 = vpop.f32.mrf.mxu0
      %v894 = vadd.f32 %v569, %v893
      %v895 = vpop.f32.mrf.mxu0
      %v896 = vadd.f32 %v569, %v895
      %897 = vmatmul.bf16.gmra.mxu0 %v772
      %v898 = vpop.f32.mrf.mxu0
      %v899 = vadd.f32 %v569, %v898
      %v900 = vpop.f32.mrf.mxu0
      %v901 = vadd.f32 %v569, %v900
      %902 = vmatmul.bf16.gmra.mxu0 %v775
      %v903 = vpop.f32.mrf.mxu0
      %v904 = vadd.f32 %v569, %v903
      %v905 = vpop.f32.mrf.mxu0
      %v906 = vadd.f32 %v569, %v905
      %907 = vmatmul.bf16.gmra.mxu0 %v778
      %v908 = vpop.f32.mrf.mxu0
      %v909 = vadd.f32 %v569, %v908
      %v910 = vpop.f32.mrf.mxu0
      %v911 = vadd.f32 %v569, %v910
      %912 = vmatmul.bf16.gmra.mxu0 %v781
      %v913 = vpop.f32.mrf.mxu0
      %v914 = vadd.f32 %v569, %v913
      %v915 = vpop.f32.mrf.mxu0
      %v916 = vadd.f32 %v569, %v915
      %917 = vmatmul.bf16.gmra.mxu0 %v784
      %v918 = vpop.f32.mrf.mxu0
      %v919 = vadd.f32 %v569, %v918
      %v920 = vpop.f32.mrf.mxu0
      %v921 = vadd.f32 %v569, %v920
      %922 = vmatmul.bf16.gmra.mxu0 %v787
      %v923 = vpop.f32.mrf.mxu0
      %v924 = vadd.f32 %v569, %v923
      %v925 = vpop.f32.mrf.mxu0
      %v926 = vadd.f32 %v569, %v925
      %927 = vmatmul.bf16.gmra.mxu0 %v790
      %v928 = vpop.f32.mrf.mxu0
      %v929 = vadd.f32 %v569, %v928
      %v930 = vpop.f32.mrf.mxu0
      %v931 = vadd.f32 %v569, %v930
      %932 = vmatmul.bf16.gmra.mxu0 %v793
      %v933 = vpop.f32.mrf.mxu0
      %v934 = vadd.f32 %v569, %v933
      %v935 = vpop.f32.mrf.mxu0
      %v936 = vadd.f32 %v569, %v935
      %937 = vmatmul.bf16.gmra.mxu0 %v796
      %v938 = vpop.f32.mrf.mxu0
      %v939 = vadd.f32 %v569, %v938
      %v940 = vpop.f32.mrf.mxu0
      %v941 = vadd.f32 %v569, %v940
      %942 = vmatmul.bf16.gmra.mxu0 %v799
      %v943 = vpop.f32.mrf.mxu0
      %v944 = vadd.f32 %v569, %v943
      %v945 = vpop.f32.mrf.mxu0
      %v946 = vadd.f32 %v569, %v945
      %947 = vmatmul.bf16.gmra.mxu0 %v802
      %v948 = vpop.f32.mrf.mxu0
      %v949 = vadd.f32 %v569, %v948
      %v950 = vpop.f32.mrf.mxu0
      %v951 = vadd.f32 %v569, %v950
      %952 = vmatmul.bf16.gmra.mxu0 %v805
      %v953 = vpop.f32.mrf.mxu0
      %v954 = vadd.f32 %v569, %v953
      %v955 = vpop.f32.mrf.mxu0
      %v956 = vadd.f32 %v569, %v955
      %957 = vmatmul.bf16.gmra.mxu0 %v808
      %v958 = vpop.f32.mrf.mxu0
      %v959 = vadd.f32 %v569, %v958
      %v960 = vpop.f32.mrf.mxu0
      %v961 = vadd.f32 %v569, %v960
      %962 = vmatmul.bf16.gmra.mxu0 %v811
      %v963 = vpop.f32.mrf.mxu0
      %v964 = vadd.f32 %v569, %v963
      %v965 = vpop.f32.mrf.mxu0
      %v966 = vadd.f32 %v569, %v965
      %967 = vmatmul.bf16.gmra.mxu0 %v814
      %v968 = vpop.f32.mrf.mxu0
      %v969 = vadd.f32 %v569, %v968
      %v970 = vpop.f32.mrf.mxu0
      %v971 = vadd.f32 %v569, %v970
      %972 = vmatmul.bf16.gmra.mxu0 %v817
      %v973 = vpop.f32.mrf.mxu0
      %v974 = vadd.f32 %v569, %v973
      %v975 = vpop.f32.mrf.mxu0
      %v976 = vadd.f32 %v569, %v975
      %977 = vmatmul.bf16.gmra.mxu0 %v820
      %v978 = vpop.f32.mrf.mxu0
      %v979 = vadd.f32 %v569, %v978
      %v980 = vpop.f32.mrf.mxu0
      %v981 = vadd.f32 %v569, %v980
      %982 = vmatmul.bf16.gmra.mxu0 %v823
      %v983 = vpop.f32.mrf.mxu0
      %v984 = vadd.f32 %v569, %v983
      %v985 = vpop.f32.mrf.mxu0
      %v986 = vadd.f32 %v569, %v985
      %987 = vmatmul.bf16.gmra.mxu0 %v826
      %v988 = vpop.f32.mrf.mxu0
      %v989 = vadd.f32 %v569, %v988
      %v990 = vpop.f32.mrf.mxu0
      %v991 = vadd.f32 %v569, %v990
      %992 = vmatmul.bf16.gmra.mxu0 %v829
      %v993 = vpop.f32.mrf.mxu0
      %v994 = vadd.f32 %v569, %v993
      %v995 = vpop.f32.mrf.mxu0
      %v996 = vadd.f32 %v569, %v995
      %997 = vmatmul.bf16.gmra.mxu0 %v832
      %v998 = vpop.f32.mrf.mxu0
      %v999 = vadd.f32 %v569, %v998
      %v1000 = vpop.f32.mrf.mxu0
      %v1001 = vadd.f32 %v569, %v1000
      %1002 = vdwg.mxu0
      %v1003 = vmul.f32 %v844, 0.1
      %v1004 = vmul.f32 %v846, 0.1
      %v1005 = vmul.f32 %v849, 0.1
      %v1006 = vmul.f32 %v851, 0.1
      %v1007 = vmul.f32 %v854, 0.1
      %v1008 = vmul.f32 %v856, 0.1
      %v1009 = vmul.f32 %v859, 0.1
      %v1010 = vmul.f32 %v861, 0.1
      %v1011 = vmul.f32 %v864, 0.1
      %v1012 = vmul.f32 %v866, 0.1
      %v1013 = vmul.f32 %v869, 0.1
      %v1014 = vmul.f32 %v871, 0.1
      %v1015 = vmul.f32 %v874, 0.1
      %v1016 = vmul.f32 %v876, 0.1
      %v1017 = vmul.f32 %v879, 0.1
      %v1018 = vmul.f32 %v881, 0.1
      %v1019 = vmul.f32 %v884, 0.1
      %v1020 = vmul.f32 %v886, 0.1
      %v1021 = vmul.f32 %v889, 0.1
      %v1022 = vmul.f32 %v891, 0.1
      %v1023 = vmul.f32 %v894, 0.1
      %v1024 = vmul.f32 %v896, 0.1
      %v1025 = vmul.f32 %v899, 0.1
      %v1026 = vmul.f32 %v901, 0.1
      %v1027 = vmul.f32 %v904, 0.1
      %v1028 = vmul.f32 %v906, 0.1
      %v1029 = vmul.f32 %v909, 0.1
      %v1030 = vmul.f32 %v911, 0.1
      %v1031 = vmul.f32 %v914, 0.1
      %v1032 = vmul.f32 %v916, 0.1
      %v1033 = vmul.f32 %v919, 0.1
      %v1034 = vmul.f32 %v921, 0.1
      %v1035 = vmul.f32 %v924, 0.1
      %v1036 = vmul.f32 %v926, 0.1
      %v1037 = vmul.f32 %v929, 0.1
      %v1038 = vmul.f32 %v931, 0.1
      %v1039 = vmul.f32 %v934, 0.1
      %v1040 = vmul.f32 %v936, 0.1
      %v1041 = vmul.f32 %v939, 0.1
      %v1042 = vmul.f32 %v941, 0.1
      %v1043 = vmul.f32 %v944, 0.1
      %v1044 = vmul.f32 %v946, 0.1
      %v1045 = vmul.f32 %v949, 0.1
      %v1046 = vmul.f32 %v951, 0.1
      %v1047 = vmul.f32 %v954, 0.1
      %v1048 = vmul.f32 %v956, 0.1
      %v1049 = vmul.f32 %v959, 0.1
      %v1050 = vmul.f32 %v961, 0.1
      %v1051 = vmul.f32 %v964, 0.1
      %v1052 = vmul.f32 %v966, 0.1
      %v1053 = vmul.f32 %v969, 0.1
      %v1054 = vmul.f32 %v971, 0.1
      %v1055 = vmul.f32 %v974, 0.1
      %v1056 = vmul.f32 %v976, 0.1
      %v1057 = vmul.f32 %v979, 0.1
      %v1058 = vmul.f32 %v981, 0.1
      %v1059 = vmul.f32 %v984, 0.1
      %v1060 = vmul.f32 %v986, 0.1
      %v1061 = vmul.f32 %v989, 0.1
      %v1062 = vmul.f32 %v991, 0.1
      %v1063 = vmul.f32 %v994, 0.1
      %v1064 = vmul.f32 %v996, 0.1
      %v1065 = vmul.f32 %v999, 0.1
      %v1066 = vmul.f32 %v1001, 0.1
      %v1067 = vmax.f32 %v844, %v1003
      %v1068 = vmax.f32 %v846, %v1004
      %v1069 = vmax.f32 %v849, %v1005
      %v1070 = vmax.f32 %v851, %v1006
      %v1071 = vmax.f32 %v854, %v1007
      %v1072 = vmax.f32 %v856, %v1008
      %v1073 = vmax.f32 %v859, %v1009
      %v1074 = vmax.f32 %v861, %v1010
      %v1075 = vmax.f32 %v864, %v1011
      %v1076 = vmax.f32 %v866, %v1012
      %v1077 = vmax.f32 %v869, %v1013
      %v1078 = vmax.f32 %v871, %v1014
      %v1079 = vmax.f32 %v874, %v1015
      %v1080 = vmax.f32 %v876, %v1016
      %v1081 = vmax.f32 %v879, %v1017
      %v1082 = vmax.f32 %v881, %v1018
      %v1083 = vmax.f32 %v884, %v1019
      %v1084 = vmax.f32 %v886, %v1020
      %v1085 = vmax.f32 %v889, %v1021
      %v1086 = vmax.f32 %v891, %v1022
      %v1087 = vmax.f32 %v894, %v1023
      %v1088 = vmax.f32 %v896, %v1024
      %v1089 = vmax.f32 %v899, %v1025
      %v1090 = vmax.f32 %v901, %v1026
      %v1091 = vmax.f32 %v904, %v1027
      %v1092 = vmax.f32 %v906, %v1028
      %v1093 = vmax.f32 %v909, %v1029
      %v1094 = vmax.f32 %v911, %v1030
      %v1095 = vmax.f32 %v914, %v1031
      %v1096 = vmax.f32 %v916, %v1032
      %v1097 = vmax.f32 %v919, %v1033
      %v1098 = vmax.f32 %v921, %v1034
      %v1099 = vmax.f32 %v924, %v1035
      %v1100 = vmax.f32 %v926, %v1036
      %v1101 = vmax.f32 %v929, %v1037
      %v1102 = vmax.f32 %v931, %v1038
      %v1103 = vmax.f32 %v934, %v1039
      %v1104 = vmax.f32 %v936, %v1040
      %v1105 = vmax.f32 %v939, %v1041
      %v1106 = vmax.f32 %v941, %v1042
      %v1107 = vmax.f32 %v944, %v1043
      %v1108 = vmax.f32 %v946, %v1044
      %v1109 = vmax.f32 %v949, %v1045
      %v1110 = vmax.f32 %v951, %v1046
      %v1111 = vmax.f32 %v954, %v1047
      %v1112 = vmax.f32 %v956, %v1048
      %v1113 = vmax.f32 %v959, %v1049
      %v1114 = vmax.f32 %v961, %v1050
      %v1115 = vmax.f32 %v964, %v1051
      %v1116 = vmax.f32 %v966, %v1052
      %v1117 = vmax.f32 %v969, %v1053
      %v1118 = vmax.f32 %v971, %v1054
      %v1119 = vmax.f32 %v974, %v1055
      %v1120 = vmax.f32 %v976, %v1056
      %v1121 = vmax.f32 %v979, %v1057
      %v1122 = vmax.f32 %v981, %v1058
      %v1123 = vmax.f32 %v984, %v1059
      %v1124 = vmax.f32 %v986, %v1060
      %v1125 = vmax.f32 %v989, %v1061
      %v1126 = vmax.f32 %v991, %v1062
      %v1127 = vmax.f32 %v994, %v1063
      %v1128 = vmax.f32 %v996, %v1064
      %v1129 = vmax.f32 %v999, %v1065
      %v1130 = vmax.f32 %v1001, %v1066
      %v1131 = vpack.c.bf16 %v1068, %v1067
      %v1132 = vpack.c.bf16 %v1070, %v1069
      %v1133 = vpack.c.bf16 %v1072, %v1071
      %v1134 = vpack.c.bf16 %v1074, %v1073
      %v1135 = vpack.c.bf16 %v1076, %v1075
      %v1136 = vpack.c.bf16 %v1078, %v1077
      %v1137 = vpack.c.bf16 %v1080, %v1079
      %v1138 = vpack.c.bf16 %v1082, %v1081
      %v1139 = vpack.c.bf16 %v1084, %v1083
      %v1140 = vpack.c.bf16 %v1086, %v1085
      %v1141 = vpack.c.bf16 %v1088, %v1087
      %v1142 = vpack.c.bf16 %v1090, %v1089
      %v1143 = vpack.c.bf16 %v1092, %v1091
      %v1144 = vpack.c.bf16 %v1094, %v1093
      %v1145 = vpack.c.bf16 %v1096, %v1095
      %v1146 = vpack.c.bf16 %v1098, %v1097
      %v1147 = vpack.c.bf16 %v1100, %v1099
      %v1148 = vpack.c.bf16 %v1102, %v1101
      %v1149 = vpack.c.bf16 %v1104, %v1103
      %v1150 = vpack.c.bf16 %v1106, %v1105
      %v1151 = vpack.c.bf16 %v1108, %v1107
      %v1152 = vpack.c.bf16 %v1110, %v1109
      %v1153 = vpack.c.bf16 %v1112, %v1111
      %v1154 = vpack.c.bf16 %v1114, %v1113
      %v1155 = vpack.c.bf16 %v1116, %v1115
      %v1156 = vpack.c.bf16 %v1118, %v1117
      %v1157 = vpack.c.bf16 %v1120, %v1119
      %v1158 = vpack.c.bf16 %v1122, %v1121
      %v1159 = vpack.c.bf16 %v1124, %v1123
      %v1160 = vpack.c.bf16 %v1126, %v1125
      %v1161 = vpack.c.bf16 %v1128, %v1127
      %v1162 = vpack.c.bf16 %v1130, %v1129
      %v1163 = vld [vmem:[%s3] sm:$0xf]
      %v1164 = vld [vmem:[%s3 + $0x4] sm:$0xf]
      %v1165 = vld [vmem:[%s3 + $0x8] sm:$0xf]
      %v1166 = vld [vmem:[%s3 + $0xc] sm:$0xf]
      %v1167 = vld [vmem:[%s4] sm:$0x1]
      %v1169 = vperm.slane %v1167, 0
      %v1175 = vunpack.c.l.b16 %v1163
      %v1176 = vunpack.c.l.b16 %v1164
      %v1177 = vunpack.c.l.b16 %v1165
      %v1178 = vunpack.c.l.b16 %v1166
      %v1179 = vpack.c.b16 %v1176, %v1175
      %v1180 = vpack.c.b16 %v1178, %v1177
      %vm1183 = vcmask 261120
      %v1185 = vsel %vm1183, %v1131, 0
      %v1188 = vsel %vm1183, %v1132, 0
      %v1191 = vsel %vm1183, %v1133, 0
      %v1194 = vsel %vm1183, %v1134, 0
      %v1197 = vsel %vm1183, %v1135, 0
      %v1200 = vsel %vm1183, %v1136, 0
      %v1203 = vsel %vm1183, %v1137, 0
      %v1206 = vsel %vm1183, %v1138, 0
      %v1209 = vsel %vm1183, %v1139, 0
      %v1212 = vsel %vm1183, %v1140, 0
      %v1215 = vsel %vm1183, %v1141, 0
      %v1218 = vsel %vm1183, %v1142, 0
      %v1221 = vsel %vm1183, %v1143, 0
      %v1224 = vsel %vm1183, %v1144, 0
      %v1227 = vsel %vm1183, %v1145, 0
      %v1230 = vsel %vm1183, %v1146, 0
      %v1233 = vsel %vm1183, %v1147, 0
      %v1236 = vsel %vm1183, %v1148, 0
      %v1239 = vsel %vm1183, %v1149, 0
      %v1242 = vsel %vm1183, %v1150, 0
      %v1245 = vsel %vm1183, %v1151, 0
      %v1248 = vsel %vm1183, %v1152, 0
      %v1251 = vsel %vm1183, %v1153, 0
      %v1254 = vsel %vm1183, %v1154, 0
      %v1257 = vsel %vm1183, %v1155, 0
      %v1260 = vsel %vm1183, %v1156, 0
      %v1263 = vsel %vm1183, %v1157, 0
      %v1266 = vsel %vm1183, %v1158, 0
      %v1269 = vsel %vm1183, %v1159, 0
      %v1272 = vsel %vm1183, %v1160, 0
      %v1275 = vsel %vm1183, %v1161, 0
      %v1278 = vsel %vm1183, %v1162, 0
      %1280 = vmatpush.bf16.msra.mxu0 0
      %1281 = vmatpush.bf16.msra.mxu0 0
      %1282 = vmatpush.bf16.msra.mxu0 0
      %1283 = vmatpush.bf16.msra.mxu0 0
      %1284 = vmatpush.bf16.msra.mxu0 0
      %1285 = vmatpush.bf16.msra.mxu0 0
      %1286 = vmatpush.bf16.msra.mxu0 %v1180
      %1287 = vmatpush.bf16.msra.mxu0 %v1179
      %1288 = vmatmul.bf16.gmra.mxu0 %v1185
      %v1289 = vpop.f32.mrf.mxu0
      %v1290 = vadd.f32 %v1169, %v1289
      %v1291 = vpop.f32.mrf.mxu0
      %v1292 = vadd.f32 %v1169, %v1291
      %1293 = vmatmul.bf16.gmra.mxu0 %v1188
      %v1294 = vpop.f32.mrf.mxu0
      %v1295 = vadd.f32 %v1169, %v1294
      %v1296 = vpop.f32.mrf.mxu0
      %v1297 = vadd.f32 %v1169, %v1296
      %1298 = vmatmul.bf16.gmra.mxu0 %v1191
      %v1299 = vpop.f32.mrf.mxu0
      %v1300 = vadd.f32 %v1169, %v1299
      %v1301 = vpop.f32.mrf.mxu0
      %v1302 = vadd.f32 %v1169, %v1301
      %1303 = vmatmul.bf16.gmra.mxu0 %v1194
      %v1304 = vpop.f32.mrf.mxu0
      %v1305 = vadd.f32 %v1169, %v1304
      %v1306 = vpop.f32.mrf.mxu0
      %v1307 = vadd.f32 %v1169, %v1306
      %1308 = vmatmul.bf16.gmra.mxu0 %v1197
      %v1309 = vpop.f32.mrf.mxu0
      %v1310 = vadd.f32 %v1169, %v1309
      %v1311 = vpop.f32.mrf.mxu0
      %v1312 = vadd.f32 %v1169, %v1311
      %1313 = vmatmul.bf16.gmra.mxu0 %v1200
      %v1314 = vpop.f32.mrf.mxu0
      %v1315 = vadd.f32 %v1169, %v1314
      %v1316 = vpop.f32.mrf.mxu0
      %v1317 = vadd.f32 %v1169, %v1316
      %1318 = vmatmul.bf16.gmra.mxu0 %v1203
      %v1319 = vpop.f32.mrf.mxu0
      %v1320 = vadd.f32 %v1169, %v1319
      %v1321 = vpop.f32.mrf.mxu0
      %v1322 = vadd.f32 %v1169, %v1321
      %1323 = vmatmul.bf16.gmra.mxu0 %v1206
      %v1324 = vpop.f32.mrf.mxu0
      %v1325 = vadd.f32 %v1169, %v1324
      %v1326 = vpop.f32.mrf.mxu0
      %v1327 = vadd.f32 %v1169, %v1326
      %1328 = vmatmul.bf16.gmra.mxu0 %v1209
      %v1329 = vpop.f32.mrf.mxu0
      %v1330 = vadd.f32 %v1169, %v1329
      %v1331 = vpop.f32.mrf.mxu0
      %v1332 = vadd.f32 %v1169, %v1331
      %1333 = vmatmul.bf16.gmra.mxu0 %v1212
      %v1334 = vpop.f32.mrf.mxu0
      %v1335 = vadd.f32 %v1169, %v1334
      %v1336 = vpop.f32.mrf.mxu0
      %v1337 = vadd.f32 %v1169, %v1336
      %1338 = vmatmul.bf16.gmra.mxu0 %v1215
      %v1339 = vpop.f32.mrf.mxu0
      %v1340 = vadd.f32 %v1169, %v1339
      %v1341 = vpop.f32.mrf.mxu0
      %v1342 = vadd.f32 %v1169, %v1341
      %1343 = vmatmul.bf16.gmra.mxu0 %v1218
      %v1344 = vpop.f32.mrf.mxu0
      %v1345 = vadd.f32 %v1169, %v1344
      %v1346 = vpop.f32.mrf.mxu0
      %v1347 = vadd.f32 %v1169, %v1346
      %1348 = vmatmul.bf16.gmra.mxu0 %v1221
      %v1349 = vpop.f32.mrf.mxu0
      %v1350 = vadd.f32 %v1169, %v1349
      %v1351 = vpop.f32.mrf.mxu0
      %v1352 = vadd.f32 %v1169, %v1351
      %1353 = vmatmul.bf16.gmra.mxu0 %v1224
      %v1354 = vpop.f32.mrf.mxu0
      %v1355 = vadd.f32 %v1169, %v1354
      %v1356 = vpop.f32.mrf.mxu0
      %v1357 = vadd.f32 %v1169, %v1356
      %1358 = vmatmul.bf16.gmra.mxu0 %v1227
      %v1359 = vpop.f32.mrf.mxu0
      %v1360 = vadd.f32 %v1169, %v1359
      %v1361 = vpop.f32.mrf.mxu0
      %v1362 = vadd.f32 %v1169, %v1361
      %1363 = vmatmul.bf16.gmra.mxu0 %v1230
      %v1364 = vpop.f32.mrf.mxu0
      %v1365 = vadd.f32 %v1169, %v1364
      %v1366 = vpop.f32.mrf.mxu0
      %v1367 = vadd.f32 %v1169, %v1366
      %1368 = vmatmul.bf16.gmra.mxu0 %v1233
      %v1369 = vpop.f32.mrf.mxu0
      %v1370 = vadd.f32 %v1169, %v1369
      %v1371 = vpop.f32.mrf.mxu0
      %v1372 = vadd.f32 %v1169, %v1371
      %1373 = vmatmul.bf16.gmra.mxu0 %v1236
      %v1374 = vpop.f32.mrf.mxu0
      %v1375 = vadd.f32 %v1169, %v1374
      %v1376 = vpop.f32.mrf.mxu0
      %v1377 = vadd.f32 %v1169, %v1376
      %1378 = vmatmul.bf16.gmra.mxu0 %v1239
      %v1379 = vpop.f32.mrf.mxu0
      %v1380 = vadd.f32 %v1169, %v1379
      %v1381 = vpop.f32.mrf.mxu0
      %v1382 = vadd.f32 %v1169, %v1381
      %1383 = vmatmul.bf16.gmra.mxu0 %v1242
      %v1384 = vpop.f32.mrf.mxu0
      %v1385 = vadd.f32 %v1169, %v1384
      %v1386 = vpop.f32.mrf.mxu0
      %v1387 = vadd.f32 %v1169, %v1386
      %1388 = vmatmul.bf16.gmra.mxu0 %v1245
      %v1389 = vpop.f32.mrf.mxu0
      %v1390 = vadd.f32 %v1169, %v1389
      %v1391 = vpop.f32.mrf.mxu0
      %v1392 = vadd.f32 %v1169, %v1391
      %1393 = vmatmul.bf16.gmra.mxu0 %v1248
      %v1394 = vpop.f32.mrf.mxu0
      %v1395 = vadd.f32 %v1169, %v1394
      %v1396 = vpop.f32.mrf.mxu0
      %v1397 = vadd.f32 %v1169, %v1396
      %1398 = vmatmul.bf16.gmra.mxu0 %v1251
      %v1399 = vpop.f32.mrf.mxu0
      %v1400 = vadd.f32 %v1169, %v1399
      %v1401 = vpop.f32.mrf.mxu0
      %v1402 = vadd.f32 %v1169, %v1401
      %1403 = vmatmul.bf16.gmra.mxu0 %v1254
      %v1404 = vpop.f32.mrf.mxu0
      %v1405 = vadd.f32 %v1169, %v1404
      %v1406 = vpop.f32.mrf.mxu0
      %v1407 = vadd.f32 %v1169, %v1406
      %1408 = vmatmul.bf16.gmra.mxu0 %v1257
      %v1409 = vpop.f32.mrf.mxu0
      %v1410 = vadd.f32 %v1169, %v1409
      %v1411 = vpop.f32.mrf.mxu0
      %v1412 = vadd.f32 %v1169, %v1411
      %1413 = vmatmul.bf16.gmra.mxu0 %v1260
      %v1414 = vpop.f32.mrf.mxu0
      %v1415 = vadd.f32 %v1169, %v1414
      %v1416 = vpop.f32.mrf.mxu0
      %v1417 = vadd.f32 %v1169, %v1416
      %1418 = vmatmul.bf16.gmra.mxu0 %v1263
      %v1419 = vpop.f32.mrf.mxu0
      %v1420 = vadd.f32 %v1169, %v1419
      %v1421 = vpop.f32.mrf.mxu0
      %v1422 = vadd.f32 %v1169, %v1421
      %1423 = vmatmul.bf16.gmra.mxu0 %v1266
      %v1424 = vpop.f32.mrf.mxu0
      %v1425 = vadd.f32 %v1169, %v1424
      %v1426 = vpop.f32.mrf.mxu0
      %v1427 = vadd.f32 %v1169, %v1426
      %1428 = vmatmul.bf16.gmra.mxu0 %v1269
      %v1429 = vpop.f32.mrf.mxu0
      %v1430 = vadd.f32 %v1169, %v1429
      %v1431 = vpop.f32.mrf.mxu0
      %v1432 = vadd.f32 %v1169, %v1431
      %1433 = vmatmul.bf16.gmra.mxu0 %v1272
      %v1434 = vpop.f32.mrf.mxu0
      %v1435 = vadd.f32 %v1169, %v1434
      %v1436 = vpop.f32.mrf.mxu0
      %v1437 = vadd.f32 %v1169, %v1436
      %1438 = vmatmul.bf16.gmra.mxu0 %v1275
      %v1439 = vpop.f32.mrf.mxu0
      %v1440 = vadd.f32 %v1169, %v1439
      %v1441 = vpop.f32.mrf.mxu0
      %v1442 = vadd.f32 %v1169, %v1441
      %1443 = vmatmul.bf16.gmra.mxu0 %v1278
      %v1444 = vpop.f32.mrf.mxu0
      %v1445 = vadd.f32 %v1169, %v1444
      %v1446 = vpop.f32.mrf.mxu0
      %v1447 = vadd.f32 %v1169, %v1446
      %1448 = vdwg.mxu0
      %v1449 = vmul.f32 %v1290, 0.1
      %v1450 = vmul.f32 %v1292, 0.1
      %v1451 = vmul.f32 %v1295, 0.1
      %v1452 = vmul.f32 %v1297, 0.1
      %v1453 = vmul.f32 %v1300, 0.1
      %v1454 = vmul.f32 %v1302, 0.1
      %v1455 = vmul.f32 %v1305, 0.1
      %v1456 = vmul.f32 %v1307, 0.1
      %v1457 = vmul.f32 %v1310, 0.1
      %v1458 = vmul.f32 %v1312, 0.1
      %v1459 = vmul.f32 %v1315, 0.1
      %v1460 = vmul.f32 %v1317, 0.1
      %v1461 = vmul.f32 %v1320, 0.1
      %v1462 = vmul.f32 %v1322, 0.1
      %v1463 = vmul.f32 %v1325, 0.1
      %v1464 = vmul.f32 %v1327, 0.1
      %v1465 = vmul.f32 %v1330, 0.1
      %v1466 = vmul.f32 %v1332, 0.1
      %v1467 = vmul.f32 %v1335, 0.1
      %v1468 = vmul.f32 %v1337, 0.1
      %v1469 = vmul.f32 %v1340, 0.1
      %v1470 = vmul.f32 %v1342, 0.1
      %v1471 = vmul.f32 %v1345, 0.1
      %v1472 = vmul.f32 %v1347, 0.1
      %v1473 = vmul.f32 %v1350, 0.1
      %v1474 = vmul.f32 %v1352, 0.1
      %v1475 = vmul.f32 %v1355, 0.1
      %v1476 = vmul.f32 %v1357, 0.1
      %v1477 = vmul.f32 %v1360, 0.1
      %v1478 = vmul.f32 %v1362, 0.1
      %v1479 = vmul.f32 %v1365, 0.1
      %v1480 = vmul.f32 %v1367, 0.1
      %v1481 = vmul.f32 %v1370, 0.1
      %v1482 = vmul.f32 %v1372, 0.1
      %v1483 = vmul.f32 %v1375, 0.1
      %v1484 = vmul.f32 %v1377, 0.1
      %v1485 = vmul.f32 %v1380, 0.1
      %v1486 = vmul.f32 %v1382, 0.1
      %v1487 = vmul.f32 %v1385, 0.1
      %v1488 = vmul.f32 %v1387, 0.1
      %v1489 = vmul.f32 %v1390, 0.1
      %v1490 = vmul.f32 %v1392, 0.1
      %v1491 = vmul.f32 %v1395, 0.1
      %v1492 = vmul.f32 %v1397, 0.1
      %v1493 = vmul.f32 %v1400, 0.1
      %v1494 = vmul.f32 %v1402, 0.1
      %v1495 = vmul.f32 %v1405, 0.1
      %v1496 = vmul.f32 %v1407, 0.1
      %v1497 = vmul.f32 %v1410, 0.1
      %v1498 = vmul.f32 %v1412, 0.1
      %v1499 = vmul.f32 %v1415, 0.1
      %v1500 = vmul.f32 %v1417, 0.1
      %v1501 = vmul.f32 %v1420, 0.1
      %v1502 = vmul.f32 %v1422, 0.1
      %v1503 = vmul.f32 %v1425, 0.1
      %v1504 = vmul.f32 %v1427, 0.1
      %v1505 = vmul.f32 %v1430, 0.1
      %v1506 = vmul.f32 %v1432, 0.1
      %v1507 = vmul.f32 %v1435, 0.1
      %v1508 = vmul.f32 %v1437, 0.1
      %v1509 = vmul.f32 %v1440, 0.1
      %v1510 = vmul.f32 %v1442, 0.1
      %v1511 = vmul.f32 %v1445, 0.1
      %v1512 = vmul.f32 %v1447, 0.1
      %v1513 = vmax.f32 %v1290, %v1449
      %v1514 = vmax.f32 %v1292, %v1450
      %v1515 = vmax.f32 %v1295, %v1451
      %v1516 = vmax.f32 %v1297, %v1452
      %v1517 = vmax.f32 %v1300, %v1453
      %v1518 = vmax.f32 %v1302, %v1454
      %v1519 = vmax.f32 %v1305, %v1455
      %v1520 = vmax.f32 %v1307, %v1456
      %v1521 = vmax.f32 %v1310, %v1457
      %v1522 = vmax.f32 %v1312, %v1458
      %v1523 = vmax.f32 %v1315, %v1459
      %v1524 = vmax.f32 %v1317, %v1460
      %v1525 = vmax.f32 %v1320, %v1461
      %v1526 = vmax.f32 %v1322, %v1462
      %v1527 = vmax.f32 %v1325, %v1463
      %v1528 = vmax.f32 %v1327, %v1464
      %v1529 = vmax.f32 %v1330, %v1465
      %v1530 = vmax.f32 %v1332, %v1466
      %v1531 = vmax.f32 %v1335, %v1467
      %v1532 = vmax.f32 %v1337, %v1468
      %v1533 = vmax.f32 %v1340, %v1469
      %v1534 = vmax.f32 %v1342, %v1470
      %v1535 = vmax.f32 %v1345, %v1471
      %v1536 = vmax.f32 %v1347, %v1472
      %v1537 = vmax.f32 %v1350, %v1473
      %v1538 = vmax.f32 %v1352, %v1474
      %v1539 = vmax.f32 %v1355, %v1475
      %v1540 = vmax.f32 %v1357, %v1476
      %v1541 = vmax.f32 %v1360, %v1477
      %v1542 = vmax.f32 %v1362, %v1478
      %v1543 = vmax.f32 %v1365, %v1479
      %v1544 = vmax.f32 %v1367, %v1480
      %v1545 = vmax.f32 %v1370, %v1481
      %v1546 = vmax.f32 %v1372, %v1482
      %v1547 = vmax.f32 %v1375, %v1483
      %v1548 = vmax.f32 %v1377, %v1484
      %v1549 = vmax.f32 %v1380, %v1485
      %v1550 = vmax.f32 %v1382, %v1486
      %v1551 = vmax.f32 %v1385, %v1487
      %v1552 = vmax.f32 %v1387, %v1488
      %v1553 = vmax.f32 %v1390, %v1489
      %v1554 = vmax.f32 %v1392, %v1490
      %v1555 = vmax.f32 %v1395, %v1491
      %v1556 = vmax.f32 %v1397, %v1492
      %v1557 = vmax.f32 %v1400, %v1493
      %v1558 = vmax.f32 %v1402, %v1494
      %v1559 = vmax.f32 %v1405, %v1495
      %v1560 = vmax.f32 %v1407, %v1496
      %v1561 = vmax.f32 %v1410, %v1497
      %v1562 = vmax.f32 %v1412, %v1498
      %v1563 = vmax.f32 %v1415, %v1499
      %v1564 = vmax.f32 %v1417, %v1500
      %v1565 = vmax.f32 %v1420, %v1501
      %v1566 = vmax.f32 %v1422, %v1502
      %v1567 = vmax.f32 %v1425, %v1503
      %v1568 = vmax.f32 %v1427, %v1504
      %v1569 = vmax.f32 %v1430, %v1505
      %v1570 = vmax.f32 %v1432, %v1506
      %v1571 = vmax.f32 %v1435, %v1507
      %v1572 = vmax.f32 %v1437, %v1508
      %v1573 = vmax.f32 %v1440, %v1509
      %v1574 = vmax.f32 %v1442, %v1510
      %v1575 = vmax.f32 %v1445, %v1511
      %v1576 = vmax.f32 %v1447, %v1512
      %v1577 = vpack.c.bf16 %v1514, %v1513
      %v1578 = vpack.c.bf16 %v1516, %v1515
      %v1579 = vpack.c.bf16 %v1518, %v1517
      %v1580 = vpack.c.bf16 %v1520, %v1519
      %v1581 = vpack.c.bf16 %v1522, %v1521
      %v1582 = vpack.c.bf16 %v1524, %v1523
      %v1583 = vpack.c.bf16 %v1526, %v1525
      %v1584 = vpack.c.bf16 %v1528, %v1527
      %v1585 = vpack.c.bf16 %v1530, %v1529
      %v1586 = vpack.c.bf16 %v1532, %v1531
      %v1587 = vpack.c.bf16 %v1534, %v1533
      %v1588 = vpack.c.bf16 %v1536, %v1535
      %v1589 = vpack.c.bf16 %v1538, %v1537
      %v1590 = vpack.c.bf16 %v1540, %v1539
      %v1591 = vpack.c.bf16 %v1542, %v1541
      %v1592 = vpack.c.bf16 %v1544, %v1543
      %v1593 = vpack.c.bf16 %v1546, %v1545
      %v1594 = vpack.c.bf16 %v1548, %v1547
      %v1595 = vpack.c.bf16 %v1550, %v1549
      %v1596 = vpack.c.bf16 %v1552, %v1551
      %v1597 = vpack.c.bf16 %v1554, %v1553
      %v1598 = vpack.c.bf16 %v1556, %v1555
      %v1599 = vpack.c.bf16 %v1558, %v1557
      %v1600 = vpack.c.bf16 %v1560, %v1559
      %v1601 = vpack.c.bf16 %v1562, %v1561
      %v1602 = vpack.c.bf16 %v1564, %v1563
      %v1603 = vpack.c.bf16 %v1566, %v1565
      %v1604 = vpack.c.bf16 %v1568, %v1567
      %v1605 = vpack.c.bf16 %v1570, %v1569
      %v1606 = vpack.c.bf16 %v1572, %v1571
      %v1607 = vpack.c.bf16 %v1574, %v1573
      %v1608 = vpack.c.bf16 %v1576, %v1575
      %v1609 = vld [vmem:[%s5] sm:$0xf]
      %v1610 = vld [vmem:[%s5 + $0x4] sm:$0xf]
      %v1611 = vld [vmem:[%s5 + $0x8] sm:$0xf]
      %v1612 = vld [vmem:[%s5 + $0xc] sm:$0xf]
      %v1613 = vld [vmem:[%s6] sm:$0x1]
      %v1615 = vperm.slane %v1613, 0
      %v1621 = vunpack.c.l.b16 %v1609
      %v1622 = vunpack.c.l.b16 %v1610
      %v1623 = vunpack.c.l.b16 %v1611
      %v1624 = vunpack.c.l.b16 %v1612
      %v1625 = vpack.c.b16 %v1622, %v1621
      %v1626 = vpack.c.b16 %v1624, %v1623
      %v1630 = vsel %vm1183, %v1577, 0
      %v1633 = vsel %vm1183, %v1578, 0
      %v1636 = vsel %vm1183, %v1579, 0
      %v1639 = vsel %vm1183, %v1580, 0
      %v1642 = vsel %vm1183, %v1581, 0
      %v1645 = vsel %vm1183, %v1582, 0
      %v1648 = vsel %vm1183, %v1583, 0
      %v1651 = vsel %vm1183, %v1584, 0
      %v1654 = vsel %vm1183, %v1585, 0
      %v1657 = vsel %vm1183, %v1586, 0
      %v1660 = vsel %vm1183, %v1587, 0
      %v1663 = vsel %vm1183, %v1588, 0
      %v1666 = vsel %vm1183, %v1589, 0
      %v1669 = vsel %vm1183, %v1590, 0
      %v1672 = vsel %vm1183, %v1591, 0
      %v1675 = vsel %vm1183, %v1592, 0
      %v1678 = vsel %vm1183, %v1593, 0
      %v1681 = vsel %vm1183, %v1594, 0
      %v1684 = vsel %vm1183, %v1595, 0
      %v1687 = vsel %vm1183, %v1596, 0
      %v1690 = vsel %vm1183, %v1597, 0
      %v1693 = vsel %vm1183, %v1598, 0
      %v1696 = vsel %vm1183, %v1599, 0
      %v1699 = vsel %vm1183, %v1600, 0
      %v1702 = vsel %vm1183, %v1601, 0
      %v1705 = vsel %vm1183, %v1602, 0
      %v1708 = vsel %vm1183, %v1603, 0
      %v1711 = vsel %vm1183, %v1604, 0
      %v1714 = vsel %vm1183, %v1605, 0
      %v1717 = vsel %vm1183, %v1606, 0
      %v1720 = vsel %vm1183, %v1607, 0
      %v1723 = vsel %vm1183, %v1608, 0
      %1725 = vmatpush.bf16.msra.mxu0 0
      %1726 = vmatpush.bf16.msra.mxu0 0
      %1727 = vmatpush.bf16.msra.mxu0 0
      %1728 = vmatpush.bf16.msra.mxu0 0
      %1729 = vmatpush.bf16.msra.mxu0 0
      %1730 = vmatpush.bf16.msra.mxu0 0
      %1731 = vmatpush.bf16.msra.mxu0 %v1626
      %1732 = vmatpush.bf16.msra.mxu0 %v1625
      %1733 = vmatmul.bf16.gmra.mxu0 %v1630
      %v1734 = vpop.f32.mrf.mxu0
      %v1735 = vadd.f32 %v1615, %v1734
      %v1736 = vpop.f32.mrf.mxu0
      %v1737 = vadd.f32 %v1615, %v1736
      %1738 = vmatmul.bf16.gmra.mxu0 %v1633
      %v1739 = vpop.f32.mrf.mxu0
      %v1740 = vadd.f32 %v1615, %v1739
      %v1741 = vpop.f32.mrf.mxu0
      %v1742 = vadd.f32 %v1615, %v1741
      %1743 = vmatmul.bf16.gmra.mxu0 %v1636
      %v1744 = vpop.f32.mrf.mxu0
      %v1745 = vadd.f32 %v1615, %v1744
      %v1746 = vpop.f32.mrf.mxu0
      %v1747 = vadd.f32 %v1615, %v1746
      %1748 = vmatmul.bf16.gmra.mxu0 %v1639
      %v1749 = vpop.f32.mrf.mxu0
      %v1750 = vadd.f32 %v1615, %v1749
      %v1751 = vpop.f32.mrf.mxu0
      %v1752 = vadd.f32 %v1615, %v1751
      %1753 = vmatmul.bf16.gmra.mxu0 %v1642
      %v1754 = vpop.f32.mrf.mxu0
      %v1755 = vadd.f32 %v1615, %v1754
      %v1756 = vpop.f32.mrf.mxu0
      %v1757 = vadd.f32 %v1615, %v1756
      %1758 = vmatmul.bf16.gmra.mxu0 %v1645
      %v1759 = vpop.f32.mrf.mxu0
      %v1760 = vadd.f32 %v1615, %v1759
      %v1761 = vpop.f32.mrf.mxu0
      %v1762 = vadd.f32 %v1615, %v1761
      %1763 = vmatmul.bf16.gmra.mxu0 %v1648
      %v1764 = vpop.f32.mrf.mxu0
      %v1765 = vadd.f32 %v1615, %v1764
      %v1766 = vpop.f32.mrf.mxu0
      %v1767 = vadd.f32 %v1615, %v1766
      %1768 = vmatmul.bf16.gmra.mxu0 %v1651
      %v1769 = vpop.f32.mrf.mxu0
      %v1770 = vadd.f32 %v1615, %v1769
      %v1771 = vpop.f32.mrf.mxu0
      %v1772 = vadd.f32 %v1615, %v1771
      %1773 = vmatmul.bf16.gmra.mxu0 %v1654
      %v1774 = vpop.f32.mrf.mxu0
      %v1775 = vadd.f32 %v1615, %v1774
      %v1776 = vpop.f32.mrf.mxu0
      %v1777 = vadd.f32 %v1615, %v1776
      %1778 = vmatmul.bf16.gmra.mxu0 %v1657
      %v1779 = vpop.f32.mrf.mxu0
      %v1780 = vadd.f32 %v1615, %v1779
      %v1781 = vpop.f32.mrf.mxu0
      %v1782 = vadd.f32 %v1615, %v1781
      %1783 = vmatmul.bf16.gmra.mxu0 %v1660
      %v1784 = vpop.f32.mrf.mxu0
      %v1785 = vadd.f32 %v1615, %v1784
      %v1786 = vpop.f32.mrf.mxu0
      %v1787 = vadd.f32 %v1615, %v1786
      %1788 = vmatmul.bf16.gmra.mxu0 %v1663
      %v1789 = vpop.f32.mrf.mxu0
      %v1790 = vadd.f32 %v1615, %v1789
      %v1791 = vpop.f32.mrf.mxu0
      %v1792 = vadd.f32 %v1615, %v1791
      %1793 = vmatmul.bf16.gmra.mxu0 %v1666
      %v1794 = vpop.f32.mrf.mxu0
      %v1795 = vadd.f32 %v1615, %v1794
      %v1796 = vpop.f32.mrf.mxu0
      %v1797 = vadd.f32 %v1615, %v1796
      %1798 = vmatmul.bf16.gmra.mxu0 %v1669
      %v1799 = vpop.f32.mrf.mxu0
      %v1800 = vadd.f32 %v1615, %v1799
      %v1801 = vpop.f32.mrf.mxu0
      %v1802 = vadd.f32 %v1615, %v1801
      %1803 = vmatmul.bf16.gmra.mxu0 %v1672
      %v1804 = vpop.f32.mrf.mxu0
      %v1805 = vadd.f32 %v1615, %v1804
      %v1806 = vpop.f32.mrf.mxu0
      %v1807 = vadd.f32 %v1615, %v1806
      %1808 = vmatmul.bf16.gmra.mxu0 %v1675
      %v1809 = vpop.f32.mrf.mxu0
      %v1810 = vadd.f32 %v1615, %v1809
      %v1811 = vpop.f32.mrf.mxu0
      %v1812 = vadd.f32 %v1615, %v1811
      %1813 = vmatmul.bf16.gmra.mxu0 %v1678
      %v1814 = vpop.f32.mrf.mxu0
      %v1815 = vadd.f32 %v1615, %v1814
      %v1816 = vpop.f32.mrf.mxu0
      %v1817 = vadd.f32 %v1615, %v1816
      %1818 = vmatmul.bf16.gmra.mxu0 %v1681
      %v1819 = vpop.f32.mrf.mxu0
      %v1820 = vadd.f32 %v1615, %v1819
      %v1821 = vpop.f32.mrf.mxu0
      %v1822 = vadd.f32 %v1615, %v1821
      %1823 = vmatmul.bf16.gmra.mxu0 %v1684
      %v1824 = vpop.f32.mrf.mxu0
      %v1825 = vadd.f32 %v1615, %v1824
      %v1826 = vpop.f32.mrf.mxu0
      %v1827 = vadd.f32 %v1615, %v1826
      %1828 = vmatmul.bf16.gmra.mxu0 %v1687
      %v1829 = vpop.f32.mrf.mxu0
      %v1830 = vadd.f32 %v1615, %v1829
      %v1831 = vpop.f32.mrf.mxu0
      %v1832 = vadd.f32 %v1615, %v1831
      %1833 = vmatmul.bf16.gmra.mxu0 %v1690
      %v1834 = vpop.f32.mrf.mxu0
      %v1835 = vadd.f32 %v1615, %v1834
      %v1836 = vpop.f32.mrf.mxu0
      %v1837 = vadd.f32 %v1615, %v1836
      %1838 = vmatmul.bf16.gmra.mxu0 %v1693
      %v1839 = vpop.f32.mrf.mxu0
      %v1840 = vadd.f32 %v1615, %v1839
      %v1841 = vpop.f32.mrf.mxu0
      %v1842 = vadd.f32 %v1615, %v1841
      %1843 = vmatmul.bf16.gmra.mxu0 %v1696
      %v1844 = vpop.f32.mrf.mxu0
      %v1845 = vadd.f32 %v1615, %v1844
      %v1846 = vpop.f32.mrf.mxu0
      %v1847 = vadd.f32 %v1615, %v1846
      %1848 = vmatmul.bf16.gmra.mxu0 %v1699
      %v1849 = vpop.f32.mrf.mxu0
      %v1850 = vadd.f32 %v1615, %v1849
      %v1851 = vpop.f32.mrf.mxu0
      %v1852 = vadd.f32 %v1615, %v1851
      %1853 = vmatmul.bf16.gmra.mxu0 %v1702
      %v1854 = vpop.f32.mrf.mxu0
      %v1855 = vadd.f32 %v1615, %v1854
      %v1856 = vpop.f32.mrf.mxu0
      %v1857 = vadd.f32 %v1615, %v1856
      %1858 = vmatmul.bf16.gmra.mxu0 %v1705
      %v1859 = vpop.f32.mrf.mxu0
      %v1860 = vadd.f32 %v1615, %v1859
      %v1861 = vpop.f32.mrf.mxu0
      %v1862 = vadd.f32 %v1615, %v1861
      %1863 = vmatmul.bf16.gmra.mxu0 %v1708
      %v1864 = vpop.f32.mrf.mxu0
      %v1865 = vadd.f32 %v1615, %v1864
      %v1866 = vpop.f32.mrf.mxu0
      %v1867 = vadd.f32 %v1615, %v1866
      %1868 = vmatmul.bf16.gmra.mxu0 %v1711
      %v1869 = vpop.f32.mrf.mxu0
      %v1870 = vadd.f32 %v1615, %v1869
      %v1871 = vpop.f32.mrf.mxu0
      %v1872 = vadd.f32 %v1615, %v1871
      %1873 = vmatmul.bf16.gmra.mxu0 %v1714
      %v1874 = vpop.f32.mrf.mxu0
      %v1875 = vadd.f32 %v1615, %v1874
      %v1876 = vpop.f32.mrf.mxu0
      %v1877 = vadd.f32 %v1615, %v1876
      %1878 = vmatmul.bf16.gmra.mxu0 %v1717
      %v1879 = vpop.f32.mrf.mxu0
      %v1880 = vadd.f32 %v1615, %v1879
      %v1881 = vpop.f32.mrf.mxu0
      %v1882 = vadd.f32 %v1615, %v1881
      %1883 = vmatmul.bf16.gmra.mxu0 %v1720
      %v1884 = vpop.f32.mrf.mxu0
      %v1885 = vadd.f32 %v1615, %v1884
      %v1886 = vpop.f32.mrf.mxu0
      %v1887 = vadd.f32 %v1615, %v1886
      %1888 = vmatmul.bf16.gmra.mxu0 %v1723
      %v1889 = vpop.f32.mrf.mxu0
      %v1890 = vadd.f32 %v1615, %v1889
      %v1891 = vpop.f32.mrf.mxu0
      %v1892 = vadd.f32 %v1615, %v1891
      %1893 = vdwg.mxu0
      %v1894 = vmul.f32 %v1735, 0.1
      %v1895 = vmul.f32 %v1737, 0.1
      %v1896 = vmul.f32 %v1740, 0.1
      %v1897 = vmul.f32 %v1742, 0.1
      %v1898 = vmul.f32 %v1745, 0.1
      %v1899 = vmul.f32 %v1747, 0.1
      %v1900 = vmul.f32 %v1750, 0.1
      %v1901 = vmul.f32 %v1752, 0.1
      %v1902 = vmul.f32 %v1755, 0.1
      %v1903 = vmul.f32 %v1757, 0.1
      %v1904 = vmul.f32 %v1760, 0.1
      %v1905 = vmul.f32 %v1762, 0.1
      %v1906 = vmul.f32 %v1765, 0.1
      %v1907 = vmul.f32 %v1767, 0.1
      %v1908 = vmul.f32 %v1770, 0.1
      %v1909 = vmul.f32 %v1772, 0.1
      %v1910 = vmul.f32 %v1775, 0.1
      %v1911 = vmul.f32 %v1777, 0.1
      %v1912 = vmul.f32 %v1780, 0.1
      %v1913 = vmul.f32 %v1782, 0.1
      %v1914 = vmul.f32 %v1785, 0.1
      %v1915 = vmul.f32 %v1787, 0.1
      %v1916 = vmul.f32 %v1790, 0.1
      %v1917 = vmul.f32 %v1792, 0.1
      %v1918 = vmul.f32 %v1795, 0.1
      %v1919 = vmul.f32 %v1797, 0.1
      %v1920 = vmul.f32 %v1800, 0.1
      %v1921 = vmul.f32 %v1802, 0.1
      %v1922 = vmul.f32 %v1805, 0.1
      %v1923 = vmul.f32 %v1807, 0.1
      %v1924 = vmul.f32 %v1810, 0.1
      %v1925 = vmul.f32 %v1812, 0.1
      %v1926 = vmul.f32 %v1815, 0.1
      %v1927 = vmul.f32 %v1817, 0.1
      %v1928 = vmul.f32 %v1820, 0.1
      %v1929 = vmul.f32 %v1822, 0.1
      %v1930 = vmul.f32 %v1825, 0.1
      %v1931 = vmul.f32 %v1827, 0.1
      %v1932 = vmul.f32 %v1830, 0.1
      %v1933 = vmul.f32 %v1832, 0.1
      %v1934 = vmul.f32 %v1835, 0.1
      %v1935 = vmul.f32 %v1837, 0.1
      %v1936 = vmul.f32 %v1840, 0.1
      %v1937 = vmul.f32 %v1842, 0.1
      %v1938 = vmul.f32 %v1845, 0.1
      %v1939 = vmul.f32 %v1847, 0.1
      %v1940 = vmul.f32 %v1850, 0.1
      %v1941 = vmul.f32 %v1852, 0.1
      %v1942 = vmul.f32 %v1855, 0.1
      %v1943 = vmul.f32 %v1857, 0.1
      %v1944 = vmul.f32 %v1860, 0.1
      %v1945 = vmul.f32 %v1862, 0.1
      %v1946 = vmul.f32 %v1865, 0.1
      %v1947 = vmul.f32 %v1867, 0.1
      %v1948 = vmul.f32 %v1870, 0.1
      %v1949 = vmul.f32 %v1872, 0.1
      %v1950 = vmul.f32 %v1875, 0.1
      %v1951 = vmul.f32 %v1877, 0.1
      %v1952 = vmul.f32 %v1880, 0.1
      %v1953 = vmul.f32 %v1882, 0.1
      %v1954 = vmul.f32 %v1885, 0.1
      %v1955 = vmul.f32 %v1887, 0.1
      %v1956 = vmul.f32 %v1890, 0.1
      %v1957 = vmul.f32 %v1892, 0.1
      %v1958 = vmax.f32 %v1735, %v1894
      %v1959 = vmax.f32 %v1737, %v1895
      %v1960 = vmax.f32 %v1740, %v1896
      %v1961 = vmax.f32 %v1742, %v1897
      %v1962 = vmax.f32 %v1745, %v1898
      %v1963 = vmax.f32 %v1747, %v1899
      %v1964 = vmax.f32 %v1750, %v1900
      %v1965 = vmax.f32 %v1752, %v1901
      %v1966 = vmax.f32 %v1755, %v1902
      %v1967 = vmax.f32 %v1757, %v1903
      %v1968 = vmax.f32 %v1760, %v1904
      %v1969 = vmax.f32 %v1762, %v1905
      %v1970 = vmax.f32 %v1765, %v1906
      %v1971 = vmax.f32 %v1767, %v1907
      %v1972 = vmax.f32 %v1770, %v1908
      %v1973 = vmax.f32 %v1772, %v1909
      %v1974 = vmax.f32 %v1775, %v1910
      %v1975 = vmax.f32 %v1777, %v1911
      %v1976 = vmax.f32 %v1780, %v1912
      %v1977 = vmax.f32 %v1782, %v1913
      %v1978 = vmax.f32 %v1785, %v1914
      %v1979 = vmax.f32 %v1787, %v1915
      %v1980 = vmax.f32 %v1790, %v1916
      %v1981 = vmax.f32 %v1792, %v1917
      %v1982 = vmax.f32 %v1795, %v1918
      %v1983 = vmax.f32 %v1797, %v1919
      %v1984 = vmax.f32 %v1800, %v1920
      %v1985 = vmax.f32 %v1802, %v1921
      %v1986 = vmax.f32 %v1805, %v1922
      %v1987 = vmax.f32 %v1807, %v1923
      %v1988 = vmax.f32 %v1810, %v1924
      %v1989 = vmax.f32 %v1812, %v1925
      %v1990 = vmax.f32 %v1815, %v1926
      %v1991 = vmax.f32 %v1817, %v1927
      %v1992 = vmax.f32 %v1820, %v1928
      %v1993 = vmax.f32 %v1822, %v1929
      %v1994 = vmax.f32 %v1825, %v1930
      %v1995 = vmax.f32 %v1827, %v1931
      %v1996 = vmax.f32 %v1830, %v1932
      %v1997 = vmax.f32 %v1832, %v1933
      %v1998 = vmax.f32 %v1835, %v1934
      %v1999 = vmax.f32 %v1837, %v1935
      %v2000 = vmax.f32 %v1840, %v1936
      %v2001 = vmax.f32 %v1842, %v1937
      %v2002 = vmax.f32 %v1845, %v1938
      %v2003 = vmax.f32 %v1847, %v1939
      %v2004 = vmax.f32 %v1850, %v1940
      %v2005 = vmax.f32 %v1852, %v1941
      %v2006 = vmax.f32 %v1855, %v1942
      %v2007 = vmax.f32 %v1857, %v1943
      %v2008 = vmax.f32 %v1860, %v1944
      %v2009 = vmax.f32 %v1862, %v1945
      %v2010 = vmax.f32 %v1865, %v1946
      %v2011 = vmax.f32 %v1867, %v1947
      %v2012 = vmax.f32 %v1870, %v1948
      %v2013 = vmax.f32 %v1872, %v1949
      %v2014 = vmax.f32 %v1875, %v1950
      %v2015 = vmax.f32 %v1877, %v1951
      %v2016 = vmax.f32 %v1880, %v1952
      %v2017 = vmax.f32 %v1882, %v1953
      %v2018 = vmax.f32 %v1885, %v1954
      %v2019 = vmax.f32 %v1887, %v1955
      %v2020 = vmax.f32 %v1890, %v1956
      %v2021 = vmax.f32 %v1892, %v1957
      %v2022 = vpack.c.bf16 %v1959, %v1958
      %v2023 = vpack.c.bf16 %v1961, %v1960
      %v2024 = vpack.c.bf16 %v1963, %v1962
      %v2025 = vpack.c.bf16 %v1965, %v1964
      %v2026 = vpack.c.bf16 %v1967, %v1966
      %v2027 = vpack.c.bf16 %v1969, %v1968
      %v2028 = vpack.c.bf16 %v1971, %v1970
      %v2029 = vpack.c.bf16 %v1973, %v1972
      %v2030 = vpack.c.bf16 %v1975, %v1974
      %v2031 = vpack.c.bf16 %v1977, %v1976
      %v2032 = vpack.c.bf16 %v1979, %v1978
      %v2033 = vpack.c.bf16 %v1981, %v1980
      %v2034 = vpack.c.bf16 %v1983, %v1982
      %v2035 = vpack.c.bf16 %v1985, %v1984
      %v2036 = vpack.c.bf16 %v1987, %v1986
      %v2037 = vpack.c.bf16 %v1989, %v1988
      %v2038 = vpack.c.bf16 %v1991, %v1990
      %v2039 = vpack.c.bf16 %v1993, %v1992
      %v2040 = vpack.c.bf16 %v1995, %v1994
      %v2041 = vpack.c.bf16 %v1997, %v1996
      %v2042 = vpack.c.bf16 %v1999, %v1998
      %v2043 = vpack.c.bf16 %v2001, %v2000
      %v2044 = vpack.c.bf16 %v2003, %v2002
      %v2045 = vpack.c.bf16 %v2005, %v2004
      %v2046 = vpack.c.bf16 %v2007, %v2006
      %v2047 = vpack.c.bf16 %v2009, %v2008
      %v2048 = vpack.c.bf16 %v2011, %v2010
      %v2049 = vpack.c.bf16 %v2013, %v2012
      %v2050 = vpack.c.bf16 %v2015, %v2014
      %v2051 = vpack.c.bf16 %v2017, %v2016
      %v2052 = vpack.c.bf16 %v2019, %v2018
      %v2053 = vpack.c.bf16 %v2021, %v2020
      %v2054 = vld [vmem:[%s7] sm:$0xf]
      %v2055 = vld [vmem:[%s7 + $0x4] sm:$0xf]
      %v2056 = vld [vmem:[%s7 + $0x8] sm:$0xf]
      %v2057 = vld [vmem:[%s7 + $0xc] sm:$0xf]
      %v2058 = vld [vmem:[%s7 + $0x10] sm:$0xf]
      %v2059 = vld [vmem:[%s7 + $0x14] sm:$0xf]
      %v2060 = vld [vmem:[%s7 + $0x18] sm:$0xf]
      %v2061 = vld [vmem:[%s7 + $0x1c] sm:$0xf]
      %v2062 = vld [vmem:[%s7 + $0x20] sm:$0xf]
      %v2063 = vld [vmem:[%s7 + $0x24] sm:$0xf]
      %v2064 = vld [vmem:[%s7 + $0x28] sm:$0xf]
      %v2065 = vld [vmem:[%s7 + $0x2c] sm:$0xf]
      %v2066 = vld [vmem:[%s7 + $0x30] sm:$0xf]
      %v2067 = vld [vmem:[%s7 + $0x34] sm:$0xf]
      %v2068 = vld [vmem:[%s7 + $0x38] sm:$0xf]
      %v2069 = vld [vmem:[%s7 + $0x3c] sm:$0xf]
      %v2070 = vld [vmem:[%s8] sm:$0x1]
      %v2072 = vperm.slane %v2070, 0
      %v2090 = vunpack.c.l.b16 %v2054
      %v2091 = vunpack.c.l.b16 %v2055
      %v2092 = vunpack.c.l.b16 %v2056
      %v2093 = vunpack.c.l.b16 %v2057
      %v2094 = vunpack.c.l.b16 %v2058
      %v2095 = vunpack.c.l.b16 %v2059
      %v2096 = vunpack.c.l.b16 %v2060
      %v2097 = vunpack.c.l.b16 %v2061
      %v2098 = vunpack.c.l.b16 %v2062
      %v2099 = vunpack.c.l.b16 %v2063
      %v2100 = vunpack.c.l.b16 %v2064
      %v2101 = vunpack.c.l.b16 %v2065
      %v2102 = vunpack.c.l.b16 %v2066
      %v2103 = vunpack.c.l.b16 %v2067
      %v2104 = vunpack.c.l.b16 %v2068
      %v2105 = vunpack.c.l.b16 %v2069
      %v2106 = vpack.c.b16 %v2091, %v2090
      %v2107 = vpack.c.b16 %v2093, %v2092
      %v2108 = vpack.c.b16 %v2095, %v2094
      %v2109 = vpack.c.b16 %v2097, %v2096
      %v2110 = vpack.c.b16 %v2099, %v2098
      %v2111 = vpack.c.b16 %v2101, %v2100
      %v2112 = vpack.c.b16 %v2103, %v2102
      %v2113 = vpack.c.b16 %v2105, %v2104
      %2122 = vmatpush.bf16.msra.mxu0 %v2113
      %2123 = vmatpush.bf16.msra.mxu0 %v2112
      %2124 = vmatpush.bf16.msra.mxu0 %v2111
      %2125 = vmatpush.bf16.msra.mxu0 %v2110
      %2126 = vmatpush.bf16.msra.mxu0 %v2109
      %2127 = vmatpush.bf16.msra.mxu0 %v2108
      %2128 = vmatpush.bf16.msra.mxu0 %v2107
      %2129 = vmatpush.bf16.msra.mxu0 %v2106
      %2130 = vmatmul.bf16.gmra.mxu0 %v2022
      %v2131 = vpop.f32.mrf.mxu0
      %v2132 = vadd.f32 %v2072, %v2131
      %v2133 = vpop.f32.mrf.mxu0
      %v2134 = vadd.f32 %v2072, %v2133
      %2135 = vmatmul.bf16.gmra.mxu0 %v2023
      %v2136 = vpop.f32.mrf.mxu0
      %v2137 = vadd.f32 %v2072, %v2136
      %v2138 = vpop.f32.mrf.mxu0
      %v2139 = vadd.f32 %v2072, %v2138
      %2140 = vmatmul.bf16.gmra.mxu0 %v2024
      %v2141 = vpop.f32.mrf.mxu0
      %v2142 = vadd.f32 %v2072, %v2141
      %v2143 = vpop.f32.mrf.mxu0
      %v2144 = vadd.f32 %v2072, %v2143
      %2145 = vmatmul.bf16.gmra.mxu0 %v2025
      %v2146 = vpop.f32.mrf.mxu0
      %v2147 = vadd.f32 %v2072, %v2146
      %v2148 = vpop.f32.mrf.mxu0
      %v2149 = vadd.f32 %v2072, %v2148
      %2150 = vmatmul.bf16.gmra.mxu0 %v2026
      %v2151 = vpop.f32.mrf.mxu0
      %v2152 = vadd.f32 %v2072, %v2151
      %v2153 = vpop.f32.mrf.mxu0
      %v2154 = vadd.f32 %v2072, %v2153
      %2155 = vmatmul.bf16.gmra.mxu0 %v2027
      %v2156 = vpop.f32.mrf.mxu0
      %v2157 = vadd.f32 %v2072, %v2156
      %v2158 = vpop.f32.mrf.mxu0
      %v2159 = vadd.f32 %v2072, %v2158
      %2160 = vmatmul.bf16.gmra.mxu0 %v2028
      %v2161 = vpop.f32.mrf.mxu0
      %v2162 = vadd.f32 %v2072, %v2161
      %v2163 = vpop.f32.mrf.mxu0
      %v2164 = vadd.f32 %v2072, %v2163
      %2165 = vmatmul.bf16.gmra.mxu0 %v2029
      %v2166 = vpop.f32.mrf.mxu0
      %v2167 = vadd.f32 %v2072, %v2166
      %v2168 = vpop.f32.mrf.mxu0
      %v2169 = vadd.f32 %v2072, %v2168
      %2170 = vmatmul.bf16.gmra.mxu0 %v2030
      %v2171 = vpop.f32.mrf.mxu0
      %v2172 = vadd.f32 %v2072, %v2171
      %v2173 = vpop.f32.mrf.mxu0
      %v2174 = vadd.f32 %v2072, %v2173
      %2175 = vmatmul.bf16.gmra.mxu0 %v2031
      %v2176 = vpop.f32.mrf.mxu0
      %v2177 = vadd.f32 %v2072, %v2176
      %v2178 = vpop.f32.mrf.mxu0
      %v2179 = vadd.f32 %v2072, %v2178
      %2180 = vmatmul.bf16.gmra.mxu0 %v2032
      %v2181 = vpop.f32.mrf.mxu0
      %v2182 = vadd.f32 %v2072, %v2181
      %v2183 = vpop.f32.mrf.mxu0
      %v2184 = vadd.f32 %v2072, %v2183
      %2185 = vmatmul.bf16.gmra.mxu0 %v2033
      %v2186 = vpop.f32.mrf.mxu0
      %v2187 = vadd.f32 %v2072, %v2186
      %v2188 = vpop.f32.mrf.mxu0
      %v2189 = vadd.f32 %v2072, %v2188
      %2190 = vmatmul.bf16.gmra.mxu0 %v2034
      %v2191 = vpop.f32.mrf.mxu0
      %v2192 = vadd.f32 %v2072, %v2191
      %v2193 = vpop.f32.mrf.mxu0
      %v2194 = vadd.f32 %v2072, %v2193
      %2195 = vmatmul.bf16.gmra.mxu0 %v2035
      %v2196 = vpop.f32.mrf.mxu0
      %v2197 = vadd.f32 %v2072, %v2196
      %v2198 = vpop.f32.mrf.mxu0
      %v2199 = vadd.f32 %v2072, %v2198
      %2200 = vmatmul.bf16.gmra.mxu0 %v2036
      %v2201 = vpop.f32.mrf.mxu0
      %v2202 = vadd.f32 %v2072, %v2201
      %v2203 = vpop.f32.mrf.mxu0
      %v2204 = vadd.f32 %v2072, %v2203
      %2205 = vmatmul.bf16.gmra.mxu0 %v2037
      %v2206 = vpop.f32.mrf.mxu0
      %v2207 = vadd.f32 %v2072, %v2206
      %v2208 = vpop.f32.mrf.mxu0
      %v2209 = vadd.f32 %v2072, %v2208
      %2210 = vmatmul.bf16.gmra.mxu0 %v2038
      %v2211 = vpop.f32.mrf.mxu0
      %v2212 = vadd.f32 %v2072, %v2211
      %v2213 = vpop.f32.mrf.mxu0
      %v2214 = vadd.f32 %v2072, %v2213
      %2215 = vmatmul.bf16.gmra.mxu0 %v2039
      %v2216 = vpop.f32.mrf.mxu0
      %v2217 = vadd.f32 %v2072, %v2216
      %v2218 = vpop.f32.mrf.mxu0
      %v2219 = vadd.f32 %v2072, %v2218
      %2220 = vmatmul.bf16.gmra.mxu0 %v2040
      %v2221 = vpop.f32.mrf.mxu0
      %v2222 = vadd.f32 %v2072, %v2221
      %v2223 = vpop.f32.mrf.mxu0
      %v2224 = vadd.f32 %v2072, %v2223
      %2225 = vmatmul.bf16.gmra.mxu0 %v2041
      %v2226 = vpop.f32.mrf.mxu0
      %v2227 = vadd.f32 %v2072, %v2226
      %v2228 = vpop.f32.mrf.mxu0
      %v2229 = vadd.f32 %v2072, %v2228
      %2230 = vmatmul.bf16.gmra.mxu0 %v2042
      %v2231 = vpop.f32.mrf.mxu0
      %v2232 = vadd.f32 %v2072, %v2231
      %v2233 = vpop.f32.mrf.mxu0
      %v2234 = vadd.f32 %v2072, %v2233
      %2235 = vmatmul.bf16.gmra.mxu0 %v2043
      %v2236 = vpop.f32.mrf.mxu0
      %v2237 = vadd.f32 %v2072, %v2236
      %v2238 = vpop.f32.mrf.mxu0
      %v2239 = vadd.f32 %v2072, %v2238
      %2240 = vmatmul.bf16.gmra.mxu0 %v2044
      %v2241 = vpop.f32.mrf.mxu0
      %v2242 = vadd.f32 %v2072, %v2241
      %v2243 = vpop.f32.mrf.mxu0
      %v2244 = vadd.f32 %v2072, %v2243
      %2245 = vmatmul.bf16.gmra.mxu0 %v2045
      %v2246 = vpop.f32.mrf.mxu0
      %v2247 = vadd.f32 %v2072, %v2246
      %v2248 = vpop.f32.mrf.mxu0
      %v2249 = vadd.f32 %v2072, %v2248
      %2250 = vmatmul.bf16.gmra.mxu0 %v2046
      %v2251 = vpop.f32.mrf.mxu0
      %v2252 = vadd.f32 %v2072, %v2251
      %v2253 = vpop.f32.mrf.mxu0
      %v2254 = vadd.f32 %v2072, %v2253
      %2255 = vmatmul.bf16.gmra.mxu0 %v2047
      %v2256 = vpop.f32.mrf.mxu0
      %v2257 = vadd.f32 %v2072, %v2256
      %v2258 = vpop.f32.mrf.mxu0
      %v2259 = vadd.f32 %v2072, %v2258
      %2260 = vmatmul.bf16.gmra.mxu0 %v2048
      %v2261 = vpop.f32.mrf.mxu0
      %v2262 = vadd.f32 %v2072, %v2261
      %v2263 = vpop.f32.mrf.mxu0
      %v2264 = vadd.f32 %v2072, %v2263
      %2265 = vmatmul.bf16.gmra.mxu0 %v2049
      %v2266 = vpop.f32.mrf.mxu0
      %v2267 = vadd.f32 %v2072, %v2266
      %v2268 = vpop.f32.mrf.mxu0
      %v2269 = vadd.f32 %v2072, %v2268
      %2270 = vmatmul.bf16.gmra.mxu0 %v2050
      %v2271 = vpop.f32.mrf.mxu0
      %v2272 = vadd.f32 %v2072, %v2271
      %v2273 = vpop.f32.mrf.mxu0
      %v2274 = vadd.f32 %v2072, %v2273
      %2275 = vmatmul.bf16.gmra.mxu0 %v2051
      %v2276 = vpop.f32.mrf.mxu0
      %v2277 = vadd.f32 %v2072, %v2276
      %v2278 = vpop.f32.mrf.mxu0
      %v2279 = vadd.f32 %v2072, %v2278
      %2280 = vmatmul.bf16.gmra.mxu0 %v2052
      %v2281 = vpop.f32.mrf.mxu0
      %v2282 = vadd.f32 %v2072, %v2281
      %v2283 = vpop.f32.mrf.mxu0
      %v2284 = vadd.f32 %v2072, %v2283
      %2285 = vmatmul.bf16.gmra.mxu0 %v2053
      %v2286 = vpop.f32.mrf.mxu0
      %v2287 = vadd.f32 %v2072, %v2286
      %v2288 = vpop.f32.mrf.mxu0
      %v2289 = vadd.f32 %v2072, %v2288
      %2290 = vdwg.mxu0
      %v2291 = vmul.f32 %v2132, 0.1
      %v2292 = vmul.f32 %v2134, 0.1
      %v2293 = vmul.f32 %v2137, 0.1
      %v2294 = vmul.f32 %v2139, 0.1
      %v2295 = vmul.f32 %v2142, 0.1
      %v2296 = vmul.f32 %v2144, 0.1
      %v2297 = vmul.f32 %v2147, 0.1
      %v2298 = vmul.f32 %v2149, 0.1
      %v2299 = vmul.f32 %v2152, 0.1
      %v2300 = vmul.f32 %v2154, 0.1
      %v2301 = vmul.f32 %v2157, 0.1
      %v2302 = vmul.f32 %v2159, 0.1
      %v2303 = vmul.f32 %v2162, 0.1
      %v2304 = vmul.f32 %v2164, 0.1
      %v2305 = vmul.f32 %v2167, 0.1
      %v2306 = vmul.f32 %v2169, 0.1
      %v2307 = vmul.f32 %v2172, 0.1
      %v2308 = vmul.f32 %v2174, 0.1
      %v2309 = vmul.f32 %v2177, 0.1
      %v2310 = vmul.f32 %v2179, 0.1
      %v2311 = vmul.f32 %v2182, 0.1
      %v2312 = vmul.f32 %v2184, 0.1
      %v2313 = vmul.f32 %v2187, 0.1
      %v2314 = vmul.f32 %v2189, 0.1
      %v2315 = vmul.f32 %v2192, 0.1
      %v2316 = vmul.f32 %v2194, 0.1
      %v2317 = vmul.f32 %v2197, 0.1
      %v2318 = vmul.f32 %v2199, 0.1
      %v2319 = vmul.f32 %v2202, 0.1
      %v2320 = vmul.f32 %v2204, 0.1
      %v2321 = vmul.f32 %v2207, 0.1
      %v2322 = vmul.f32 %v2209, 0.1
      %v2323 = vmul.f32 %v2212, 0.1
      %v2324 = vmul.f32 %v2214, 0.1
      %v2325 = vmul.f32 %v2217, 0.1
      %v2326 = vmul.f32 %v2219, 0.1
      %v2327 = vmul.f32 %v2222, 0.1
      %v2328 = vmul.f32 %v2224, 0.1
      %v2329 = vmul.f32 %v2227, 0.1
      %v2330 = vmul.f32 %v2229, 0.1
      %v2331 = vmul.f32 %v2232, 0.1
      %v2332 = vmul.f32 %v2234, 0.1
      %v2333 = vmul.f32 %v2237, 0.1
      %v2334 = vmul.f32 %v2239, 0.1
      %v2335 = vmul.f32 %v2242, 0.1
      %v2336 = vmul.f32 %v2244, 0.1
      %v2337 = vmul.f32 %v2247, 0.1
      %v2338 = vmul.f32 %v2249, 0.1
      %v2339 = vmul.f32 %v2252, 0.1
      %v2340 = vmul.f32 %v2254, 0.1
      %v2341 = vmul.f32 %v2257, 0.1
      %v2342 = vmul.f32 %v2259, 0.1
      %v2343 = vmul.f32 %v2262, 0.1
      %v2344 = vmul.f32 %v2264, 0.1
      %v2345 = vmul.f32 %v2267, 0.1
      %v2346 = vmul.f32 %v2269, 0.1
      %v2347 = vmul.f32 %v2272, 0.1
      %v2348 = vmul.f32 %v2274, 0.1
      %v2349 = vmul.f32 %v2277, 0.1
      %v2350 = vmul.f32 %v2279, 0.1
      %v2351 = vmul.f32 %v2282, 0.1
      %v2352 = vmul.f32 %v2284, 0.1
      %v2353 = vmul.f32 %v2287, 0.1
      %v2354 = vmul.f32 %v2289, 0.1
      %v2355 = vmax.f32 %v2132, %v2291
      %v2356 = vmax.f32 %v2134, %v2292
      %v2357 = vmax.f32 %v2137, %v2293
      %v2358 = vmax.f32 %v2139, %v2294
      %v2359 = vmax.f32 %v2142, %v2295
      %v2360 = vmax.f32 %v2144, %v2296
      %v2361 = vmax.f32 %v2147, %v2297
      %v2362 = vmax.f32 %v2149, %v2298
      %v2363 = vmax.f32 %v2152, %v2299
      %v2364 = vmax.f32 %v2154, %v2300
      %v2365 = vmax.f32 %v2157, %v2301
      %v2366 = vmax.f32 %v2159, %v2302
      %v2367 = vmax.f32 %v2162, %v2303
      %v2368 = vmax.f32 %v2164, %v2304
      %v2369 = vmax.f32 %v2167, %v2305
      %v2370 = vmax.f32 %v2169, %v2306
      %v2371 = vmax.f32 %v2172, %v2307
      %v2372 = vmax.f32 %v2174, %v2308
      %v2373 = vmax.f32 %v2177, %v2309
      %v2374 = vmax.f32 %v2179, %v2310
      %v2375 = vmax.f32 %v2182, %v2311
      %v2376 = vmax.f32 %v2184, %v2312
      %v2377 = vmax.f32 %v2187, %v2313
      %v2378 = vmax.f32 %v2189, %v2314
      %v2379 = vmax.f32 %v2192, %v2315
      %v2380 = vmax.f32 %v2194, %v2316
      %v2381 = vmax.f32 %v2197, %v2317
      %v2382 = vmax.f32 %v2199, %v2318
      %v2383 = vmax.f32 %v2202, %v2319
      %v2384 = vmax.f32 %v2204, %v2320
      %v2385 = vmax.f32 %v2207, %v2321
      %v2386 = vmax.f32 %v2209, %v2322
      %v2387 = vmax.f32 %v2212, %v2323
      %v2388 = vmax.f32 %v2214, %v2324
      %v2389 = vmax.f32 %v2217, %v2325
      %v2390 = vmax.f32 %v2219, %v2326
      %v2391 = vmax.f32 %v2222, %v2327
      %v2392 = vmax.f32 %v2224, %v2328
      %v2393 = vmax.f32 %v2227, %v2329
      %v2394 = vmax.f32 %v2229, %v2330
      %v2395 = vmax.f32 %v2232, %v2331
      %v2396 = vmax.f32 %v2234, %v2332
      %v2397 = vmax.f32 %v2237, %v2333
      %v2398 = vmax.f32 %v2239, %v2334
      %v2399 = vmax.f32 %v2242, %v2335
      %v2400 = vmax.f32 %v2244, %v2336
      %v2401 = vmax.f32 %v2247, %v2337
      %v2402 = vmax.f32 %v2249, %v2338
      %v2403 = vmax.f32 %v2252, %v2339
      %v2404 = vmax.f32 %v2254, %v2340
      %v2405 = vmax.f32 %v2257, %v2341
      %v2406 = vmax.f32 %v2259, %v2342
      %v2407 = vmax.f32 %v2262, %v2343
      %v2408 = vmax.f32 %v2264, %v2344
      %v2409 = vmax.f32 %v2267, %v2345
      %v2410 = vmax.f32 %v2269, %v2346
      %v2411 = vmax.f32 %v2272, %v2347
      %v2412 = vmax.f32 %v2274, %v2348
      %v2413 = vmax.f32 %v2277, %v2349
      %v2414 = vmax.f32 %v2279, %v2350
      %v2415 = vmax.f32 %v2282, %v2351
      %v2416 = vmax.f32 %v2284, %v2352
      %v2417 = vmax.f32 %v2287, %v2353
      %v2418 = vmax.f32 %v2289, %v2354
      %v2419 = vpack.c.bf16 %v2356, %v2355
      %v2420 = vpack.c.bf16 %v2358, %v2357
      %v2421 = vpack.c.bf16 %v2360, %v2359
      %v2422 = vpack.c.bf16 %v2362, %v2361
      %v2423 = vpack.c.bf16 %v2364, %v2363
      %v2424 = vpack.c.bf16 %v2366, %v2365
      %v2425 = vpack.c.bf16 %v2368, %v2367
      %v2426 = vpack.c.bf16 %v2370, %v2369
      %v2427 = vpack.c.bf16 %v2372, %v2371
      %v2428 = vpack.c.bf16 %v2374, %v2373
      %v2429 = vpack.c.bf16 %v2376, %v2375
      %v2430 = vpack.c.bf16 %v2378, %v2377
      %v2431 = vpack.c.bf16 %v2380, %v2379
      %v2432 = vpack.c.bf16 %v2382, %v2381
      %v2433 = vpack.c.bf16 %v2384, %v2383
      %v2434 = vpack.c.bf16 %v2386, %v2385
      %v2435 = vpack.c.bf16 %v2388, %v2387
      %v2436 = vpack.c.bf16 %v2390, %v2389
      %v2437 = vpack.c.bf16 %v2392, %v2391
      %v2438 = vpack.c.bf16 %v2394, %v2393
      %v2439 = vpack.c.bf16 %v2396, %v2395
      %v2440 = vpack.c.bf16 %v2398, %v2397
      %v2441 = vpack.c.bf16 %v2400, %v2399
      %v2442 = vpack.c.bf16 %v2402, %v2401
      %v2443 = vpack.c.bf16 %v2404, %v2403
      %v2444 = vpack.c.bf16 %v2406, %v2405
      %v2445 = vpack.c.bf16 %v2408, %v2407
      %v2446 = vpack.c.bf16 %v2410, %v2409
      %v2447 = vpack.c.bf16 %v2412, %v2411
      %v2448 = vpack.c.bf16 %v2414, %v2413
      %v2449 = vpack.c.bf16 %v2416, %v2415
      %v2450 = vpack.c.bf16 %v2418, %v2417
      %v2451 = vld [vmem:[%s9] sm:$0xf]
      %v2452 = vld [vmem:[%s9 + $0x4] sm:$0xf]
      %v2453 = vld [vmem:[%s9 + $0x8] sm:$0xf]
      %v2454 = vld [vmem:[%s9 + $0xc] sm:$0xf]
      %v2455 = vld [vmem:[%s10] sm:$0x1]
      %v2457 = vperm.slane %v2455, 0
      %v2463 = vunpack.c.l.b16 %v2451
      %v2464 = vunpack.c.l.b16 %v2452
      %v2465 = vunpack.c.l.b16 %v2453
      %v2466 = vunpack.c.l.b16 %v2454
      %v2467 = vpack.c.b16 %v2464, %v2463
      %v2468 = vpack.c.b16 %v2466, %v2465
      %v2472 = vsel %vm1183, %v2419, 0
      %v2475 = vsel %vm1183, %v2420, 0
      %v2478 = vsel %vm1183, %v2421, 0
      %v2481 = vsel %vm1183, %v2422, 0
      %v2484 = vsel %vm1183, %v2423, 0
      %v2487 = vsel %vm1183, %v2424, 0
      %v2490 = vsel %vm1183, %v2425, 0
      %v2493 = vsel %vm1183, %v2426, 0
      %v2496 = vsel %vm1183, %v2427, 0
      %v2499 = vsel %vm1183, %v2428, 0
      %v2502 = vsel %vm1183, %v2429, 0
      %v2505 = vsel %vm1183, %v2430, 0
      %v2508 = vsel %vm1183, %v2431, 0
      %v2511 = vsel %vm1183, %v2432, 0
      %v2514 = vsel %vm1183, %v2433, 0
      %v2517 = vsel %vm1183, %v2434, 0
      %v2520 = vsel %vm1183, %v2435, 0
      %v2523 = vsel %vm1183, %v2436, 0
      %v2526 = vsel %vm1183, %v2437, 0
      %v2529 = vsel %vm1183, %v2438, 0
      %v2532 = vsel %vm1183, %v2439, 0
      %v2535 = vsel %vm1183, %v2440, 0
      %v2538 = vsel %vm1183, %v2441, 0
      %v2541 = vsel %vm1183, %v2442, 0
      %v2544 = vsel %vm1183, %v2443, 0
      %v2547 = vsel %vm1183, %v2444, 0
      %v2550 = vsel %vm1183, %v2445, 0
      %v2553 = vsel %vm1183, %v2446, 0
      %v2556 = vsel %vm1183, %v2447, 0
      %v2559 = vsel %vm1183, %v2448, 0
      %v2562 = vsel %vm1183, %v2449, 0
      %v2565 = vsel %vm1183, %v2450, 0
      %2567 = vmatpush.bf16.msra.mxu0 0
      %2568 = vmatpush.bf16.msra.mxu0 0
      %2569 = vmatpush.bf16.msra.mxu0 0
      %2570 = vmatpush.bf16.msra.mxu0 0
      %2571 = vmatpush.bf16.msra.mxu0 0
      %2572 = vmatpush.bf16.msra.mxu0 0
      %2573 = vmatpush.bf16.msra.mxu0 %v2468
      %2574 = vmatpush.bf16.msra.mxu0 %v2467
      %2575 = vmatmul.bf16.gmra.mxu0 %v2472
      %v2576 = vpop.f32.mrf.mxu0
      %v2577 = vadd.f32 %v2457, %v2576
      %v2578 = vpop.f32.mrf.mxu0
      %v2579 = vadd.f32 %v2457, %v2578
      %2580 = vmatmul.bf16.gmra.mxu0 %v2475
      %v2581 = vpop.f32.mrf.mxu0
      %v2582 = vadd.f32 %v2457, %v2581
      %v2583 = vpop.f32.mrf.mxu0
      %v2584 = vadd.f32 %v2457, %v2583
      %2585 = vmatmul.bf16.gmra.mxu0 %v2478
      %v2586 = vpop.f32.mrf.mxu0
      %v2587 = vadd.f32 %v2457, %v2586
      %v2588 = vpop.f32.mrf.mxu0
      %v2589 = vadd.f32 %v2457, %v2588
      %2590 = vmatmul.bf16.gmra.mxu0 %v2481
      %v2591 = vpop.f32.mrf.mxu0
      %v2592 = vadd.f32 %v2457, %v2591
      %v2593 = vpop.f32.mrf.mxu0
      %v2594 = vadd.f32 %v2457, %v2593
      %2595 = vmatmul.bf16.gmra.mxu0 %v2484
      %v2596 = vpop.f32.mrf.mxu0
      %v2597 = vadd.f32 %v2457, %v2596
      %v2598 = vpop.f32.mrf.mxu0
      %v2599 = vadd.f32 %v2457, %v2598
      %2600 = vmatmul.bf16.gmra.mxu0 %v2487
      %v2601 = vpop.f32.mrf.mxu0
      %v2602 = vadd.f32 %v2457, %v2601
      %v2603 = vpop.f32.mrf.mxu0
      %v2604 = vadd.f32 %v2457, %v2603
      %2605 = vmatmul.bf16.gmra.mxu0 %v2490
      %v2606 = vpop.f32.mrf.mxu0
      %v2607 = vadd.f32 %v2457, %v2606
      %v2608 = vpop.f32.mrf.mxu0
      %v2609 = vadd.f32 %v2457, %v2608
      %2610 = vmatmul.bf16.gmra.mxu0 %v2493
      %v2611 = vpop.f32.mrf.mxu0
      %v2612 = vadd.f32 %v2457, %v2611
      %v2613 = vpop.f32.mrf.mxu0
      %v2614 = vadd.f32 %v2457, %v2613
      %2615 = vmatmul.bf16.gmra.mxu0 %v2496
      %v2616 = vpop.f32.mrf.mxu0
      %v2617 = vadd.f32 %v2457, %v2616
      %v2618 = vpop.f32.mrf.mxu0
      %v2619 = vadd.f32 %v2457, %v2618
      %2620 = vmatmul.bf16.gmra.mxu0 %v2499
      %v2621 = vpop.f32.mrf.mxu0
      %v2622 = vadd.f32 %v2457, %v2621
      %v2623 = vpop.f32.mrf.mxu0
      %v2624 = vadd.f32 %v2457, %v2623
      %2625 = vmatmul.bf16.gmra.mxu0 %v2502
      %v2626 = vpop.f32.mrf.mxu0
      %v2627 = vadd.f32 %v2457, %v2626
      %v2628 = vpop.f32.mrf.mxu0
      %v2629 = vadd.f32 %v2457, %v2628
      %2630 = vmatmul.bf16.gmra.mxu0 %v2505
      %v2631 = vpop.f32.mrf.mxu0
      %v2632 = vadd.f32 %v2457, %v2631
      %v2633 = vpop.f32.mrf.mxu0
      %v2634 = vadd.f32 %v2457, %v2633
      %2635 = vmatmul.bf16.gmra.mxu0 %v2508
      %v2636 = vpop.f32.mrf.mxu0
      %v2637 = vadd.f32 %v2457, %v2636
      %v2638 = vpop.f32.mrf.mxu0
      %v2639 = vadd.f32 %v2457, %v2638
      %2640 = vmatmul.bf16.gmra.mxu0 %v2511
      %v2641 = vpop.f32.mrf.mxu0
      %v2642 = vadd.f32 %v2457, %v2641
      %v2643 = vpop.f32.mrf.mxu0
      %v2644 = vadd.f32 %v2457, %v2643
      %2645 = vmatmul.bf16.gmra.mxu0 %v2514
      %v2646 = vpop.f32.mrf.mxu0
      %v2647 = vadd.f32 %v2457, %v2646
      %v2648 = vpop.f32.mrf.mxu0
      %v2649 = vadd.f32 %v2457, %v2648
      %2650 = vmatmul.bf16.gmra.mxu0 %v2517
      %v2651 = vpop.f32.mrf.mxu0
      %v2652 = vadd.f32 %v2457, %v2651
      %v2653 = vpop.f32.mrf.mxu0
      %v2654 = vadd.f32 %v2457, %v2653
      %2655 = vmatmul.bf16.gmra.mxu0 %v2520
      %v2656 = vpop.f32.mrf.mxu0
      %v2657 = vadd.f32 %v2457, %v2656
      %v2658 = vpop.f32.mrf.mxu0
      %v2659 = vadd.f32 %v2457, %v2658
      %2660 = vmatmul.bf16.gmra.mxu0 %v2523
      %v2661 = vpop.f32.mrf.mxu0
      %v2662 = vadd.f32 %v2457, %v2661
      %v2663 = vpop.f32.mrf.mxu0
      %v2664 = vadd.f32 %v2457, %v2663
      %2665 = vmatmul.bf16.gmra.mxu0 %v2526
      %v2666 = vpop.f32.mrf.mxu0
      %v2667 = vadd.f32 %v2457, %v2666
      %v2668 = vpop.f32.mrf.mxu0
      %v2669 = vadd.f32 %v2457, %v2668
      %2670 = vmatmul.bf16.gmra.mxu0 %v2529
      %v2671 = vpop.f32.mrf.mxu0
      %v2672 = vadd.f32 %v2457, %v2671
      %v2673 = vpop.f32.mrf.mxu0
      %v2674 = vadd.f32 %v2457, %v2673
      %2675 = vmatmul.bf16.gmra.mxu0 %v2532
      %v2676 = vpop.f32.mrf.mxu0
      %v2677 = vadd.f32 %v2457, %v2676
      %v2678 = vpop.f32.mrf.mxu0
      %v2679 = vadd.f32 %v2457, %v2678
      %2680 = vmatmul.bf16.gmra.mxu0 %v2535
      %v2681 = vpop.f32.mrf.mxu0
      %v2682 = vadd.f32 %v2457, %v2681
      %v2683 = vpop.f32.mrf.mxu0
      %v2684 = vadd.f32 %v2457, %v2683
      %2685 = vmatmul.bf16.gmra.mxu0 %v2538
      %v2686 = vpop.f32.mrf.mxu0
      %v2687 = vadd.f32 %v2457, %v2686
      %v2688 = vpop.f32.mrf.mxu0
      %v2689 = vadd.f32 %v2457, %v2688
      %2690 = vmatmul.bf16.gmra.mxu0 %v2541
      %v2691 = vpop.f32.mrf.mxu0
      %v2692 = vadd.f32 %v2457, %v2691
      %v2693 = vpop.f32.mrf.mxu0
      %v2694 = vadd.f32 %v2457, %v2693
      %2695 = vmatmul.bf16.gmra.mxu0 %v2544
      %v2696 = vpop.f32.mrf.mxu0
      %v2697 = vadd.f32 %v2457, %v2696
      %v2698 = vpop.f32.mrf.mxu0
      %v2699 = vadd.f32 %v2457, %v2698
      %2700 = vmatmul.bf16.gmra.mxu0 %v2547
      %v2701 = vpop.f32.mrf.mxu0
      %v2702 = vadd.f32 %v2457, %v2701
      %v2703 = vpop.f32.mrf.mxu0
      %v2704 = vadd.f32 %v2457, %v2703
      %2705 = vmatmul.bf16.gmra.mxu0 %v2550
      %v2706 = vpop.f32.mrf.mxu0
      %v2707 = vadd.f32 %v2457, %v2706
      %v2708 = vpop.f32.mrf.mxu0
      %v2709 = vadd.f32 %v2457, %v2708
      %2710 = vmatmul.bf16.gmra.mxu0 %v2553
      %v2711 = vpop.f32.mrf.mxu0
      %v2712 = vadd.f32 %v2457, %v2711
      %v2713 = vpop.f32.mrf.mxu0
      %v2714 = vadd.f32 %v2457, %v2713
      %2715 = vmatmul.bf16.gmra.mxu0 %v2556
      %v2716 = vpop.f32.mrf.mxu0
      %v2717 = vadd.f32 %v2457, %v2716
      %v2718 = vpop.f32.mrf.mxu0
      %v2719 = vadd.f32 %v2457, %v2718
      %2720 = vmatmul.bf16.gmra.mxu0 %v2559
      %v2721 = vpop.f32.mrf.mxu0
      %v2722 = vadd.f32 %v2457, %v2721
      %v2723 = vpop.f32.mrf.mxu0
      %v2724 = vadd.f32 %v2457, %v2723
      %2725 = vmatmul.bf16.gmra.mxu0 %v2562
      %v2726 = vpop.f32.mrf.mxu0
      %v2727 = vadd.f32 %v2457, %v2726
      %v2728 = vpop.f32.mrf.mxu0
      %v2729 = vadd.f32 %v2457, %v2728
      %2730 = vmatmul.bf16.gmra.mxu0 %v2565
      %v2731 = vpop.f32.mrf.mxu0
      %v2732 = vadd.f32 %v2457, %v2731
      %v2733 = vpop.f32.mrf.mxu0
      %v2734 = vadd.f32 %v2457, %v2733
      %2735 = vdwg.mxu0
      %v2736 = vmul.f32 %v2577, 0.1
      %v2737 = vmul.f32 %v2579, 0.1
      %v2738 = vmul.f32 %v2582, 0.1
      %v2739 = vmul.f32 %v2584, 0.1
      %v2740 = vmul.f32 %v2587, 0.1
      %v2741 = vmul.f32 %v2589, 0.1
      %v2742 = vmul.f32 %v2592, 0.1
      %v2743 = vmul.f32 %v2594, 0.1
      %v2744 = vmul.f32 %v2597, 0.1
      %v2745 = vmul.f32 %v2599, 0.1
      %v2746 = vmul.f32 %v2602, 0.1
      %v2747 = vmul.f32 %v2604, 0.1
      %v2748 = vmul.f32 %v2607, 0.1
      %v2749 = vmul.f32 %v2609, 0.1
      %v2750 = vmul.f32 %v2612, 0.1
      %v2751 = vmul.f32 %v2614, 0.1
      %v2752 = vmul.f32 %v2617, 0.1
      %v2753 = vmul.f32 %v2619, 0.1
      %v2754 = vmul.f32 %v2622, 0.1
      %v2755 = vmul.f32 %v2624, 0.1
      %v2756 = vmul.f32 %v2627, 0.1
      %v2757 = vmul.f32 %v2629, 0.1
      %v2758 = vmul.f32 %v2632, 0.1
      %v2759 = vmul.f32 %v2634, 0.1
      %v2760 = vmul.f32 %v2637, 0.1
      %v2761 = vmul.f32 %v2639, 0.1
      %v2762 = vmul.f32 %v2642, 0.1
      %v2763 = vmul.f32 %v2644, 0.1
      %v2764 = vmul.f32 %v2647, 0.1
      %v2765 = vmul.f32 %v2649, 0.1
      %v2766 = vmul.f32 %v2652, 0.1
      %v2767 = vmul.f32 %v2654, 0.1
      %v2768 = vmul.f32 %v2657, 0.1
      %v2769 = vmul.f32 %v2659, 0.1
      %v2770 = vmul.f32 %v2662, 0.1
      %v2771 = vmul.f32 %v2664, 0.1
      %v2772 = vmul.f32 %v2667, 0.1
      %v2773 = vmul.f32 %v2669, 0.1
      %v2774 = vmul.f32 %v2672, 0.1
      %v2775 = vmul.f32 %v2674, 0.1
      %v2776 = vmul.f32 %v2677, 0.1
      %v2777 = vmul.f32 %v2679, 0.1
      %v2778 = vmul.f32 %v2682, 0.1
      %v2779 = vmul.f32 %v2684, 0.1
      %v2780 = vmul.f32 %v2687, 0.1
      %v2781 = vmul.f32 %v2689, 0.1
      %v2782 = vmul.f32 %v2692, 0.1
      %v2783 = vmul.f32 %v2694, 0.1
      %v2784 = vmul.f32 %v2697, 0.1
      %v2785 = vmul.f32 %v2699, 0.1
      %v2786 = vmul.f32 %v2702, 0.1
      %v2787 = vmul.f32 %v2704, 0.1
      %v2788 = vmul.f32 %v2707, 0.1
      %v2789 = vmul.f32 %v2709, 0.1
      %v2790 = vmul.f32 %v2712, 0.1
      %v2791 = vmul.f32 %v2714, 0.1
      %v2792 = vmul.f32 %v2717, 0.1
      %v2793 = vmul.f32 %v2719, 0.1
      %v2794 = vmul.f32 %v2722, 0.1
      %v2795 = vmul.f32 %v2724, 0.1
      %v2796 = vmul.f32 %v2727, 0.1
      %v2797 = vmul.f32 %v2729, 0.1
      %v2798 = vmul.f32 %v2732, 0.1
      %v2799 = vmul.f32 %v2734, 0.1
      %v2800 = vmax.f32 %v2577, %v2736
      %v2801 = vmax.f32 %v2579, %v2737
      %v2802 = vmax.f32 %v2582, %v2738
      %v2803 = vmax.f32 %v2584, %v2739
      %v2804 = vmax.f32 %v2587, %v2740
      %v2805 = vmax.f32 %v2589, %v2741
      %v2806 = vmax.f32 %v2592, %v2742
      %v2807 = vmax.f32 %v2594, %v2743
      %v2808 = vmax.f32 %v2597, %v2744
      %v2809 = vmax.f32 %v2599, %v2745
      %v2810 = vmax.f32 %v2602, %v2746
      %v2811 = vmax.f32 %v2604, %v2747
      %v2812 = vmax.f32 %v2607, %v2748
      %v2813 = vmax.f32 %v2609, %v2749
      %v2814 = vmax.f32 %v2612, %v2750
      %v2815 = vmax.f32 %v2614, %v2751
      %v2816 = vmax.f32 %v2617, %v2752
      %v2817 = vmax.f32 %v2619, %v2753
      %v2818 = vmax.f32 %v2622, %v2754
      %v2819 = vmax.f32 %v2624, %v2755
      %v2820 = vmax.f32 %v2627, %v2756
      %v2821 = vmax.f32 %v2629, %v2757
      %v2822 = vmax.f32 %v2632, %v2758
      %v2823 = vmax.f32 %v2634, %v2759
      %v2824 = vmax.f32 %v2637, %v2760
      %v2825 = vmax.f32 %v2639, %v2761
      %v2826 = vmax.f32 %v2642, %v2762
      %v2827 = vmax.f32 %v2644, %v2763
      %v2828 = vmax.f32 %v2647, %v2764
      %v2829 = vmax.f32 %v2649, %v2765
      %v2830 = vmax.f32 %v2652, %v2766
      %v2831 = vmax.f32 %v2654, %v2767
      %v2832 = vmax.f32 %v2657, %v2768
      %v2833 = vmax.f32 %v2659, %v2769
      %v2834 = vmax.f32 %v2662, %v2770
      %v2835 = vmax.f32 %v2664, %v2771
      %v2836 = vmax.f32 %v2667, %v2772
      %v2837 = vmax.f32 %v2669, %v2773
      %v2838 = vmax.f32 %v2672, %v2774
      %v2839 = vmax.f32 %v2674, %v2775
      %v2840 = vmax.f32 %v2677, %v2776
      %v2841 = vmax.f32 %v2679, %v2777
      %v2842 = vmax.f32 %v2682, %v2778
      %v2843 = vmax.f32 %v2684, %v2779
      %v2844 = vmax.f32 %v2687, %v2780
      %v2845 = vmax.f32 %v2689, %v2781
      %v2846 = vmax.f32 %v2692, %v2782
      %v2847 = vmax.f32 %v2694, %v2783
      %v2848 = vmax.f32 %v2697, %v2784
      %v2849 = vmax.f32 %v2699, %v2785
      %v2850 = vmax.f32 %v2702, %v2786
      %v2851 = vmax.f32 %v2704, %v2787
      %v2852 = vmax.f32 %v2707, %v2788
      %v2853 = vmax.f32 %v2709, %v2789
      %v2854 = vmax.f32 %v2712, %v2790
      %v2855 = vmax.f32 %v2714, %v2791
      %v2856 = vmax.f32 %v2717, %v2792
      %v2857 = vmax.f32 %v2719, %v2793
      %v2858 = vmax.f32 %v2722, %v2794
      %v2859 = vmax.f32 %v2724, %v2795
      %v2860 = vmax.f32 %v2727, %v2796
      %v2861 = vmax.f32 %v2729, %v2797
      %v2862 = vmax.f32 %v2732, %v2798
      %v2863 = vmax.f32 %v2734, %v2799
      %v2864 = vpack.c.bf16 %v2801, %v2800
      %v2865 = vpack.c.bf16 %v2803, %v2802
      %v2866 = vpack.c.bf16 %v2805, %v2804
      %v2867 = vpack.c.bf16 %v2807, %v2806
      %v2868 = vpack.c.bf16 %v2809, %v2808
      %v2869 = vpack.c.bf16 %v2811, %v2810
      %v2870 = vpack.c.bf16 %v2813, %v2812
      %v2871 = vpack.c.bf16 %v2815, %v2814
      %v2872 = vpack.c.bf16 %v2817, %v2816
      %v2873 = vpack.c.bf16 %v2819, %v2818
      %v2874 = vpack.c.bf16 %v2821, %v2820
      %v2875 = vpack.c.bf16 %v2823, %v2822
      %v2876 = vpack.c.bf16 %v2825, %v2824
      %v2877 = vpack.c.bf16 %v2827, %v2826
      %v2878 = vpack.c.bf16 %v2829, %v2828
      %v2879 = vpack.c.bf16 %v2831, %v2830
      %v2880 = vpack.c.bf16 %v2833, %v2832
      %v2881 = vpack.c.bf16 %v2835, %v2834
      %v2882 = vpack.c.bf16 %v2837, %v2836
      %v2883 = vpack.c.bf16 %v2839, %v2838
      %v2884 = vpack.c.bf16 %v2841, %v2840
      %v2885 = vpack.c.bf16 %v2843, %v2842
      %v2886 = vpack.c.bf16 %v2845, %v2844
      %v2887 = vpack.c.bf16 %v2847, %v2846
      %v2888 = vpack.c.bf16 %v2849, %v2848
      %v2889 = vpack.c.bf16 %v2851, %v2850
      %v2890 = vpack.c.bf16 %v2853, %v2852
      %v2891 = vpack.c.bf16 %v2855, %v2854
      %v2892 = vpack.c.bf16 %v2857, %v2856
      %v2893 = vpack.c.bf16 %v2859, %v2858
      %v2894 = vpack.c.bf16 %v2861, %v2860
      %v2895 = vpack.c.bf16 %v2863, %v2862
      %v2896 = vld [vmem:[%s11] sm:$0xf]
      %v2897 = vld [vmem:[%s12] sm:$0x1]
      %v2899 = vperm.slane %v2897, 0
      %vm2901 = vcmask 64512
      %v2903 = vsel %vm2901, %v2864, 0
      %v2906 = vsel %vm2901, %v2865, 0
      %v2909 = vsel %vm2901, %v2866, 0
      %v2912 = vsel %vm2901, %v2867, 0
      %v2915 = vsel %vm2901, %v2868, 0
      %v2918 = vsel %vm2901, %v2869, 0
      %v2921 = vsel %vm2901, %v2870, 0
      %v2924 = vsel %vm2901, %v2871, 0
      %v2927 = vsel %vm2901, %v2872, 0
      %v2930 = vsel %vm2901, %v2873, 0
      %v2933 = vsel %vm2901, %v2874, 0
      %v2936 = vsel %vm2901, %v2875, 0
      %v2939 = vsel %vm2901, %v2876, 0
      %v2942 = vsel %vm2901, %v2877, 0
      %v2945 = vsel %vm2901, %v2878, 0
      %v2948 = vsel %vm2901, %v2879, 0
      %v2951 = vsel %vm2901, %v2880, 0
      %v2954 = vsel %vm2901, %v2881, 0
      %v2957 = vsel %vm2901, %v2882, 0
      %v2960 = vsel %vm2901, %v2883, 0
      %v2963 = vsel %vm2901, %v2884, 0
      %v2966 = vsel %vm2901, %v2885, 0
      %v2969 = vsel %vm2901, %v2886, 0
      %v2972 = vsel %vm2901, %v2887, 0
      %v2975 = vsel %vm2901, %v2888, 0
      %v2978 = vsel %vm2901, %v2889, 0
      %v2981 = vsel %vm2901, %v2890, 0
      %v2984 = vsel %vm2901, %v2891, 0
      %v2987 = vsel %vm2901, %v2892, 0
      %v2990 = vsel %vm2901, %v2893, 0
      %v2993 = vsel %vm2901, %v2894, 0
      %v2996 = vsel %vm2901, %v2895, 0
      %vm2998 = vcmask 1043456
      %v3000 = vsel %vm2998, %v2896, 0
      %3002 = vmatpush.bf16.msra.mxu0 0
      %3003 = vmatpush.bf16.msra.mxu0 0
      %3004 = vmatpush.bf16.msra.mxu0 0
      %3005 = vmatpush.bf16.msra.mxu0 0
      %3006 = vmatpush.bf16.msra.mxu0 0
      %3007 = vmatpush.bf16.msra.mxu0 0
      %3008 = vmatpush.bf16.msra.mxu0 0
      %3009 = vmatpush.bf16.msra.mxu0 %v3000
      %3010 = vmatmul.bf16.gmra.mxu0 %v2903
      %v3011 = vpop.f32.mrf.mxu0
      %v3012 = vadd.f32 %v2899, %v3011
      %v3013 = vpop.f32.mrf.mxu0
      %v3014 = vadd.f32 %v2899, %v3013
      %3015 = vmatmul.bf16.gmra.mxu0 %v2906
      %v3016 = vpop.f32.mrf.mxu0
      %v3017 = vadd.f32 %v2899, %v3016
      %v3018 = vpop.f32.mrf.mxu0
      %v3019 = vadd.f32 %v2899, %v3018
      %3020 = vmatmul.bf16.gmra.mxu0 %v2909
      %v3021 = vpop.f32.mrf.mxu0
      %v3022 = vadd.f32 %v2899, %v3021
      %v3023 = vpop.f32.mrf.mxu0
      %v3024 = vadd.f32 %v2899, %v3023
      %3025 = vmatmul.bf16.gmra.mxu0 %v2912
      %v3026 = vpop.f32.mrf.mxu0
      %v3027 = vadd.f32 %v2899, %v3026
      %v3028 = vpop.f32.mrf.mxu0
      %v3029 = vadd.f32 %v2899, %v3028
      %3030 = vmatmul.bf16.gmra.mxu0 %v2915
      %v3031 = vpop.f32.mrf.mxu0
      %v3032 = vadd.f32 %v2899, %v3031
      %v3033 = vpop.f32.mrf.mxu0
      %v3034 = vadd.f32 %v2899, %v3033
      %3035 = vmatmul.bf16.gmra.mxu0 %v2918
      %v3036 = vpop.f32.mrf.mxu0
      %v3037 = vadd.f32 %v2899, %v3036
      %v3038 = vpop.f32.mrf.mxu0
      %v3039 = vadd.f32 %v2899, %v3038
      %3040 = vmatmul.bf16.gmra.mxu0 %v2921
      %v3041 = vpop.f32.mrf.mxu0
      %v3042 = vadd.f32 %v2899, %v3041
      %v3043 = vpop.f32.mrf.mxu0
      %v3044 = vadd.f32 %v2899, %v3043
      %3045 = vmatmul.bf16.gmra.mxu0 %v2924
      %v3046 = vpop.f32.mrf.mxu0
      %v3047 = vadd.f32 %v2899, %v3046
      %v3048 = vpop.f32.mrf.mxu0
      %v3049 = vadd.f32 %v2899, %v3048
      %3050 = vmatmul.bf16.gmra.mxu0 %v2927
      %v3051 = vpop.f32.mrf.mxu0
      %v3052 = vadd.f32 %v2899, %v3051
      %v3053 = vpop.f32.mrf.mxu0
      %v3054 = vadd.f32 %v2899, %v3053
      %3055 = vmatmul.bf16.gmra.mxu0 %v2930
      %v3056 = vpop.f32.mrf.mxu0
      %v3057 = vadd.f32 %v2899, %v3056
      %v3058 = vpop.f32.mrf.mxu0
      %v3059 = vadd.f32 %v2899, %v3058
      %3060 = vmatmul.bf16.gmra.mxu0 %v2933
      %v3061 = vpop.f32.mrf.mxu0
      %v3062 = vadd.f32 %v2899, %v3061
      %v3063 = vpop.f32.mrf.mxu0
      %v3064 = vadd.f32 %v2899, %v3063
      %3065 = vmatmul.bf16.gmra.mxu0 %v2936
      %v3066 = vpop.f32.mrf.mxu0
      %v3067 = vadd.f32 %v2899, %v3066
      %v3068 = vpop.f32.mrf.mxu0
      %v3069 = vadd.f32 %v2899, %v3068
      %3070 = vmatmul.bf16.gmra.mxu0 %v2939
      %v3071 = vpop.f32.mrf.mxu0
      %v3072 = vadd.f32 %v2899, %v3071
      %v3073 = vpop.f32.mrf.mxu0
      %v3074 = vadd.f32 %v2899, %v3073
      %3075 = vmatmul.bf16.gmra.mxu0 %v2942
      %v3076 = vpop.f32.mrf.mxu0
      %v3077 = vadd.f32 %v2899, %v3076
      %v3078 = vpop.f32.mrf.mxu0
      %v3079 = vadd.f32 %v2899, %v3078
      %3080 = vmatmul.bf16.gmra.mxu0 %v2945
      %v3081 = vpop.f32.mrf.mxu0
      %v3082 = vadd.f32 %v2899, %v3081
      %v3083 = vpop.f32.mrf.mxu0
      %v3084 = vadd.f32 %v2899, %v3083
      %3085 = vmatmul.bf16.gmra.mxu0 %v2948
      %v3086 = vpop.f32.mrf.mxu0
      %v3087 = vadd.f32 %v2899, %v3086
      %v3088 = vpop.f32.mrf.mxu0
      %v3089 = vadd.f32 %v2899, %v3088
      %3090 = vmatmul.bf16.gmra.mxu0 %v2951
      %v3091 = vpop.f32.mrf.mxu0
      %v3092 = vadd.f32 %v2899, %v3091
      %v3093 = vpop.f32.mrf.mxu0
      %v3094 = vadd.f32 %v2899, %v3093
      %3095 = vmatmul.bf16.gmra.mxu0 %v2954
      %v3096 = vpop.f32.mrf.mxu0
      %v3097 = vadd.f32 %v2899, %v3096
      %v3098 = vpop.f32.mrf.mxu0
      %v3099 = vadd.f32 %v2899, %v3098
      %3100 = vmatmul.bf16.gmra.mxu0 %v2957
      %v3101 = vpop.f32.mrf.mxu0
      %v3102 = vadd.f32 %v2899, %v3101
      %v3103 = vpop.f32.mrf.mxu0
      %v3104 = vadd.f32 %v2899, %v3103
      %3105 = vmatmul.bf16.gmra.mxu0 %v2960
      %v3106 = vpop.f32.mrf.mxu0
      %v3107 = vadd.f32 %v2899, %v3106
      %v3108 = vpop.f32.mrf.mxu0
      %v3109 = vadd.f32 %v2899, %v3108
      %3110 = vmatmul.bf16.gmra.mxu0 %v2963
      %v3111 = vpop.f32.mrf.mxu0
      %v3112 = vadd.f32 %v2899, %v3111
      %v3113 = vpop.f32.mrf.mxu0
      %v3114 = vadd.f32 %v2899, %v3113
      %3115 = vmatmul.bf16.gmra.mxu0 %v2966
      %v3116 = vpop.f32.mrf.mxu0
      %v3117 = vadd.f32 %v2899, %v3116
      %v3118 = vpop.f32.mrf.mxu0
      %v3119 = vadd.f32 %v2899, %v3118
      %3120 = vmatmul.bf16.gmra.mxu0 %v2969
      %v3121 = vpop.f32.mrf.mxu0
      %v3122 = vadd.f32 %v2899, %v3121
      %v3123 = vpop.f32.mrf.mxu0
      %v3124 = vadd.f32 %v2899, %v3123
      %3125 = vmatmul.bf16.gmra.mxu0 %v2972
      %v3126 = vpop.f32.mrf.mxu0
      %v3127 = vadd.f32 %v2899, %v3126
      %v3128 = vpop.f32.mrf.mxu0
      %v3129 = vadd.f32 %v2899, %v3128
      %3130 = vmatmul.bf16.gmra.mxu0 %v2975
      %v3131 = vpop.f32.mrf.mxu0
      %v3132 = vadd.f32 %v2899, %v3131
      %v3133 = vpop.f32.mrf.mxu0
      %v3134 = vadd.f32 %v2899, %v3133
      %3135 = vmatmul.bf16.gmra.mxu0 %v2978
      %v3136 = vpop.f32.mrf.mxu0
      %v3137 = vadd.f32 %v2899, %v3136
      %v3138 = vpop.f32.mrf.mxu0
      %v3139 = vadd.f32 %v2899, %v3138
      %3140 = vmatmul.bf16.gmra.mxu0 %v2981
      %v3141 = vpop.f32.mrf.mxu0
      %v3142 = vadd.f32 %v2899, %v3141
      %v3143 = vpop.f32.mrf.mxu0
      %v3144 = vadd.f32 %v2899, %v3143
      %3145 = vmatmul.bf16.gmra.mxu0 %v2984
      %v3146 = vpop.f32.mrf.mxu0
      %v3147 = vadd.f32 %v2899, %v3146
      %v3148 = vpop.f32.mrf.mxu0
      %v3149 = vadd.f32 %v2899, %v3148
      %3150 = vmatmul.bf16.gmra.mxu0 %v2987
      %v3151 = vpop.f32.mrf.mxu0
      %v3152 = vadd.f32 %v2899, %v3151
      %v3153 = vpop.f32.mrf.mxu0
      %v3154 = vadd.f32 %v2899, %v3153
      %3155 = vmatmul.bf16.gmra.mxu0 %v2990
      %v3156 = vpop.f32.mrf.mxu0
      %v3157 = vadd.f32 %v2899, %v3156
      %v3158 = vpop.f32.mrf.mxu0
      %v3159 = vadd.f32 %v2899, %v3158
      %3160 = vmatmul.bf16.gmra.mxu0 %v2993
      %v3161 = vpop.f32.mrf.mxu0
      %v3162 = vadd.f32 %v2899, %v3161
      %v3163 = vpop.f32.mrf.mxu0
      %v3164 = vadd.f32 %v2899, %v3163
      %3165 = vmatmul.bf16.gmra.mxu0 %v2996
      %v3166 = vpop.f32.mrf.mxu0
      %v3167 = vadd.f32 %v2899, %v3166
      %v3168 = vpop.f32.mrf.mxu0
      %v3169 = vadd.f32 %v2899, %v3168
      %3170 = vdwg.mxu0
      %v3171 = vmul.f32 %v3012, 0.1
      %v3172 = vmul.f32 %v3014, 0.1
      %v3173 = vmul.f32 %v3017, 0.1
      %v3174 = vmul.f32 %v3019, 0.1
      %v3175 = vmul.f32 %v3022, 0.1
      %v3176 = vmul.f32 %v3024, 0.1
      %v3177 = vmul.f32 %v3027, 0.1
      %v3178 = vmul.f32 %v3029, 0.1
      %v3179 = vmul.f32 %v3032, 0.1
      %v3180 = vmul.f32 %v3034, 0.1
      %v3181 = vmul.f32 %v3037, 0.1
      %v3182 = vmul.f32 %v3039, 0.1
      %v3183 = vmul.f32 %v3042, 0.1
      %v3184 = vmul.f32 %v3044, 0.1
      %v3185 = vmul.f32 %v3047, 0.1
      %v3186 = vmul.f32 %v3049, 0.1
      %v3187 = vmul.f32 %v3052, 0.1
      %v3188 = vmul.f32 %v3054, 0.1
      %v3189 = vmul.f32 %v3057, 0.1
      %v3190 = vmul.f32 %v3059, 0.1
      %v3191 = vmul.f32 %v3062, 0.1
      %v3192 = vmul.f32 %v3064, 0.1
      %v3193 = vmul.f32 %v3067, 0.1
      %v3194 = vmul.f32 %v3069, 0.1
      %v3195 = vmul.f32 %v3072, 0.1
      %v3196 = vmul.f32 %v3074, 0.1
      %v3197 = vmul.f32 %v3077, 0.1
      %v3198 = vmul.f32 %v3079, 0.1
      %v3199 = vmul.f32 %v3082, 0.1
      %v3200 = vmul.f32 %v3084, 0.1
      %v3201 = vmul.f32 %v3087, 0.1
      %v3202 = vmul.f32 %v3089, 0.1
      %v3203 = vmul.f32 %v3092, 0.1
      %v3204 = vmul.f32 %v3094, 0.1
      %v3205 = vmul.f32 %v3097, 0.1
      %v3206 = vmul.f32 %v3099, 0.1
      %v3207 = vmul.f32 %v3102, 0.1
      %v3208 = vmul.f32 %v3104, 0.1
      %v3209 = vmul.f32 %v3107, 0.1
      %v3210 = vmul.f32 %v3109, 0.1
      %v3211 = vmul.f32 %v3112, 0.1
      %v3212 = vmul.f32 %v3114, 0.1
      %v3213 = vmul.f32 %v3117, 0.1
      %v3214 = vmul.f32 %v3119, 0.1
      %v3215 = vmul.f32 %v3122, 0.1
      %v3216 = vmul.f32 %v3124, 0.1
      %v3217 = vmul.f32 %v3127, 0.1
      %v3218 = vmul.f32 %v3129, 0.1
      %v3219 = vmul.f32 %v3132, 0.1
      %v3220 = vmul.f32 %v3134, 0.1
      %v3221 = vmul.f32 %v3137, 0.1
      %v3222 = vmul.f32 %v3139, 0.1
      %v3223 = vmul.f32 %v3142, 0.1
      %v3224 = vmul.f32 %v3144, 0.1
      %v3225 = vmul.f32 %v3147, 0.1
      %v3226 = vmul.f32 %v3149, 0.1
      %v3227 = vmul.f32 %v3152, 0.1
      %v3228 = vmul.f32 %v3154, 0.1
      %v3229 = vmul.f32 %v3157, 0.1
      %v3230 = vmul.f32 %v3159, 0.1
      %v3231 = vmul.f32 %v3162, 0.1
      %v3232 = vmul.f32 %v3164, 0.1
      %v3233 = vmul.f32 %v3167, 0.1
      %v3234 = vmul.f32 %v3169, 0.1
      %v3235 = vmax.f32 %v3012, %v3171
      %v3236 = vmax.f32 %v3014, %v3172
      %v3237 = vmax.f32 %v3017, %v3173
      %v3238 = vmax.f32 %v3019, %v3174
      %v3239 = vmax.f32 %v3022, %v3175
      %v3240 = vmax.f32 %v3024, %v3176
      %v3241 = vmax.f32 %v3027, %v3177
      %v3242 = vmax.f32 %v3029, %v3178
      %v3243 = vmax.f32 %v3032, %v3179
      %v3244 = vmax.f32 %v3034, %v3180
      %v3245 = vmax.f32 %v3037, %v3181
      %v3246 = vmax.f32 %v3039, %v3182
      %v3247 = vmax.f32 %v3042, %v3183
      %v3248 = vmax.f32 %v3044, %v3184
      %v3249 = vmax.f32 %v3047, %v3185
      %v3250 = vmax.f32 %v3049, %v3186
      %v3251 = vmax.f32 %v3052, %v3187
      %v3252 = vmax.f32 %v3054, %v3188
      %v3253 = vmax.f32 %v3057, %v3189
      %v3254 = vmax.f32 %v3059, %v3190
      %v3255 = vmax.f32 %v3062, %v3191
      %v3256 = vmax.f32 %v3064, %v3192
      %v3257 = vmax.f32 %v3067, %v3193
      %v3258 = vmax.f32 %v3069, %v3194
      %v3259 = vmax.f32 %v3072, %v3195
      %v3260 = vmax.f32 %v3074, %v3196
      %v3261 = vmax.f32 %v3077, %v3197
      %v3262 = vmax.f32 %v3079, %v3198
      %v3263 = vmax.f32 %v3082, %v3199
      %v3264 = vmax.f32 %v3084, %v3200
      %v3265 = vmax.f32 %v3087, %v3201
      %v3266 = vmax.f32 %v3089, %v3202
      %v3267 = vmax.f32 %v3092, %v3203
      %v3268 = vmax.f32 %v3094, %v3204
      %v3269 = vmax.f32 %v3097, %v3205
      %v3270 = vmax.f32 %v3099, %v3206
      %v3271 = vmax.f32 %v3102, %v3207
      %v3272 = vmax.f32 %v3104, %v3208
      %v3273 = vmax.f32 %v3107, %v3209
      %v3274 = vmax.f32 %v3109, %v3210
      %v3275 = vmax.f32 %v3112, %v3211
      %v3276 = vmax.f32 %v3114, %v3212
      %v3277 = vmax.f32 %v3117, %v3213
      %v3278 = vmax.f32 %v3119, %v3214
      %v3279 = vmax.f32 %v3122, %v3215
      %v3280 = vmax.f32 %v3124, %v3216
      %v3281 = vmax.f32 %v3127, %v3217
      %v3282 = vmax.f32 %v3129, %v3218
      %v3283 = vmax.f32 %v3132, %v3219
      %v3284 = vmax.f32 %v3134, %v3220
      %v3285 = vmax.f32 %v3137, %v3221
      %v3286 = vmax.f32 %v3139, %v3222
      %v3287 = vmax.f32 %v3142, %v3223
      %v3288 = vmax.f32 %v3144, %v3224
      %v3289 = vmax.f32 %v3147, %v3225
      %v3290 = vmax.f32 %v3149, %v3226
      %v3291 = vmax.f32 %v3152, %v3227
      %v3292 = vmax.f32 %v3154, %v3228
      %v3293 = vmax.f32 %v3157, %v3229
      %v3294 = vmax.f32 %v3159, %v3230
      %v3295 = vmax.f32 %v3162, %v3231
      %v3296 = vmax.f32 %v3164, %v3232
      %v3297 = vmax.f32 %v3167, %v3233
      %v3298 = vmax.f32 %v3169, %v3234
      %v3299 = vpack.c.bf16 %v3236, %v3235
      %v3300 = vpack.c.bf16 %v3238, %v3237
      %v3301 = vpack.c.bf16 %v3240, %v3239
      %v3302 = vpack.c.bf16 %v3242, %v3241
      %v3303 = vpack.c.bf16 %v3244, %v3243
      %v3304 = vpack.c.bf16 %v3246, %v3245
      %v3305 = vpack.c.bf16 %v3248, %v3247
      %v3306 = vpack.c.bf16 %v3250, %v3249
      %v3307 = vpack.c.bf16 %v3252, %v3251
      %v3308 = vpack.c.bf16 %v3254, %v3253
      %v3309 = vpack.c.bf16 %v3256, %v3255
      %v3310 = vpack.c.bf16 %v3258, %v3257
      %v3311 = vpack.c.bf16 %v3260, %v3259
      %v3312 = vpack.c.bf16 %v3262, %v3261
      %v3313 = vpack.c.bf16 %v3264, %v3263
      %v3314 = vpack.c.bf16 %v3266, %v3265
      %v3315 = vpack.c.bf16 %v3268, %v3267
      %v3316 = vpack.c.bf16 %v3270, %v3269
      %v3317 = vpack.c.bf16 %v3272, %v3271
      %v3318 = vpack.c.bf16 %v3274, %v3273
      %v3319 = vpack.c.bf16 %v3276, %v3275
      %v3320 = vpack.c.bf16 %v3278, %v3277
      %v3321 = vpack.c.bf16 %v3280, %v3279
      %v3322 = vpack.c.bf16 %v3282, %v3281
      %v3323 = vpack.c.bf16 %v3284, %v3283
      %v3324 = vpack.c.bf16 %v3286, %v3285
      %v3325 = vpack.c.bf16 %v3288, %v3287
      %v3326 = vpack.c.bf16 %v3290, %v3289
      %v3327 = vpack.c.bf16 %v3292, %v3291
      %v3328 = vpack.c.bf16 %v3294, %v3293
      %v3329 = vpack.c.bf16 %v3296, %v3295
      %v3330 = vpack.c.bf16 %v3298, %v3297
      %v3331 = vld [vmem:[%s13] sm:$0x3]
      %v3332 = vld [vmem:[#allocation2] sm:$0x1]
      %v3334 = vperm.slane %v3332, 0
      %vm3336 = vcmask 31744
      %v3338 = vsel %vm3336, %v3299, 0
      %v3341 = vsel %vm3336, %v3300, 0
      %v3344 = vsel %vm3336, %v3301, 0
      %v3347 = vsel %vm3336, %v3302, 0
      %v3350 = vsel %vm3336, %v3303, 0
      %v3353 = vsel %vm3336, %v3304, 0
      %v3356 = vsel %vm3336, %v3305, 0
      %v3359 = vsel %vm3336, %v3306, 0
      %v3362 = vsel %vm3336, %v3307, 0
      %v3365 = vsel %vm3336, %v3308, 0
      %v3368 = vsel %vm3336, %v3309, 0
      %v3371 = vsel %vm3336, %v3310, 0
      %v3374 = vsel %vm3336, %v3311, 0
      %v3377 = vsel %vm3336, %v3312, 0
      %v3380 = vsel %vm3336, %v3313, 0
      %v3383 = vsel %vm3336, %v3314, 0
      %v3386 = vsel %vm3336, %v3315, 0
      %v3389 = vsel %vm3336, %v3316, 0
      %v3392 = vsel %vm3336, %v3317, 0
      %v3395 = vsel %vm3336, %v3318, 0
      %v3398 = vsel %vm3336, %v3319, 0
      %v3401 = vsel %vm3336, %v3320, 0
      %v3404 = vsel %vm3336, %v3321, 0
      %v3407 = vsel %vm3336, %v3322, 0
      %v3410 = vsel %vm3336, %v3323, 0
      %v3413 = vsel %vm3336, %v3324, 0
      %v3416 = vsel %vm3336, %v3325, 0
      %v3419 = vsel %vm3336, %v3326, 0
      %v3422 = vsel %vm3336, %v3327, 0
      %v3425 = vsel %vm3336, %v3328, 0
      %v3428 = vsel %vm3336, %v3329, 0
      %v3431 = vsel %vm3336, %v3330, 0
      %vm3433 = vcmask 1041408
      %v3435 = vsel %vm3433, %v3331, 0
      %3437 = vmatpush.bf16.msra.mxu0 0
      %3438 = vmatpush.bf16.msra.mxu0 0
      %3439 = vmatpush.bf16.msra.mxu0 0
      %3440 = vmatpush.bf16.msra.mxu0 0
      %3441 = vmatpush.bf16.msra.mxu0 0
      %3442 = vmatpush.bf16.msra.mxu0 0
      %3443 = vmatpush.bf16.msra.mxu0 0
      %3444 = vmatpush.bf16.msra.mxu0 %v3435
      %3445 = vmatmul.bf16.gmra.mxu0 %v3338
      %v3446 = vpop.f32.mrf.mxu0
      %v3447 = vadd.f32 %v3334, %v3446
      %v3448 = vpop.f32.mrf.mxu0
      %v3449 = vadd.f32 %v3334, %v3448
      %3450 = vmatmul.bf16.gmra.mxu0 %v3341
      %v3451 = vpop.f32.mrf.mxu0
      %v3452 = vadd.f32 %v3334, %v3451
      %v3453 = vpop.f32.mrf.mxu0
      %v3454 = vadd.f32 %v3334, %v3453
      %3455 = vmatmul.bf16.gmra.mxu0 %v3344
      %v3456 = vpop.f32.mrf.mxu0
      %v3457 = vadd.f32 %v3334, %v3456
      %v3458 = vpop.f32.mrf.mxu0
      %v3459 = vadd.f32 %v3334, %v3458
      %3460 = vmatmul.bf16.gmra.mxu0 %v3347
      %v3461 = vpop.f32.mrf.mxu0
      %v3462 = vadd.f32 %v3334, %v3461
      %v3463 = vpop.f32.mrf.mxu0
      %v3464 = vadd.f32 %v3334, %v3463
      %3465 = vmatmul.bf16.gmra.mxu0 %v3350
      %v3466 = vpop.f32.mrf.mxu0
      %v3467 = vadd.f32 %v3334, %v3466
      %v3468 = vpop.f32.mrf.mxu0
      %v3469 = vadd.f32 %v3334, %v3468
      %3470 = vmatmul.bf16.gmra.mxu0 %v3353
      %v3471 = vpop.f32.mrf.mxu0
      %v3472 = vadd.f32 %v3334, %v3471
      %v3473 = vpop.f32.mrf.mxu0
      %v3474 = vadd.f32 %v3334, %v3473
      %3475 = vmatmul.bf16.gmra.mxu0 %v3356
      %v3476 = vpop.f32.mrf.mxu0
      %v3477 = vadd.f32 %v3334, %v3476
      %v3478 = vpop.f32.mrf.mxu0
      %v3479 = vadd.f32 %v3334, %v3478
      %3480 = vmatmul.bf16.gmra.mxu0 %v3359
      %v3481 = vpop.f32.mrf.mxu0
      %v3482 = vadd.f32 %v3334, %v3481
      %v3483 = vpop.f32.mrf.mxu0
      %v3484 = vadd.f32 %v3334, %v3483
      %3485 = vmatmul.bf16.gmra.mxu0 %v3362
      %v3486 = vpop.f32.mrf.mxu0
      %v3487 = vadd.f32 %v3334, %v3486
      %v3488 = vpop.f32.mrf.mxu0
      %v3489 = vadd.f32 %v3334, %v3488
      %3490 = vmatmul.bf16.gmra.mxu0 %v3365
      %v3491 = vpop.f32.mrf.mxu0
      %v3492 = vadd.f32 %v3334, %v3491
      %v3493 = vpop.f32.mrf.mxu0
      %v3494 = vadd.f32 %v3334, %v3493
      %3495 = vmatmul.bf16.gmra.mxu0 %v3368
      %v3496 = vpop.f32.mrf.mxu0
      %v3497 = vadd.f32 %v3334, %v3496
      %v3498 = vpop.f32.mrf.mxu0
      %v3499 = vadd.f32 %v3334, %v3498
      %3500 = vmatmul.bf16.gmra.mxu0 %v3371
      %v3501 = vpop.f32.mrf.mxu0
      %v3502 = vadd.f32 %v3334, %v3501
      %v3503 = vpop.f32.mrf.mxu0
      %v3504 = vadd.f32 %v3334, %v3503
      %3505 = vmatmul.bf16.gmra.mxu0 %v3374
      %v3506 = vpop.f32.mrf.mxu0
      %v3507 = vadd.f32 %v3334, %v3506
      %v3508 = vpop.f32.mrf.mxu0
      %v3509 = vadd.f32 %v3334, %v3508
      %3510 = vmatmul.bf16.gmra.mxu0 %v3377
      %v3511 = vpop.f32.mrf.mxu0
      %v3512 = vadd.f32 %v3334, %v3511
      %v3513 = vpop.f32.mrf.mxu0
      %v3514 = vadd.f32 %v3334, %v3513
      %3515 = vmatmul.bf16.gmra.mxu0 %v3380
      %v3516 = vpop.f32.mrf.mxu0
      %v3517 = vadd.f32 %v3334, %v3516
      %v3518 = vpop.f32.mrf.mxu0
      %v3519 = vadd.f32 %v3334, %v3518
      %3520 = vmatmul.bf16.gmra.mxu0 %v3383
      %v3521 = vpop.f32.mrf.mxu0
      %v3522 = vadd.f32 %v3334, %v3521
      %v3523 = vpop.f32.mrf.mxu0
      %v3524 = vadd.f32 %v3334, %v3523
      %3525 = vmatmul.bf16.gmra.mxu0 %v3386
      %v3526 = vpop.f32.mrf.mxu0
      %v3527 = vadd.f32 %v3334, %v3526
      %v3528 = vpop.f32.mrf.mxu0
      %v3529 = vadd.f32 %v3334, %v3528
      %3530 = vmatmul.bf16.gmra.mxu0 %v3389
      %v3531 = vpop.f32.mrf.mxu0
      %v3532 = vadd.f32 %v3334, %v3531
      %v3533 = vpop.f32.mrf.mxu0
      %v3534 = vadd.f32 %v3334, %v3533
      %3535 = vmatmul.bf16.gmra.mxu0 %v3392
      %v3536 = vpop.f32.mrf.mxu0
      %v3537 = vadd.f32 %v3334, %v3536
      %v3538 = vpop.f32.mrf.mxu0
      %v3539 = vadd.f32 %v3334, %v3538
      %3540 = vmatmul.bf16.gmra.mxu0 %v3395
      %v3541 = vpop.f32.mrf.mxu0
      %v3542 = vadd.f32 %v3334, %v3541
      %v3543 = vpop.f32.mrf.mxu0
      %v3544 = vadd.f32 %v3334, %v3543
      %3545 = vmatmul.bf16.gmra.mxu0 %v3398
      %v3546 = vpop.f32.mrf.mxu0
      %v3547 = vadd.f32 %v3334, %v3546
      %v3548 = vpop.f32.mrf.mxu0
      %v3549 = vadd.f32 %v3334, %v3548
      %3550 = vmatmul.bf16.gmra.mxu0 %v3401
      %v3551 = vpop.f32.mrf.mxu0
      %v3552 = vadd.f32 %v3334, %v3551
      %v3553 = vpop.f32.mrf.mxu0
      %v3554 = vadd.f32 %v3334, %v3553
      %3555 = vmatmul.bf16.gmra.mxu0 %v3404
      %v3556 = vpop.f32.mrf.mxu0
      %v3557 = vadd.f32 %v3334, %v3556
      %v3558 = vpop.f32.mrf.mxu0
      %v3559 = vadd.f32 %v3334, %v3558
      %3560 = vmatmul.bf16.gmra.mxu0 %v3407
      %v3561 = vpop.f32.mrf.mxu0
      %v3562 = vadd.f32 %v3334, %v3561
      %v3563 = vpop.f32.mrf.mxu0
      %v3564 = vadd.f32 %v3334, %v3563
      %3565 = vmatmul.bf16.gmra.mxu0 %v3410
      %v3566 = vpop.f32.mrf.mxu0
      %v3567 = vadd.f32 %v3334, %v3566
      %v3568 = vpop.f32.mrf.mxu0
      %v3569 = vadd.f32 %v3334, %v3568
      %3570 = vmatmul.bf16.gmra.mxu0 %v3413
      %v3571 = vpop.f32.mrf.mxu0
      %v3572 = vadd.f32 %v3334, %v3571
      %v3573 = vpop.f32.mrf.mxu0
      %v3574 = vadd.f32 %v3334, %v3573
      %3575 = vmatmul.bf16.gmra.mxu0 %v3416
      %v3576 = vpop.f32.mrf.mxu0
      %v3577 = vadd.f32 %v3334, %v3576
      %v3578 = vpop.f32.mrf.mxu0
      %v3579 = vadd.f32 %v3334, %v3578
      %3580 = vmatmul.bf16.gmra.mxu0 %v3419
      %v3581 = vpop.f32.mrf.mxu0
      %v3582 = vadd.f32 %v3334, %v3581
      %v3583 = vpop.f32.mrf.mxu0
      %v3584 = vadd.f32 %v3334, %v3583
      %3585 = vmatmul.bf16.gmra.mxu0 %v3422
      %v3586 = vpop.f32.mrf.mxu0
      %v3587 = vadd.f32 %v3334, %v3586
      %v3588 = vpop.f32.mrf.mxu0
      %v3589 = vadd.f32 %v3334, %v3588
      %3590 = vmatmul.bf16.gmra.mxu0 %v3425
      %v3591 = vpop.f32.mrf.mxu0
      %v3592 = vadd.f32 %v3334, %v3591
      %v3593 = vpop.f32.mrf.mxu0
      %v3594 = vadd.f32 %v3334, %v3593
      %3595 = vmatmul.bf16.gmra.mxu0 %v3428
      %v3596 = vpop.f32.mrf.mxu0
      %v3597 = vadd.f32 %v3334, %v3596
      %v3598 = vpop.f32.mrf.mxu0
      %v3599 = vadd.f32 %v3334, %v3598
      %3600 = vmatmul.bf16.gmra.mxu0 %v3431
      %v3601 = vpop.f32.mrf.mxu0
      %v3602 = vadd.f32 %v3334, %v3601
      %v3603 = vpop.f32.mrf.mxu0
      %v3604 = vadd.f32 %v3334, %v3603
      %3605 = vdwg.mxu0
      %vm3606 = vcmask 7168
      %3607 = vst.msk [vmem:[%s498] sm:$0xff] %vm3606, %v3447
      %3608 = vst.msk [vmem:[%s498 + $0x8] sm:$0xff] %vm3606, %v3449
      %3609 = vst.msk [vmem:[%s498 + $0x10] sm:$0xff] %vm3606, %v3452
      %3610 = vst.msk [vmem:[%s498 + $0x18] sm:$0xff] %vm3606, %v3454
      %3611 = vst.msk [vmem:[%s498 + $0x20] sm:$0xff] %vm3606, %v3457
      %3612 = vst.msk [vmem:[%s498 + $0x28] sm:$0xff] %vm3606, %v3459
      %3613 = vst.msk [vmem:[%s498 + $0x30] sm:$0xff] %vm3606, %v3462
      %3614 = vst.msk [vmem:[%s498 + $0x38] sm:$0xff] %vm3606, %v3464
      %3615 = vst.msk [vmem:[%s498 + $0x40] sm:$0xff] %vm3606, %v3467
      %3616 = vst.msk [vmem:[%s498 + $0x48] sm:$0xff] %vm3606, %v3469
      %3617 = vst.msk [vmem:[%s498 + $0x50] sm:$0xff] %vm3606, %v3472
      %3618 = vst.msk [vmem:[%s498 + $0x58] sm:$0xff] %vm3606, %v3474
      %3619 = vst.msk [vmem:[%s498 + $0x60] sm:$0xff] %vm3606, %v3477
      %3620 = vst.msk [vmem:[%s498 + $0x68] sm:$0xff] %vm3606, %v3479
      %3621 = vst.msk [vmem:[%s498 + $0x70] sm:$0xff] %vm3606, %v3482
      %3622 = vst.msk [vmem:[%s498 + $0x78] sm:$0xff] %vm3606, %v3484
      %3623 = vst.msk [vmem:[%s498 + $0x80] sm:$0xff] %vm3606, %v3487
      %3624 = vst.msk [vmem:[%s498 + $0x88] sm:$0xff] %vm3606, %v3489
      %3625 = vst.msk [vmem:[%s498 + $0x90] sm:$0xff] %vm3606, %v3492
      %3626 = vst.msk [vmem:[%s498 + $0x98] sm:$0xff] %vm3606, %v3494
      %3627 = vst.msk [vmem:[%s498 + $0xa0] sm:$0xff] %vm3606, %v3497
      %3628 = vst.msk [vmem:[%s498 + $0xa8] sm:$0xff] %vm3606, %v3499
      %3629 = vst.msk [vmem:[%s498 + $0xb0] sm:$0xff] %vm3606, %v3502
      %3630 = vst.msk [vmem:[%s498 + $0xb8] sm:$0xff] %vm3606, %v3504
      %3631 = vst.msk [vmem:[%s498 + $0xc0] sm:$0xff] %vm3606, %v3507
      %3632 = vst.msk [vmem:[%s498 + $0xc8] sm:$0xff] %vm3606, %v3509
      %3633 = vst.msk [vmem:[%s498 + $0xd0] sm:$0xff] %vm3606, %v3512
      %3634 = vst.msk [vmem:[%s498 + $0xd8] sm:$0xff] %vm3606, %v3514
      %3635 = vst.msk [vmem:[%s498 + $0xe0] sm:$0xff] %vm3606, %v3517
      %3636 = vst.msk [vmem:[%s498 + $0xe8] sm:$0xff] %vm3606, %v3519
      %3637 = vst.msk [vmem:[%s498 + $0xf0] sm:$0xff] %vm3606, %v3522
      %3638 = vst.msk [vmem:[%s498 + $0xf8] sm:$0xff] %vm3606, %v3524
      %3639 = vst.msk [vmem:[%s498 + $0x100] sm:$0xff] %vm3606, %v3527
      %3640 = vst.msk [vmem:[%s498 + $0x108] sm:$0xff] %vm3606, %v3529
      %3641 = vst.msk [vmem:[%s498 + $0x110] sm:$0xff] %vm3606, %v3532
      %3642 = vst.msk [vmem:[%s498 + $0x118] sm:$0xff] %vm3606, %v3534
      %3643 = vst.msk [vmem:[%s498 + $0x120] sm:$0xff] %vm3606, %v3537
      %3644 = vst.msk [vmem:[%s498 + $0x128] sm:$0xff] %vm3606, %v3539
      %3645 = vst.msk [vmem:[%s498 + $0x130] sm:$0xff] %vm3606, %v3542
      %3646 = vst.msk [vmem:[%s498 + $0x138] sm:$0xff] %vm3606, %v3544
      %3647 = vst.msk [vmem:[%s498 + $0x140] sm:$0xff] %vm3606, %v3547
      %3648 = vst.msk [vmem:[%s498 + $0x148] sm:$0xff] %vm3606, %v3549
      %3649 = vst.msk [vmem:[%s498 + $0x150] sm:$0xff] %vm3606, %v3552
      %3650 = vst.msk [vmem:[%s498 + $0x158] sm:$0xff] %vm3606, %v3554
      %3651 = vst.msk [vmem:[%s498 + $0x160] sm:$0xff] %vm3606, %v3557
      %3652 = vst.msk [vmem:[%s498 + $0x168] sm:$0xff] %vm3606, %v3559
      %3653 = vst.msk [vmem:[%s498 + $0x170] sm:$0xff] %vm3606, %v3562
      %3654 = vst.msk [vmem:[%s498 + $0x178] sm:$0xff] %vm3606, %v3564
      %3655 = vst.msk [vmem:[%s498 + $0x180] sm:$0xff] %vm3606, %v3567
      %3656 = vst.msk [vmem:[%s498 + $0x188] sm:$0xff] %vm3606, %v3569
      %3657 = vst.msk [vmem:[%s498 + $0x190] sm:$0xff] %vm3606, %v3572
      %3658 = vst.msk [vmem:[%s498 + $0x198] sm:$0xff] %vm3606, %v3574
      %3659 = vst.msk [vmem:[%s498 + $0x1a0] sm:$0xff] %vm3606, %v3577
      %3660 = vst.msk [vmem:[%s498 + $0x1a8] sm:$0xff] %vm3606, %v3579
      %3661 = vst.msk [vmem:[%s498 + $0x1b0] sm:$0xff] %vm3606, %v3582
      %3662 = vst.msk [vmem:[%s498 + $0x1b8] sm:$0xff] %vm3606, %v3584
      %3663 = vst.msk [vmem:[%s498 + $0x1c0] sm:$0xff] %vm3606, %v3587
      %3664 = vst.msk [vmem:[%s498 + $0x1c8] sm:$0xff] %vm3606, %v3589
      %3665 = vst.msk [vmem:[%s498 + $0x1d0] sm:$0xff] %vm3606, %v3592
      %3666 = vst.msk [vmem:[%s498 + $0x1d8] sm:$0xff] %vm3606, %v3594
      %3667 = vst.msk [vmem:[%s498 + $0x1e0] sm:$0xff] %vm3606, %v3597
      %3668 = vst.msk [vmem:[%s498 + $0x1e8] sm:$0xff] %vm3606, %v3599
      %3669 = vst.msk [vmem:[%s498 + $0x1f0] sm:$0xff] %vm3606, %v3602
      %3670 = vst.msk [vmem:[%s498 + $0x1f8] sm:$0xff] %vm3606, %v3604
      %s3671 = smul.u32 64, %s28
      %p3672 = scmp.lt.s32.totalorder %s3671, 255
      %s3673 = scalar_select %p3672, %s3671, 255
      %s3674 = smul.addr %s3673, 8
      %s3675 = scalar_lea.vmem %s15, %s3674
      // Predicated region
      $region81: #{tpu_custom_call.1} parent=79 // pred_check
        %p3676 = pneg %p366
      $region82: #{tpu_custom_call.1} parent=79 // pred_check_branch
        %3678 = sbr.rel (%p3676) target = $region84
      $region83: #{tpu_custom_call.1} parent=79 // pred_region
        %s3679 = smul.u32 64, %s28
      $region84: #{tpu_custom_call.1} parent=79 // pred_fallthru
        _
    $region80: #{tpu_custom_call.1} parent=5 // pred_fallthru
      _
    %p3680 = scmp.le.s32.totalorder 2, %s23
    // Predicated region
    $region85: #{tpu_custom_call.1} parent=5 // pred_check
      %p3681 = pneg %p3680
    $region86: #{tpu_custom_call.1} parent=5 // pred_check_branch
      %3683 = sbr.rel (%p3681) target = $region88
    $region87: #{tpu_custom_call.1} parent=5 // pred_region
      %s3684 = ssub.s32 %s23, 2
      // Predicated region
      $region89: #{tpu_custom_call.1} parent=87 // pred_check
        %p3685 = pneg %p372
      $region90: #{tpu_custom_call.1} parent=87 // pred_check_branch
        %3687 = sbr.rel (%p3685) target = $region92
      $region91: #{tpu_custom_call.1} parent=87 // pred_region
        %s3688 = smul.u32 64, %s29
        %p3689 = scmp.lt.s32.totalorder %s3688, 255
        %s3690 = scalar_select %p3689, %s3688, 255
        %s3691 = smul.addr %s3690, 8
        %s3692 = scalar_lea.vmem %s15, %s3691
      $region92: #{tpu_custom_call.1} parent=87 // pred_fallthru
        _
    $region88: #{tpu_custom_call.1} parent=5 // pred_fallthru
      _
  $region6: #{tpu_custom_call.1} parent=0 // loop_footer
    %s27 = sadd.s32 1, %s23
  $region7: #{tpu_custom_call.1} parent=0 // loop_footer_branch
    %22 = sbr.rel target = $region3
  $region8: #{tpu_custom_call.1} parent=0 // loop_exit
    _

</llo_original>
